<compile_context>
chip_gen: v5e
topology: v5e:2x2
jax: 0.10.0
libtpu: 0.0.40
codegen_flags: <defaults>
</compile_context>

<pallas_src>
import functools

import jax
import jax.numpy as jnp
from jax.experimental import pallas as pl
from jax.experimental.pallas import tpu as pltpu


OUT_PAD = 128  # lane-dense padded width of the final linear / output store


# ----------------------------- fused kernel -------------------------------- #

def _pglcn_kernel(xcat_ref, mask_ref, wfront_ref, a_ref, wlast_ref, wp_ref, bp_ref,
                  out_ref, h0s_ref, h1s_ref, flat_ref, *, fin):
    B, N, C = xcat_ref.shape
    BN = B * N
    omic = C - fin
    hgl = a_ref.shape[1]
    hgcn = wlast_ref.shape[0]
    dl = wlast_ref.shape[1]

    # BatchNorm1d(N): per-node batch stats over (B, F), affine = identity, eps=1e-5.
    def bn(t):
        mean = jnp.mean(jnp.mean(t, axis=2, keepdims=True), axis=0, keepdims=True)
        var = jnp.mean(jnp.mean((t - mean) ** 2, axis=2, keepdims=True),
                       axis=0, keepdims=True)                  # biased variance
        return (t - mean) * jax.lax.rsqrt(var + 1e-5)

    # ---- fused front projection: [x | bn(feat)] @ blockdiag(W_gl, W_first) (1 MXU call) ----
    xcat = xcat_ref[...]                                        # (B, N, fin+omic)
    lane = jax.lax.broadcasted_iota(jnp.int32, xcat.shape, 2)
    is_f = lane >= fin                                          # feat lanes
    fvals = jnp.where(is_f, xcat, 0.0)
    fmean = (jnp.sum(jnp.sum(fvals, axis=2, keepdims=True), axis=0, keepdims=True)
             / (B * omic))                                      # (1, N, 1) per-node mean
    fcent = jnp.where(is_f, xcat - fmean, 0.0)
    fvar = (jnp.sum(jnp.sum(fcent * fcent, axis=2, keepdims=True), axis=0, keepdims=True)
            / (B * omic))
    xbn = jnp.where(is_f, (xcat - fmean) * jax.lax.rsqrt(fvar + 1e-5), xcat)
    hcat = jnp.dot(xbn.reshape(BN, C), wfront_ref[...],
                   preferred_element_type=jnp.float32)          # (BN, hgl+hgcn)
    hg = hcat[:, :hgl]                                          # (BN, hgl)  graph-learn emb
    xw0 = hcat[:, hgl:]                                         # (BN, hgcn) bn(feat) @ W_first

    # ---- SparseGraphLearn scores on the lane-dense (BN, BN) tile ----
    hgt = jnp.transpose(hg)                                     # (hgl, BN) small XLU transpose
    scores = jnp.zeros((BN, BN), jnp.float32)
    for k in range(hgl):                                        # unrolled, hgl is small
        scores = scores + a_ref[0, k] * jnp.abs(hg[:, k:k + 1] - hgt[k:k + 1, :])
    scores = jnp.maximum(scores, 0.0)                           # act = ReLU

    # masked row softmax; mask = kron(I_B, edge_mask) so the result IS block_diag(S_b).
    # Self-loops guarantee every unmasked row is non-empty -> exact division is safe.
    mask = mask_ref[...]
    neg = jnp.where(mask > 0.0, scores, -1e30)
    m = jnp.max(neg, axis=-1, keepdims=True)
    e = jnp.exp(neg - m)                                        # masked entries underflow to 0
    s_bd = e / jnp.sum(e, axis=-1, keepdims=True)               # (BN, BN)

    # ---- conv_first: ReLU(S @ (bn(feat) @ W1)), then BN ----
    t0 = jnp.dot(s_bd, xw0, preferred_element_type=jnp.float32)           # (BN, hgcn)
    h0 = bn(jnp.maximum(t0, 0.0).reshape(B, N, hgcn))

    # ---- conv_last: S @ (h0 @ W2) (identity act), then BN ----
    xw1 = jnp.dot(h0.reshape(BN, hgcn), wlast_ref[...],
                  preferred_element_type=jnp.float32)                     # (BN, dl)
    h1 = bn(jnp.dot(s_bd, xw1, preferred_element_type=jnp.float32).reshape(B, N, dl))

    # ---- pred: ReLU -> Dropout(identity) -> Linear, as ONE full-depth matmul ----
    # The small scratch slabs exist purely to relayout node-major (sublane) data into the
    # torch flatten order along lanes; the per-node copies are cheap VPU stores and replace
    # the previous 2*N serial MXU calls.
    h0s_ref[...] = jnp.maximum(h0, 0.0)
    h1s_ref[...] = jnp.maximum(h1, 0.0)
    step = hgcn + dl
    for n in range(N):                                          # unrolled, N is small
        flat_ref[:, n * step:n * step + hgcn] = h0s_ref[:, n, :]
        flat_ref[:, n * step + hgcn:(n + 1) * step] = h1s_ref[:, n, :]
    out_ref[...] = (jnp.dot(flat_ref[...], wp_ref[...],
                            preferred_element_type=jnp.float32)
                    + bp_ref[...])                              # lane-dense (B, 128) store


# ----------------------------- wrapper -------------------------------------- #

@jax.jit
def pglcn_forward(params, features, feat, edge_mask):
    B, N, fin = features.shape
    omic = feat.shape[2]
    hgl = params["w_gl"].shape[1]
    hgcn = params["w_first"].shape[1]
    dl = params["w_last"].shape[1]
    dout = params["w_pred"].shape[1]

    # Host-side packing (pure data movement, no compute hoisted out of the kernel):
    #  * concat x and feat along features for the fused block-diagonal front matmul,
    #  * block-diagonal mask kron(I_B, edge_mask) so the in-kernel softmax directly yields
    #    block_diag(sgraph_b),
    #  * block-diagonal front weight [[W_gl, 0], [0, W_first]],
    #  * pred weight/bias zero-padded to 128 output lanes (lane-dense final store); the
    #    flat scratch is written in torch's flatten(cat(h0,h1,dim=2)) order, so no reorder.
    xcat = jnp.concatenate([features, feat], axis=2)
    mask_bd = jnp.kron(jnp.eye(B, dtype=jnp.float32), edge_mask.astype(jnp.float32))
    wfront = jnp.zeros((fin + omic, hgl + hgcn), jnp.float32)
    wfront = wfront.at[:fin, :hgl].set(params["w_gl"])
    wfront = wfront.at[fin:, hgl:].set(params["w_first"])
    wp = jnp.pad(params["w_pred"], ((0, 0), (0, OUT_PAD - dout)))
    bp = jnp.pad(params["b_pred"], ((0, 0), (0, OUT_PAD - dout)))

    vmem = pl.BlockSpec(memory_space=pltpu.MemorySpace.VMEM)
    smem = pl.BlockSpec(memory_space=pltpu.MemorySpace.SMEM)

    out = pl.pallas_call(
        functools.partial(_pglcn_kernel, fin=fin),
        out_shape=jax.ShapeDtypeStruct((B, OUT_PAD), jnp.float32),
        in_specs=[vmem,   # xcat  = [features | feat]
                  vmem,   # mask_bd = kron(I_B, edge_mask)
                  vmem,   # wfront = blockdiag(w_gl, w_first)
                  smem,   # a_gl (scalars)
                  vmem,   # w_last
                  vmem,   # w_pred (padded to 128 lanes)
                  vmem],  # b_pred (padded)
        out_specs=vmem,
        scratch_shapes=[
            pltpu.VMEM((B, N, hgcn), jnp.float32),              # ReLU(h0) slab
            pltpu.VMEM((B, N, dl), jnp.float32),                # ReLU(h1) slab
            pltpu.VMEM((B, N * (hgcn + dl)), jnp.float32),      # flattened pred input
        ],
    )(xcat, mask_bd, wfront, params["a_gl"], params["w_last"], wp, bp)
    return out[:, :dout]


# ----------------------------- pure-JAX reference ---------------------------- #

def pglcn_reference(params, features, feat, edge_mask):
    h = jnp.einsum("bnf,fh->bnh", features, params["w_gl"])
    diff = jnp.abs(h[:, :, None, :] - h[:, None, :, :])
    scores = jnp.maximum(jnp.einsum("bijh,h->bij", diff, params["a_gl"][0]), 0.0)
    neg = jnp.where(edge_mask[None] > 0.0, scores, -1e30)
    e = jnp.exp(neg - jnp.max(neg, axis=-1, keepdims=True)) * edge_mask[None]
    sgraph = e / jnp.sum(e, axis=-1, keepdims=True)

    def bn(t):
        mean = jnp.mean(t, axis=(0, 2), keepdims=True)
        var = jnp.mean((t - mean) ** 2, axis=(0, 2), keepdims=True)
        return (t - mean) / jnp.sqrt(var + 1e-5)

    nn_ = bn(feat)
    h0 = jnp.maximum(jnp.einsum("bij,bjk->bik", sgraph, nn_ @ params["w_first"]), 0.0)
    h0 = bn(h0)
    h1 = bn(jnp.einsum("bij,bjk->bik", sgraph, h0 @ params["w_last"]))
    h2 = jnp.concatenate([h0, h1], axis=2).reshape(features.shape[0], -1)
    return jnp.maximum(h2, 0.0) @ params["w_pred"] + params["b_pred"]


# ----------------------------- main ----------------------------------------- #

if __name__ == "__main__":
    jax.config.update("jax_default_matmul_precision", "highest")
    key = jax.random.PRNGKey(0)

    # Small shapes implied by the module:
    B, N = 4, 16                 # batch, num graph nodes (placeholders['features'].shape[:2])
    input_dim = 32               # placeholders['features'].shape[2]
    hidden_gl = 8                # proargs.hidden_gl
    omic_npc = 12                # proargs.omic * proargs.npc (feature dim of `feat`)
    hidden_gcn = 16              # proargs.hidden_gcn
    num_labels = 2               # placeholders['labels'].shape[1]
    output_dim = num_labels + 1  # self.output_dim

    keys = jax.random.split(key, 9)
    features = jax.random.normal(keys[0], (B, N, input_dim), jnp.float32)   # self.input
    feat = jax.random.normal(keys[1], (B, N, omic_npc), jnp.float32)        # forward arg `feat`

    # Deterministic edge structure (placeholders['edge']): symmetric mask with self loops.
    em = (jax.random.uniform(keys[2], (N, N)) < 0.3).astype(jnp.float32)
    edge_mask = jnp.maximum(jnp.maximum(em, em.T), jnp.eye(N, dtype=jnp.float32))

    def xavier(k, shape, gain):
        fan_in, fan_out = shape[0], shape[1]
        bound = gain * (6.0 / (fan_in + fan_out)) ** 0.5
        return jax.random.uniform(k, shape, jnp.float32, -bound, bound)

    g = 2.0 ** 0.5  # nn.init.calculate_gain('relu')
    params = {
        "w_gl": xavier(keys[3], (input_dim, hidden_gl), g),        # SparseGraphLearn.weight
        "a_gl": xavier(keys[4], (1, hidden_gl), g),                # SparseGraphLearn.a
        "w_first": xavier(keys[5], (omic_npc, hidden_gcn), g),     # GraphConvSlice (first)
        "w_last": xavier(keys[6], (hidden_gcn, output_dim), g),    # GraphConvSlice (last)
    }
    pred_in = N * (hidden_gcn + output_dim)                        # pred Linear input dim
    bnd = 1.0 / (pred_in ** 0.5)
    params["w_pred"] = jax.random.uniform(keys[7], (pred_in, output_dim), jnp.float32, -bnd, bnd)
    params["b_pred"] = jax.random.uniform(keys[8], (1, output_dim), jnp.float32, -bnd, bnd)

    pred = pglcn_forward(params, features, feat, edge_mask)
    pred = jax.block_until_ready(pred)
    assert pred.shape == (B, output_dim), pred.shape
    assert bool(jnp.all(jnp.isfinite(pred)))

    ref = pglcn_reference(params, features, feat, edge_mask)
    err = float(jnp.max(jnp.abs(pred - ref)))
    assert err < 5e-2, f"max abs err vs reference: {err}"

    print("KERNEL_OK")
</pallas_src>

<mosaic_0001>
module attributes {stable_mosaic.version = 11 : i64} {
  func.func @_pglcn_kernel(%arg0: memref<4x16x44xf32, #tpu.memory_space<vmem>>, %arg1: memref<64x64xf32, #tpu.memory_space<vmem>>, %arg2: memref<44x24xf32, #tpu.memory_space<vmem>>, %arg3: memref<1x8xf32, #tpu.memory_space<smem>>, %arg4: memref<16x3xf32, #tpu.memory_space<vmem>>, %arg5: memref<304x128xf32, #tpu.memory_space<vmem>>, %arg6: memref<1x128xf32, #tpu.memory_space<vmem>>, %arg7: memref<4x128xf32, #tpu.memory_space<vmem>>, %arg8: memref<4x16x16xf32, #tpu.memory_space<vmem>>, %arg9: memref<4x16x3xf32, #tpu.memory_space<vmem>>, %arg10: memref<4x304xf32, #tpu.memory_space<vmem>>) attributes {dimension_semantics = [], scalar_prefetch = 0 : i64, scratch_operands = 3 : i64, tpu.core_type = #tpu.core_type<tc>} {
    %c0 = arith.constant 0 : index
    %c0_0 = arith.constant 0 : index
    %c0_1 = arith.constant 0 : index
    %0 = vector.load %arg0[%c0, %c0_0, %c0_1] : memref<4x16x44xf32, #tpu.memory_space<vmem>>, vector<4x16x44xf32>
    %1 = tpu.iota {dimensions = array<i32: 2>} : vector<4x16x44xi32>
    %c32_i32 = arith.constant 32 : i32
    %2 = vector.broadcast %c32_i32 : i32 to vector<4x16x44xi32>
    %3 = arith.cmpi sge, %1, %2 : vector<4x16x44xi32>
    %cst = arith.constant 0.000000e+00 : f32
    %4 = vector.broadcast %cst : f32 to vector<4x16x44xf32>
    %5 = arith.select %3, %0, %4 : vector<4x16x44xi1>, vector<4x16x44xf32>
    %cst_2 = arith.constant dense<0.000000e+00> : vector<4x16xf32>
    %6 = vector.multi_reduction <add>, %5, %cst_2 [2] : vector<4x16x44xf32> to vector<4x16xf32>
    %7 = vector.shape_cast %6 : vector<4x16xf32> to vector<4x16x1xf32>
    %cst_3 = arith.constant dense<0.000000e+00> : vector<16x1xf32>
    %8 = vector.multi_reduction <add>, %7, %cst_3 [0] : vector<4x16x1xf32> to vector<16x1xf32>
    %9 = vector.shape_cast %8 : vector<16x1xf32> to vector<1x16x1xf32>
    %cst_4 = arith.constant 4.800000e+01 : f32
    %10 = vector.broadcast %cst_4 : f32 to vector<1x16x1xf32>
    %11 = arith.divf %9, %10 : vector<1x16x1xf32>
    %12 = vector.broadcast %11 : vector<1x16x1xf32> to vector<4x16x44xf32>
    %13 = arith.subf %0, %12 : vector<4x16x44xf32>
    %cst_5 = arith.constant 0.000000e+00 : f32
    %14 = vector.broadcast %cst_5 : f32 to vector<4x16x44xf32>
    %15 = arith.select %3, %13, %14 : vector<4x16x44xi1>, vector<4x16x44xf32>
    %16 = arith.mulf %15, %15 : vector<4x16x44xf32>
    %cst_6 = arith.constant dense<0.000000e+00> : vector<4x16xf32>
    %17 = vector.multi_reduction <add>, %16, %cst_6 [2] : vector<4x16x44xf32> to vector<4x16xf32>
    %18 = vector.shape_cast %17 : vector<4x16xf32> to vector<4x16x1xf32>
    %cst_7 = arith.constant dense<0.000000e+00> : vector<16x1xf32>
    %19 = vector.multi_reduction <add>, %18, %cst_7 [0] : vector<4x16x1xf32> to vector<16x1xf32>
    %20 = vector.shape_cast %19 : vector<16x1xf32> to vector<1x16x1xf32>
    %cst_8 = arith.constant 4.800000e+01 : f32
    %21 = vector.broadcast %cst_8 : f32 to vector<1x16x1xf32>
    %22 = arith.divf %20, %21 : vector<1x16x1xf32>
    %23 = vector.broadcast %11 : vector<1x16x1xf32> to vector<4x16x44xf32>
    %24 = arith.subf %0, %23 : vector<4x16x44xf32>
    %cst_9 = arith.constant 9.99999974E-6 : f32
    %25 = vector.broadcast %cst_9 : f32 to vector<1x16x1xf32>
    %26 = arith.addf %22, %25 : vector<1x16x1xf32>
    %27 = math.rsqrt %26 : vector<1x16x1xf32>
    %28 = vector.broadcast %27 : vector<1x16x1xf32> to vector<4x16x44xf32>
    %29 = arith.mulf %24, %28 : vector<4x16x44xf32>
    %30 = arith.select %3, %29, %0 : vector<4x16x44xi1>, vector<4x16x44xf32>
    %31 = vector.shape_cast %30 : vector<4x16x44xf32> to vector<64x44xf32>
    %c0_10 = arith.constant 0 : index
    %c0_11 = arith.constant 0 : index
    %32 = vector.load %arg2[%c0_10, %c0_11] : memref<44x24xf32, #tpu.memory_space<vmem>>, vector<44x24xf32>
    %cst_12 = arith.constant dense<0.000000e+00> : vector<64x24xf32>
    %33 = tpu.matmul %31, %32, %cst_12 {dimension_numbers = #tpu.dot_dimension_numbers<[1], [0], [0], [1], [0, 0, 1, 1], [], []>, precision = #tpu.contract_precision<fp32>} : vector<64x44xf32>, vector<44x24xf32>, vector<64x24xf32> -> vector<64x24xf32>
    %34 = vector.extract_strided_slice %33 {offsets = [0, 0], sizes = [64, 8], strides = [1, 1]} : vector<64x24xf32> to vector<64x8xf32>
    %35 = vector.extract_strided_slice %33 {offsets = [0, 8], sizes = [64, 16], strides = [1, 1]} : vector<64x24xf32> to vector<64x16xf32>
    %36 = tpu.transpose %34, [1, 0] : vector<64x8xf32> -> vector<8x64xf32>
    %cst_13 = arith.constant 0.000000e+00 : f32
    %37 = vector.broadcast %cst_13 : f32 to vector<64x64xf32>
    %c0_14 = arith.constant 0 : index
    %c0_15 = arith.constant 0 : index
    %38 = memref.load %arg3[%c0_14, %c0_15] : memref<1x8xf32, #tpu.memory_space<smem>>
    %39 = vector.extract_strided_slice %34 {offsets = [0, 0], sizes = [64, 1], strides = [1, 1]} : vector<64x8xf32> to vector<64x1xf32>
    %40 = vector.extract_strided_slice %36 {offsets = [0, 0], sizes = [1, 64], strides = [1, 1]} : vector<8x64xf32> to vector<1x64xf32>
    %41 = vector.broadcast %39 : vector<64x1xf32> to vector<64x64xf32>
    %42 = vector.broadcast %40 : vector<1x64xf32> to vector<64x64xf32>
    %43 = arith.subf %41, %42 : vector<64x64xf32>
    %44 = math.absf %43 : vector<64x64xf32>
    %45 = vector.broadcast %38 : f32 to vector<64x64xf32>
    %46 = arith.mulf %45, %44 : vector<64x64xf32>
    %47 = arith.addf %37, %46 : vector<64x64xf32>
    %c0_16 = arith.constant 0 : index
    %c1 = arith.constant 1 : index
    %48 = memref.load %arg3[%c0_16, %c1] : memref<1x8xf32, #tpu.memory_space<smem>>
    %49 = vector.extract_strided_slice %34 {offsets = [0, 1], sizes = [64, 1], strides = [1, 1]} : vector<64x8xf32> to vector<64x1xf32>
    %50 = vector.extract_strided_slice %36 {offsets = [1, 0], sizes = [1, 64], strides = [1, 1]} : vector<8x64xf32> to vector<1x64xf32>
    %51 = vector.broadcast %49 : vector<64x1xf32> to vector<64x64xf32>
    %52 = vector.broadcast %50 : vector<1x64xf32> to vector<64x64xf32>
    %53 = arith.subf %51, %52 : vector<64x64xf32>
    %54 = math.absf %53 : vector<64x64xf32>
    %55 = vector.broadcast %48 : f32 to vector<64x64xf32>
    %56 = arith.mulf %55, %54 : vector<64x64xf32>
    %57 = arith.addf %47, %56 : vector<64x64xf32>
    %c0_17 = arith.constant 0 : index
    %c2 = arith.constant 2 : index
    %58 = memref.load %arg3[%c0_17, %c2] : memref<1x8xf32, #tpu.memory_space<smem>>
    %59 = vector.extract_strided_slice %34 {offsets = [0, 2], sizes = [64, 1], strides = [1, 1]} : vector<64x8xf32> to vector<64x1xf32>
    %60 = vector.extract_strided_slice %36 {offsets = [2, 0], sizes = [1, 64], strides = [1, 1]} : vector<8x64xf32> to vector<1x64xf32>
    %61 = vector.broadcast %59 : vector<64x1xf32> to vector<64x64xf32>
    %62 = vector.broadcast %60 : vector<1x64xf32> to vector<64x64xf32>
    %63 = arith.subf %61, %62 : vector<64x64xf32>
    %64 = math.absf %63 : vector<64x64xf32>
    %65 = vector.broadcast %58 : f32 to vector<64x64xf32>
    %66 = arith.mulf %65, %64 : vector<64x64xf32>
    %67 = arith.addf %57, %66 : vector<64x64xf32>
    %c0_18 = arith.constant 0 : index
    %c3 = arith.constant 3 : index
    %68 = memref.load %arg3[%c0_18, %c3] : memref<1x8xf32, #tpu.memory_space<smem>>
    %69 = vector.extract_strided_slice %34 {offsets = [0, 3], sizes = [64, 1], strides = [1, 1]} : vector<64x8xf32> to vector<64x1xf32>
    %70 = vector.extract_strided_slice %36 {offsets = [3, 0], sizes = [1, 64], strides = [1, 1]} : vector<8x64xf32> to vector<1x64xf32>
    %71 = vector.broadcast %69 : vector<64x1xf32> to vector<64x64xf32>
    %72 = vector.broadcast %70 : vector<1x64xf32> to vector<64x64xf32>
    %73 = arith.subf %71, %72 : vector<64x64xf32>
    %74 = math.absf %73 : vector<64x64xf32>
    %75 = vector.broadcast %68 : f32 to vector<64x64xf32>
    %76 = arith.mulf %75, %74 : vector<64x64xf32>
    %77 = arith.addf %67, %76 : vector<64x64xf32>
    %c0_19 = arith.constant 0 : index
    %c4 = arith.constant 4 : index
    %78 = memref.load %arg3[%c0_19, %c4] : memref<1x8xf32, #tpu.memory_space<smem>>
    %79 = vector.extract_strided_slice %34 {offsets = [0, 4], sizes = [64, 1], strides = [1, 1]} : vector<64x8xf32> to vector<64x1xf32>
    %80 = vector.extract_strided_slice %36 {offsets = [4, 0], sizes = [1, 64], strides = [1, 1]} : vector<8x64xf32> to vector<1x64xf32>
    %81 = vector.broadcast %79 : vector<64x1xf32> to vector<64x64xf32>
    %82 = vector.broadcast %80 : vector<1x64xf32> to vector<64x64xf32>
    %83 = arith.subf %81, %82 : vector<64x64xf32>
    %84 = math.absf %83 : vector<64x64xf32>
    %85 = vector.broadcast %78 : f32 to vector<64x64xf32>
    %86 = arith.mulf %85, %84 : vector<64x64xf32>
    %87 = arith.addf %77, %86 : vector<64x64xf32>
    %c0_20 = arith.constant 0 : index
    %c5 = arith.constant 5 : index
    %88 = memref.load %arg3[%c0_20, %c5] : memref<1x8xf32, #tpu.memory_space<smem>>
    %89 = vector.extract_strided_slice %34 {offsets = [0, 5], sizes = [64, 1], strides = [1, 1]} : vector<64x8xf32> to vector<64x1xf32>
    %90 = vector.extract_strided_slice %36 {offsets = [5, 0], sizes = [1, 64], strides = [1, 1]} : vector<8x64xf32> to vector<1x64xf32>
    %91 = vector.broadcast %89 : vector<64x1xf32> to vector<64x64xf32>
    %92 = vector.broadcast %90 : vector<1x64xf32> to vector<64x64xf32>
    %93 = arith.subf %91, %92 : vector<64x64xf32>
    %94 = math.absf %93 : vector<64x64xf32>
    %95 = vector.broadcast %88 : f32 to vector<64x64xf32>
    %96 = arith.mulf %95, %94 : vector<64x64xf32>
    %97 = arith.addf %87, %96 : vector<64x64xf32>
    %c0_21 = arith.constant 0 : index
    %c6 = arith.constant 6 : index
    %98 = memref.load %arg3[%c0_21, %c6] : memref<1x8xf32, #tpu.memory_space<smem>>
    %99 = vector.extract_strided_slice %34 {offsets = [0, 6], sizes = [64, 1], strides = [1, 1]} : vector<64x8xf32> to vector<64x1xf32>
    %100 = vector.extract_strided_slice %36 {offsets = [6, 0], sizes = [1, 64], strides = [1, 1]} : vector<8x64xf32> to vector<1x64xf32>
    %101 = vector.broadcast %99 : vector<64x1xf32> to vector<64x64xf32>
    %102 = vector.broadcast %100 : vector<1x64xf32> to vector<64x64xf32>
    %103 = arith.subf %101, %102 : vector<64x64xf32>
    %104 = math.absf %103 : vector<64x64xf32>
    %105 = vector.broadcast %98 : f32 to vector<64x64xf32>
    %106 = arith.mulf %105, %104 : vector<64x64xf32>
    %107 = arith.addf %97, %106 : vector<64x64xf32>
    %c0_22 = arith.constant 0 : index
    %c7 = arith.constant 7 : index
    %108 = memref.load %arg3[%c0_22, %c7] : memref<1x8xf32, #tpu.memory_space<smem>>
    %109 = vector.extract_strided_slice %34 {offsets = [0, 7], sizes = [64, 1], strides = [1, 1]} : vector<64x8xf32> to vector<64x1xf32>
    %110 = vector.extract_strided_slice %36 {offsets = [7, 0], sizes = [1, 64], strides = [1, 1]} : vector<8x64xf32> to vector<1x64xf32>
    %111 = vector.broadcast %109 : vector<64x1xf32> to vector<64x64xf32>
    %112 = vector.broadcast %110 : vector<1x64xf32> to vector<64x64xf32>
    %113 = arith.subf %111, %112 : vector<64x64xf32>
    %114 = math.absf %113 : vector<64x64xf32>
    %115 = vector.broadcast %108 : f32 to vector<64x64xf32>
    %116 = arith.mulf %115, %114 : vector<64x64xf32>
    %117 = arith.addf %107, %116 : vector<64x64xf32>
    %cst_23 = arith.constant 0.000000e+00 : f32
    %118 = vector.broadcast %cst_23 : f32 to vector<64x64xf32>
    %119 = arith.maximumf %117, %118 : vector<64x64xf32>
    %c0_24 = arith.constant 0 : index
    %c0_25 = arith.constant 0 : index
    %120 = vector.load %arg1[%c0_24, %c0_25] : memref<64x64xf32, #tpu.memory_space<vmem>>, vector<64x64xf32>
    %cst_26 = arith.constant 0.000000e+00 : f32
    %121 = vector.broadcast %cst_26 : f32 to vector<64x64xf32>
    %122 = arith.cmpf ogt, %120, %121 : vector<64x64xf32>
    %cst_27 = arith.constant -1.000000e+30 : f32
    %123 = vector.broadcast %cst_27 : f32 to vector<64x64xf32>
    %124 = arith.select %122, %119, %123 : vector<64x64xi1>, vector<64x64xf32>
    %cst_28 = arith.constant dense<0xFF800000> : vector<64xf32>
    %125 = vector.multi_reduction <maximumf>, %124, %cst_28 [1] : vector<64x64xf32> to vector<64xf32>
    %126 = vector.shape_cast %125 : vector<64xf32> to vector<64x1xf32>
    %127 = vector.broadcast %126 : vector<64x1xf32> to vector<64x64xf32>
    %128 = arith.subf %124, %127 : vector<64x64xf32>
    %129 = math.exp %128 : vector<64x64xf32>
    %cst_29 = arith.constant dense<0.000000e+00> : vector<64xf32>
    %130 = vector.multi_reduction <add>, %129, %cst_29 [1] : vector<64x64xf32> to vector<64xf32>
    %131 = vector.shape_cast %130 : vector<64xf32> to vector<64x1xf32>
    %132 = vector.broadcast %131 : vector<64x1xf32> to vector<64x64xf32>
    %133 = arith.divf %129, %132 : vector<64x64xf32>
    %cst_30 = arith.constant dense<0.000000e+00> : vector<64x16xf32>
    %134 = tpu.matmul %133, %35, %cst_30 {dimension_numbers = #tpu.dot_dimension_numbers<[1], [0], [0], [1], [0, 0, 1, 1], [], []>, precision = #tpu.contract_precision<fp32>} : vector<64x64xf32>, vector<64x16xf32>, vector<64x16xf32> -> vector<64x16xf32>
    %cst_31 = arith.constant 0.000000e+00 : f32
    %135 = vector.broadcast %cst_31 : f32 to vector<64x16xf32>
    %136 = arith.maximumf %134, %135 : vector<64x16xf32>
    %137 = vector.shape_cast %136 : vector<64x16xf32> to vector<4x16x16xf32>
    %cst_32 = arith.constant dense<0.000000e+00> : vector<4x16xf32>
    %138 = vector.multi_reduction <add>, %137, %cst_32 [2] : vector<4x16x16xf32> to vector<4x16xf32>
    %139 = vector.shape_cast %138 : vector<4x16xf32> to vector<4x16x1xf32>
    %cst_33 = arith.constant 1.600000e+01 : f32
    %140 = vector.broadcast %cst_33 : f32 to vector<4x16x1xf32>
    %141 = arith.divf %139, %140 : vector<4x16x1xf32>
    %cst_34 = arith.constant dense<0.000000e+00> : vector<16x1xf32>
    %142 = vector.multi_reduction <add>, %141, %cst_34 [0] : vector<4x16x1xf32> to vector<16x1xf32>
    %143 = vector.shape_cast %142 : vector<16x1xf32> to vector<1x16x1xf32>
    %cst_35 = arith.constant 4.000000e+00 : f32
    %144 = vector.broadcast %cst_35 : f32 to vector<1x16x1xf32>
    %145 = arith.divf %143, %144 : vector<1x16x1xf32>
    %146 = vector.broadcast %145 : vector<1x16x1xf32> to vector<4x16x16xf32>
    %147 = arith.subf %137, %146 : vector<4x16x16xf32>
    %148 = arith.mulf %147, %147 : vector<4x16x16xf32>
    %cst_36 = arith.constant dense<0.000000e+00> : vector<4x16xf32>
    %149 = vector.multi_reduction <add>, %148, %cst_36 [2] : vector<4x16x16xf32> to vector<4x16xf32>
    %150 = vector.shape_cast %149 : vector<4x16xf32> to vector<4x16x1xf32>
    %cst_37 = arith.constant 1.600000e+01 : f32
    %151 = vector.broadcast %cst_37 : f32 to vector<4x16x1xf32>
    %152 = arith.divf %150, %151 : vector<4x16x1xf32>
    %cst_38 = arith.constant dense<0.000000e+00> : vector<16x1xf32>
    %153 = vector.multi_reduction <add>, %152, %cst_38 [0] : vector<4x16x1xf32> to vector<16x1xf32>
    %154 = vector.shape_cast %153 : vector<16x1xf32> to vector<1x16x1xf32>
    %cst_39 = arith.constant 4.000000e+00 : f32
    %155 = vector.broadcast %cst_39 : f32 to vector<1x16x1xf32>
    %156 = arith.divf %154, %155 : vector<1x16x1xf32>
    %157 = vector.broadcast %145 : vector<1x16x1xf32> to vector<4x16x16xf32>
    %158 = arith.subf %137, %157 : vector<4x16x16xf32>
    %cst_40 = arith.constant 9.99999974E-6 : f32
    %159 = vector.broadcast %cst_40 : f32 to vector<1x16x1xf32>
    %160 = arith.addf %156, %159 : vector<1x16x1xf32>
    %161 = math.rsqrt %160 : vector<1x16x1xf32>
    %162 = vector.broadcast %161 : vector<1x16x1xf32> to vector<4x16x16xf32>
    %163 = arith.mulf %158, %162 : vector<4x16x16xf32>
    %164 = vector.shape_cast %163 : vector<4x16x16xf32> to vector<64x16xf32>
    %c0_41 = arith.constant 0 : index
    %c0_42 = arith.constant 0 : index
    %165 = vector.load %arg4[%c0_41, %c0_42] : memref<16x3xf32, #tpu.memory_space<vmem>>, vector<16x3xf32>
    %cst_43 = arith.constant dense<0.000000e+00> : vector<64x3xf32>
    %166 = tpu.matmul %164, %165, %cst_43 {dimension_numbers = #tpu.dot_dimension_numbers<[1], [0], [0], [1], [0, 0, 1, 1], [], []>, precision = #tpu.contract_precision<fp32>} : vector<64x16xf32>, vector<16x3xf32>, vector<64x3xf32> -> vector<64x3xf32>
    %cst_44 = arith.constant dense<0.000000e+00> : vector<64x3xf32>
    %167 = tpu.matmul %133, %166, %cst_44 {dimension_numbers = #tpu.dot_dimension_numbers<[1], [0], [0], [1], [0, 0, 1, 1], [], []>, precision = #tpu.contract_precision<fp32>} : vector<64x64xf32>, vector<64x3xf32>, vector<64x3xf32> -> vector<64x3xf32>
    %168 = vector.shape_cast %167 : vector<64x3xf32> to vector<4x16x3xf32>
    %cst_45 = arith.constant dense<0.000000e+00> : vector<4x16xf32>
    %169 = vector.multi_reduction <add>, %168, %cst_45 [2] : vector<4x16x3xf32> to vector<4x16xf32>
    %170 = vector.shape_cast %169 : vector<4x16xf32> to vector<4x16x1xf32>
    %cst_46 = arith.constant 3.000000e+00 : f32
    %171 = vector.broadcast %cst_46 : f32 to vector<4x16x1xf32>
    %172 = arith.divf %170, %171 : vector<4x16x1xf32>
    %cst_47 = arith.constant dense<0.000000e+00> : vector<16x1xf32>
    %173 = vector.multi_reduction <add>, %172, %cst_47 [0] : vector<4x16x1xf32> to vector<16x1xf32>
    %174 = vector.shape_cast %173 : vector<16x1xf32> to vector<1x16x1xf32>
    %cst_48 = arith.constant 4.000000e+00 : f32
    %175 = vector.broadcast %cst_48 : f32 to vector<1x16x1xf32>
    %176 = arith.divf %174, %175 : vector<1x16x1xf32>
    %177 = vector.broadcast %176 : vector<1x16x1xf32> to vector<4x16x3xf32>
    %178 = arith.subf %168, %177 : vector<4x16x3xf32>
    %179 = arith.mulf %178, %178 : vector<4x16x3xf32>
    %cst_49 = arith.constant dense<0.000000e+00> : vector<4x16xf32>
    %180 = vector.multi_reduction <add>, %179, %cst_49 [2] : vector<4x16x3xf32> to vector<4x16xf32>
    %181 = vector.shape_cast %180 : vector<4x16xf32> to vector<4x16x1xf32>
    %cst_50 = arith.constant 3.000000e+00 : f32
    %182 = vector.broadcast %cst_50 : f32 to vector<4x16x1xf32>
    %183 = arith.divf %181, %182 : vector<4x16x1xf32>
    %cst_51 = arith.constant dense<0.000000e+00> : vector<16x1xf32>
    %184 = vector.multi_reduction <add>, %183, %cst_51 [0] : vector<4x16x1xf32> to vector<16x1xf32>
    %185 = vector.shape_cast %184 : vector<16x1xf32> to vector<1x16x1xf32>
    %cst_52 = arith.constant 4.000000e+00 : f32
    %186 = vector.broadcast %cst_52 : f32 to vector<1x16x1xf32>
    %187 = arith.divf %185, %186 : vector<1x16x1xf32>
    %188 = vector.broadcast %176 : vector<1x16x1xf32> to vector<4x16x3xf32>
    %189 = arith.subf %168, %188 : vector<4x16x3xf32>
    %cst_53 = arith.constant 9.99999974E-6 : f32
    %190 = vector.broadcast %cst_53 : f32 to vector<1x16x1xf32>
    %191 = arith.addf %187, %190 : vector<1x16x1xf32>
    %192 = math.rsqrt %191 : vector<1x16x1xf32>
    %193 = vector.broadcast %192 : vector<1x16x1xf32> to vector<4x16x3xf32>
    %194 = arith.mulf %189, %193 : vector<4x16x3xf32>
    %cst_54 = arith.constant 0.000000e+00 : f32
    %195 = vector.broadcast %cst_54 : f32 to vector<4x16x16xf32>
    %196 = arith.maximumf %163, %195 : vector<4x16x16xf32>
    %c0_55 = arith.constant 0 : index
    %c0_56 = arith.constant 0 : index
    %c0_57 = arith.constant 0 : index
    %197 = vector.load %arg8[%c0_55, %c0_56, %c0_57] : memref<4x16x16xf32, #tpu.memory_space<vmem>>, vector<4x16x16xf32>
    tpu.vector_store %arg8[%c0_55, %c0_56, %c0_57], %196 {strides = array<i32>} : memref<4x16x16xf32, #tpu.memory_space<vmem>>, vector<4x16x16xf32>,
    %cst_58 = arith.constant 0.000000e+00 : f32
    %198 = vector.broadcast %cst_58 : f32 to vector<4x16x3xf32>
    %199 = arith.maximumf %194, %198 : vector<4x16x3xf32>
    %c0_59 = arith.constant 0 : index
    %c0_60 = arith.constant 0 : index
    %c0_61 = arith.constant 0 : index
    %200 = vector.load %arg9[%c0_59, %c0_60, %c0_61] : memref<4x16x3xf32, #tpu.memory_space<vmem>>, vector<4x16x3xf32>
    tpu.vector_store %arg9[%c0_59, %c0_60, %c0_61], %199 {strides = array<i32>} : memref<4x16x3xf32, #tpu.memory_space<vmem>>, vector<4x16x3xf32>,
    %c0_62 = arith.constant 0 : index
    %c0_63 = arith.constant 0 : index
    %c0_64 = arith.constant 0 : index
    %201 = vector.load %arg8[%c0_62, %c0_63, %c0_64] : memref<4x16x16xf32, #tpu.memory_space<vmem>>, vector<4x1x16xf32>
    %202 = vector.shape_cast %201 : vector<4x1x16xf32> to vector<4x16xf32>
    %c0_65 = arith.constant 0 : index
    %c0_66 = arith.constant 0 : index
    %203 = vector.load %arg10[%c0_65, %c0_66] : memref<4x304xf32, #tpu.memory_space<vmem>>, vector<4x16xf32>
    tpu.vector_store %arg10[%c0_65, %c0_66], %202 {strides = array<i32>} : memref<4x304xf32, #tpu.memory_space<vmem>>, vector<4x16xf32>,
    %c0_67 = arith.constant 0 : index
    %c0_68 = arith.constant 0 : index
    %c0_69 = arith.constant 0 : index
    %204 = vector.load %arg9[%c0_67, %c0_68, %c0_69] : memref<4x16x3xf32, #tpu.memory_space<vmem>>, vector<4x1x3xf32>
    %205 = vector.shape_cast %204 : vector<4x1x3xf32> to vector<4x3xf32>
    %c0_70 = arith.constant 0 : index
    %c16 = arith.constant 16 : index
    %206 = vector.load %arg10[%c0_70, %c16] : memref<4x304xf32, #tpu.memory_space<vmem>>, vector<4x3xf32>
    tpu.vector_store %arg10[%c0_70, %c16], %205 {strides = array<i32>} : memref<4x304xf32, #tpu.memory_space<vmem>>, vector<4x3xf32>,
    %c0_71 = arith.constant 0 : index
    %c1_72 = arith.constant 1 : index
    %c0_73 = arith.constant 0 : index
    %207 = vector.load %arg8[%c0_71, %c1_72, %c0_73] : memref<4x16x16xf32, #tpu.memory_space<vmem>>, vector<4x1x16xf32>
    %208 = vector.shape_cast %207 : vector<4x1x16xf32> to vector<4x16xf32>
    %c0_74 = arith.constant 0 : index
    %c19 = arith.constant 19 : index
    %209 = vector.load %arg10[%c0_74, %c19] : memref<4x304xf32, #tpu.memory_space<vmem>>, vector<4x16xf32>
    tpu.vector_store %arg10[%c0_74, %c19], %208 {strides = array<i32>} : memref<4x304xf32, #tpu.memory_space<vmem>>, vector<4x16xf32>,
    %c0_75 = arith.constant 0 : index
    %c1_76 = arith.constant 1 : index
    %c0_77 = arith.constant 0 : index
    %210 = vector.load %arg9[%c0_75, %c1_76, %c0_77] : memref<4x16x3xf32, #tpu.memory_space<vmem>>, vector<4x1x3xf32>
    %211 = vector.shape_cast %210 : vector<4x1x3xf32> to vector<4x3xf32>
    %c0_78 = arith.constant 0 : index
    %c35 = arith.constant 35 : index
    %212 = vector.load %arg10[%c0_78, %c35] : memref<4x304xf32, #tpu.memory_space<vmem>>, vector<4x3xf32>
    tpu.vector_store %arg10[%c0_78, %c35], %211 {strides = array<i32>} : memref<4x304xf32, #tpu.memory_space<vmem>>, vector<4x3xf32>,
    %c0_79 = arith.constant 0 : index
    %c2_80 = arith.constant 2 : index
    %c0_81 = arith.constant 0 : index
    %213 = vector.load %arg8[%c0_79, %c2_80, %c0_81] : memref<4x16x16xf32, #tpu.memory_space<vmem>>, vector<4x1x16xf32>
    %214 = vector.shape_cast %213 : vector<4x1x16xf32> to vector<4x16xf32>
    %c0_82 = arith.constant 0 : index
    %c38 = arith.constant 38 : index
    %215 = vector.load %arg10[%c0_82, %c38] : memref<4x304xf32, #tpu.memory_space<vmem>>, vector<4x16xf32>
    tpu.vector_store %arg10[%c0_82, %c38], %214 {strides = array<i32>} : memref<4x304xf32, #tpu.memory_space<vmem>>, vector<4x16xf32>,
    %c0_83 = arith.constant 0 : index
    %c2_84 = arith.constant 2 : index
    %c0_85 = arith.constant 0 : index
    %216 = vector.load %arg9[%c0_83, %c2_84, %c0_85] : memref<4x16x3xf32, #tpu.memory_space<vmem>>, vector<4x1x3xf32>
    %217 = vector.shape_cast %216 : vector<4x1x3xf32> to vector<4x3xf32>
    %c0_86 = arith.constant 0 : index
    %c54 = arith.constant 54 : index
    %218 = vector.load %arg10[%c0_86, %c54] : memref<4x304xf32, #tpu.memory_space<vmem>>, vector<4x3xf32>
    tpu.vector_store %arg10[%c0_86, %c54], %217 {strides = array<i32>} : memref<4x304xf32, #tpu.memory_space<vmem>>, vector<4x3xf32>,
    %c0_87 = arith.constant 0 : index
    %c3_88 = arith.constant 3 : index
    %c0_89 = arith.constant 0 : index
    %219 = vector.load %arg8[%c0_87, %c3_88, %c0_89] : memref<4x16x16xf32, #tpu.memory_space<vmem>>, vector<4x1x16xf32>
    %220 = vector.shape_cast %219 : vector<4x1x16xf32> to vector<4x16xf32>
    %c0_90 = arith.constant 0 : index
    %c57 = arith.constant 57 : index
    %221 = vector.load %arg10[%c0_90, %c57] : memref<4x304xf32, #tpu.memory_space<vmem>>, vector<4x16xf32>
    tpu.vector_store %arg10[%c0_90, %c57], %220 {strides = array<i32>} : memref<4x304xf32, #tpu.memory_space<vmem>>, vector<4x16xf32>,
    %c0_91 = arith.constant 0 : index
    %c3_92 = arith.constant 3 : index
    %c0_93 = arith.constant 0 : index
    %222 = vector.load %arg9[%c0_91, %c3_92, %c0_93] : memref<4x16x3xf32, #tpu.memory_space<vmem>>, vector<4x1x3xf32>
    %223 = vector.shape_cast %222 : vector<4x1x3xf32> to vector<4x3xf32>
    %c0_94 = arith.constant 0 : index
    %c73 = arith.constant 73 : index
    %224 = vector.load %arg10[%c0_94, %c73] : memref<4x304xf32, #tpu.memory_space<vmem>>, vector<4x3xf32>
    tpu.vector_store %arg10[%c0_94, %c73], %223 {strides = array<i32>} : memref<4x304xf32, #tpu.memory_space<vmem>>, vector<4x3xf32>,
    %c0_95 = arith.constant 0 : index
    %c4_96 = arith.constant 4 : index
    %c0_97 = arith.constant 0 : index
    %225 = vector.load %arg8[%c0_95, %c4_96, %c0_97] : memref<4x16x16xf32, #tpu.memory_space<vmem>>, vector<4x1x16xf32>
    %226 = vector.shape_cast %225 : vector<4x1x16xf32> to vector<4x16xf32>
    %c0_98 = arith.constant 0 : index
    %c76 = arith.constant 76 : index
    %227 = vector.load %arg10[%c0_98, %c76] : memref<4x304xf32, #tpu.memory_space<vmem>>, vector<4x16xf32>
    tpu.vector_store %arg10[%c0_98, %c76], %226 {strides = array<i32>} : memref<4x304xf32, #tpu.memory_space<vmem>>, vector<4x16xf32>,
    %c0_99 = arith.constant 0 : index
    %c4_100 = arith.constant 4 : index
    %c0_101 = arith.constant 0 : index
    %228 = vector.load %arg9[%c0_99, %c4_100, %c0_101] : memref<4x16x3xf32, #tpu.memory_space<vmem>>, vector<4x1x3xf32>
    %229 = vector.shape_cast %228 : vector<4x1x3xf32> to vector<4x3xf32>
    %c0_102 = arith.constant 0 : index
    %c92 = arith.constant 92 : index
    %230 = vector.load %arg10[%c0_102, %c92] : memref<4x304xf32, #tpu.memory_space<vmem>>, vector<4x3xf32>
    tpu.vector_store %arg10[%c0_102, %c92], %229 {strides = array<i32>} : memref<4x304xf32, #tpu.memory_space<vmem>>, vector<4x3xf32>,
    %c0_103 = arith.constant 0 : index
    %c5_104 = arith.constant 5 : index
    %c0_105 = arith.constant 0 : index
    %231 = vector.load %arg8[%c0_103, %c5_104, %c0_105] : memref<4x16x16xf32, #tpu.memory_space<vmem>>, vector<4x1x16xf32>
    %232 = vector.shape_cast %231 : vector<4x1x16xf32> to vector<4x16xf32>
    %c0_106 = arith.constant 0 : index
    %c95 = arith.constant 95 : index
    %233 = vector.load %arg10[%c0_106, %c95] : memref<4x304xf32, #tpu.memory_space<vmem>>, vector<4x16xf32>
    tpu.vector_store %arg10[%c0_106, %c95], %232 {strides = array<i32>} : memref<4x304xf32, #tpu.memory_space<vmem>>, vector<4x16xf32>,
    %c0_107 = arith.constant 0 : index
    %c5_108 = arith.constant 5 : index
    %c0_109 = arith.constant 0 : index
    %234 = vector.load %arg9[%c0_107, %c5_108, %c0_109] : memref<4x16x3xf32, #tpu.memory_space<vmem>>, vector<4x1x3xf32>
    %235 = vector.shape_cast %234 : vector<4x1x3xf32> to vector<4x3xf32>
    %c0_110 = arith.constant 0 : index
    %c111 = arith.constant 111 : index
    %236 = vector.load %arg10[%c0_110, %c111] : memref<4x304xf32, #tpu.memory_space<vmem>>, vector<4x3xf32>
    tpu.vector_store %arg10[%c0_110, %c111], %235 {strides = array<i32>} : memref<4x304xf32, #tpu.memory_space<vmem>>, vector<4x3xf32>,
    %c0_111 = arith.constant 0 : index
    %c6_112 = arith.constant 6 : index
    %c0_113 = arith.constant 0 : index
    %237 = vector.load %arg8[%c0_111, %c6_112, %c0_113] : memref<4x16x16xf32, #tpu.memory_space<vmem>>, vector<4x1x16xf32>
    %238 = vector.shape_cast %237 : vector<4x1x16xf32> to vector<4x16xf32>
    %c0_114 = arith.constant 0 : index
    %c114 = arith.constant 114 : index
    %239 = vector.load %arg10[%c0_114, %c114] : memref<4x304xf32, #tpu.memory_space<vmem>>, vector<4x16xf32>
    tpu.vector_store %arg10[%c0_114, %c114], %238 {strides = array<i32>} : memref<4x304xf32, #tpu.memory_space<vmem>>, vector<4x16xf32>,
    %c0_115 = arith.constant 0 : index
    %c6_116 = arith.constant 6 : index
    %c0_117 = arith.constant 0 : index
    %240 = vector.load %arg9[%c0_115, %c6_116, %c0_117] : memref<4x16x3xf32, #tpu.memory_space<vmem>>, vector<4x1x3xf32>
    %241 = vector.shape_cast %240 : vector<4x1x3xf32> to vector<4x3xf32>
    %c0_118 = arith.constant 0 : index
    %c130 = arith.constant 130 : index
    %242 = vector.load %arg10[%c0_118, %c130] : memref<4x304xf32, #tpu.memory_space<vmem>>, vector<4x3xf32>
    tpu.vector_store %arg10[%c0_118, %c130], %241 {strides = array<i32>} : memref<4x304xf32, #tpu.memory_space<vmem>>, vector<4x3xf32>,
    %c0_119 = arith.constant 0 : index
    %c7_120 = arith.constant 7 : index
    %c0_121 = arith.constant 0 : index
    %243 = vector.load %arg8[%c0_119, %c7_120, %c0_121] : memref<4x16x16xf32, #tpu.memory_space<vmem>>, vector<4x1x16xf32>
    %244 = vector.shape_cast %243 : vector<4x1x16xf32> to vector<4x16xf32>
    %c0_122 = arith.constant 0 : index
    %c133 = arith.constant 133 : index
    %245 = vector.load %arg10[%c0_122, %c133] : memref<4x304xf32, #tpu.memory_space<vmem>>, vector<4x16xf32>
    tpu.vector_store %arg10[%c0_122, %c133], %244 {strides = array<i32>} : memref<4x304xf32, #tpu.memory_space<vmem>>, vector<4x16xf32>,
    %c0_123 = arith.constant 0 : index
    %c7_124 = arith.constant 7 : index
    %c0_125 = arith.constant 0 : index
    %246 = vector.load %arg9[%c0_123, %c7_124, %c0_125] : memref<4x16x3xf32, #tpu.memory_space<vmem>>, vector<4x1x3xf32>
    %247 = vector.shape_cast %246 : vector<4x1x3xf32> to vector<4x3xf32>
    %c0_126 = arith.constant 0 : index
    %c149 = arith.constant 149 : index
    %248 = vector.load %arg10[%c0_126, %c149] : memref<4x304xf32, #tpu.memory_space<vmem>>, vector<4x3xf32>
    tpu.vector_store %arg10[%c0_126, %c149], %247 {strides = array<i32>} : memref<4x304xf32, #tpu.memory_space<vmem>>, vector<4x3xf32>,
    %c0_127 = arith.constant 0 : index
    %c8 = arith.constant 8 : index
    %c0_128 = arith.constant 0 : index
    %249 = vector.load %arg8[%c0_127, %c8, %c0_128] : memref<4x16x16xf32, #tpu.memory_space<vmem>>, vector<4x1x16xf32>
    %250 = vector.shape_cast %249 : vector<4x1x16xf32> to vector<4x16xf32>
    %c0_129 = arith.constant 0 : index
    %c152 = arith.constant 152 : index
    %251 = vector.load %arg10[%c0_129, %c152] : memref<4x304xf32, #tpu.memory_space<vmem>>, vector<4x16xf32>
    tpu.vector_store %arg10[%c0_129, %c152], %250 {strides = array<i32>} : memref<4x304xf32, #tpu.memory_space<vmem>>, vector<4x16xf32>,
    %c0_130 = arith.constant 0 : index
    %c8_131 = arith.constant 8 : index
    %c0_132 = arith.constant 0 : index
    %252 = vector.load %arg9[%c0_130, %c8_131, %c0_132] : memref<4x16x3xf32, #tpu.memory_space<vmem>>, vector<4x1x3xf32>
    %253 = vector.shape_cast %252 : vector<4x1x3xf32> to vector<4x3xf32>
    %c0_133 = arith.constant 0 : index
    %c168 = arith.constant 168 : index
    %254 = vector.load %arg10[%c0_133, %c168] : memref<4x304xf32, #tpu.memory_space<vmem>>, vector<4x3xf32>
    tpu.vector_store %arg10[%c0_133, %c168], %253 {strides = array<i32>} : memref<4x304xf32, #tpu.memory_space<vmem>>, vector<4x3xf32>,
    %c0_134 = arith.constant 0 : index
    %c9 = arith.constant 9 : index
    %c0_135 = arith.constant 0 : index
    %255 = vector.load %arg8[%c0_134, %c9, %c0_135] : memref<4x16x16xf32, #tpu.memory_space<vmem>>, vector<4x1x16xf32>
    %256 = vector.shape_cast %255 : vector<4x1x16xf32> to vector<4x16xf32>
    %c0_136 = arith.constant 0 : index
    %c171 = arith.constant 171 : index
    %257 = vector.load %arg10[%c0_136, %c171] : memref<4x304xf32, #tpu.memory_space<vmem>>, vector<4x16xf32>
    tpu.vector_store %arg10[%c0_136, %c171], %256 {strides = array<i32>} : memref<4x304xf32, #tpu.memory_space<vmem>>, vector<4x16xf32>,
    %c0_137 = arith.constant 0 : index
    %c9_138 = arith.constant 9 : index
    %c0_139 = arith.constant 0 : index
    %258 = vector.load %arg9[%c0_137, %c9_138, %c0_139] : memref<4x16x3xf32, #tpu.memory_space<vmem>>, vector<4x1x3xf32>
    %259 = vector.shape_cast %258 : vector<4x1x3xf32> to vector<4x3xf32>
    %c0_140 = arith.constant 0 : index
    %c187 = arith.constant 187 : index
    %260 = vector.load %arg10[%c0_140, %c187] : memref<4x304xf32, #tpu.memory_space<vmem>>, vector<4x3xf32>
    tpu.vector_store %arg10[%c0_140, %c187], %259 {strides = array<i32>} : memref<4x304xf32, #tpu.memory_space<vmem>>, vector<4x3xf32>,
    %c0_141 = arith.constant 0 : index
    %c10 = arith.constant 10 : index
    %c0_142 = arith.constant 0 : index
    %261 = vector.load %arg8[%c0_141, %c10, %c0_142] : memref<4x16x16xf32, #tpu.memory_space<vmem>>, vector<4x1x16xf32>
    %262 = vector.shape_cast %261 : vector<4x1x16xf32> to vector<4x16xf32>
    %c0_143 = arith.constant 0 : index
    %c190 = arith.constant 190 : index
    %263 = vector.load %arg10[%c0_143, %c190] : memref<4x304xf32, #tpu.memory_space<vmem>>, vector<4x16xf32>
    tpu.vector_store %arg10[%c0_143, %c190], %262 {strides = array<i32>} : memref<4x304xf32, #tpu.memory_space<vmem>>, vector<4x16xf32>,
    %c0_144 = arith.constant 0 : index
    %c10_145 = arith.constant 10 : index
    %c0_146 = arith.constant 0 : index
    %264 = vector.load %arg9[%c0_144, %c10_145, %c0_146] : memref<4x16x3xf32, #tpu.memory_space<vmem>>, vector<4x1x3xf32>
    %265 = vector.shape_cast %264 : vector<4x1x3xf32> to vector<4x3xf32>
    %c0_147 = arith.constant 0 : index
    %c206 = arith.constant 206 : index
    %266 = vector.load %arg10[%c0_147, %c206] : memref<4x304xf32, #tpu.memory_space<vmem>>, vector<4x3xf32>
    tpu.vector_store %arg10[%c0_147, %c206], %265 {strides = array<i32>} : memref<4x304xf32, #tpu.memory_space<vmem>>, vector<4x3xf32>,
    %c0_148 = arith.constant 0 : index
    %c11 = arith.constant 11 : index
    %c0_149 = arith.constant 0 : index
    %267 = vector.load %arg8[%c0_148, %c11, %c0_149] : memref<4x16x16xf32, #tpu.memory_space<vmem>>, vector<4x1x16xf32>
    %268 = vector.shape_cast %267 : vector<4x1x16xf32> to vector<4x16xf32>
    %c0_150 = arith.constant 0 : index
    %c209 = arith.constant 209 : index
    %269 = vector.load %arg10[%c0_150, %c209] : memref<4x304xf32, #tpu.memory_space<vmem>>, vector<4x16xf32>
    tpu.vector_store %arg10[%c0_150, %c209], %268 {strides = array<i32>} : memref<4x304xf32, #tpu.memory_space<vmem>>, vector<4x16xf32>,
    %c0_151 = arith.constant 0 : index
    %c11_152 = arith.constant 11 : index
    %c0_153 = arith.constant 0 : index
    %270 = vector.load %arg9[%c0_151, %c11_152, %c0_153] : memref<4x16x3xf32, #tpu.memory_space<vmem>>, vector<4x1x3xf32>
    %271 = vector.shape_cast %270 : vector<4x1x3xf32> to vector<4x3xf32>
    %c0_154 = arith.constant 0 : index
    %c225 = arith.constant 225 : index
    %272 = vector.load %arg10[%c0_154, %c225] : memref<4x304xf32, #tpu.memory_space<vmem>>, vector<4x3xf32>
    tpu.vector_store %arg10[%c0_154, %c225], %271 {strides = array<i32>} : memref<4x304xf32, #tpu.memory_space<vmem>>, vector<4x3xf32>,
    %c0_155 = arith.constant 0 : index
    %c12 = arith.constant 12 : index
    %c0_156 = arith.constant 0 : index
    %273 = vector.load %arg8[%c0_155, %c12, %c0_156] : memref<4x16x16xf32, #tpu.memory_space<vmem>>, vector<4x1x16xf32>
    %274 = vector.shape_cast %273 : vector<4x1x16xf32> to vector<4x16xf32>
    %c0_157 = arith.constant 0 : index
    %c228 = arith.constant 228 : index
    %275 = vector.load %arg10[%c0_157, %c228] : memref<4x304xf32, #tpu.memory_space<vmem>>, vector<4x16xf32>
    tpu.vector_store %arg10[%c0_157, %c228], %274 {strides = array<i32>} : memref<4x304xf32, #tpu.memory_space<vmem>>, vector<4x16xf32>,
    %c0_158 = arith.constant 0 : index
    %c12_159 = arith.constant 12 : index
    %c0_160 = arith.constant 0 : index
    %276 = vector.load %arg9[%c0_158, %c12_159, %c0_160] : memref<4x16x3xf32, #tpu.memory_space<vmem>>, vector<4x1x3xf32>
    %277 = vector.shape_cast %276 : vector<4x1x3xf32> to vector<4x3xf32>
    %c0_161 = arith.constant 0 : index
    %c244 = arith.constant 244 : index
    %278 = vector.load %arg10[%c0_161, %c244] : memref<4x304xf32, #tpu.memory_space<vmem>>, vector<4x3xf32>
    tpu.vector_store %arg10[%c0_161, %c244], %277 {strides = array<i32>} : memref<4x304xf32, #tpu.memory_space<vmem>>, vector<4x3xf32>,
    %c0_162 = arith.constant 0 : index
    %c13 = arith.constant 13 : index
    %c0_163 = arith.constant 0 : index
    %279 = vector.load %arg8[%c0_162, %c13, %c0_163] : memref<4x16x16xf32, #tpu.memory_space<vmem>>, vector<4x1x16xf32>
    %280 = vector.shape_cast %279 : vector<4x1x16xf32> to vector<4x16xf32>
    %c0_164 = arith.constant 0 : index
    %c247 = arith.constant 247 : index
    %281 = vector.load %arg10[%c0_164, %c247] : memref<4x304xf32, #tpu.memory_space<vmem>>, vector<4x16xf32>
    tpu.vector_store %arg10[%c0_164, %c247], %280 {strides = array<i32>} : memref<4x304xf32, #tpu.memory_space<vmem>>, vector<4x16xf32>,
    %c0_165 = arith.constant 0 : index
    %c13_166 = arith.constant 13 : index
    %c0_167 = arith.constant 0 : index
    %282 = vector.load %arg9[%c0_165, %c13_166, %c0_167] : memref<4x16x3xf32, #tpu.memory_space<vmem>>, vector<4x1x3xf32>
    %283 = vector.shape_cast %282 : vector<4x1x3xf32> to vector<4x3xf32>
    %c0_168 = arith.constant 0 : index
    %c263 = arith.constant 263 : index
    %284 = vector.load %arg10[%c0_168, %c263] : memref<4x304xf32, #tpu.memory_space<vmem>>, vector<4x3xf32>
    tpu.vector_store %arg10[%c0_168, %c263], %283 {strides = array<i32>} : memref<4x304xf32, #tpu.memory_space<vmem>>, vector<4x3xf32>,
    %c0_169 = arith.constant 0 : index
    %c14 = arith.constant 14 : index
    %c0_170 = arith.constant 0 : index
    %285 = vector.load %arg8[%c0_169, %c14, %c0_170] : memref<4x16x16xf32, #tpu.memory_space<vmem>>, vector<4x1x16xf32>
    %286 = vector.shape_cast %285 : vector<4x1x16xf32> to vector<4x16xf32>
    %c0_171 = arith.constant 0 : index
    %c266 = arith.constant 266 : index
    %287 = vector.load %arg10[%c0_171, %c266] : memref<4x304xf32, #tpu.memory_space<vmem>>, vector<4x16xf32>
    tpu.vector_store %arg10[%c0_171, %c266], %286 {strides = array<i32>} : memref<4x304xf32, #tpu.memory_space<vmem>>, vector<4x16xf32>,
    %c0_172 = arith.constant 0 : index
    %c14_173 = arith.constant 14 : index
    %c0_174 = arith.constant 0 : index
    %288 = vector.load %arg9[%c0_172, %c14_173, %c0_174] : memref<4x16x3xf32, #tpu.memory_space<vmem>>, vector<4x1x3xf32>
    %289 = vector.shape_cast %288 : vector<4x1x3xf32> to vector<4x3xf32>
    %c0_175 = arith.constant 0 : index
    %c282 = arith.constant 282 : index
    %290 = vector.load %arg10[%c0_175, %c282] : memref<4x304xf32, #tpu.memory_space<vmem>>, vector<4x3xf32>
    tpu.vector_store %arg10[%c0_175, %c282], %289 {strides = array<i32>} : memref<4x304xf32, #tpu.memory_space<vmem>>, vector<4x3xf32>,
    %c0_176 = arith.constant 0 : index
    %c15 = arith.constant 15 : index
    %c0_177 = arith.constant 0 : index
    %291 = vector.load %arg8[%c0_176, %c15, %c0_177] : memref<4x16x16xf32, #tpu.memory_space<vmem>>, vector<4x1x16xf32>
    %292 = vector.shape_cast %291 : vector<4x1x16xf32> to vector<4x16xf32>
    %c0_178 = arith.constant 0 : index
    %c285 = arith.constant 285 : index
    %293 = vector.load %arg10[%c0_178, %c285] : memref<4x304xf32, #tpu.memory_space<vmem>>, vector<4x16xf32>
    tpu.vector_store %arg10[%c0_178, %c285], %292 {strides = array<i32>} : memref<4x304xf32, #tpu.memory_space<vmem>>, vector<4x16xf32>,
    %c0_179 = arith.constant 0 : index
    %c15_180 = arith.constant 15 : index
    %c0_181 = arith.constant 0 : index
    %294 = vector.load %arg9[%c0_179, %c15_180, %c0_181] : memref<4x16x3xf32, #tpu.memory_space<vmem>>, vector<4x1x3xf32>
    %295 = vector.shape_cast %294 : vector<4x1x3xf32> to vector<4x3xf32>
    %c0_182 = arith.constant 0 : index
    %c301 = arith.constant 301 : index
    %296 = vector.load %arg10[%c0_182, %c301] : memref<4x304xf32, #tpu.memory_space<vmem>>, vector<4x3xf32>
    tpu.vector_store %arg10[%c0_182, %c301], %295 {strides = array<i32>} : memref<4x304xf32, #tpu.memory_space<vmem>>, vector<4x3xf32>,
    %c0_183 = arith.constant 0 : index
    %c0_184 = arith.constant 0 : index
    %297 = vector.load %arg10[%c0_183, %c0_184] : memref<4x304xf32, #tpu.memory_space<vmem>>, vector<4x304xf32>
    %c0_185 = arith.constant 0 : index
    %c0_186 = arith.constant 0 : index
    %298 = vector.load %arg5[%c0_185, %c0_186] : memref<304x128xf32, #tpu.memory_space<vmem>>, vector<304x128xf32>
    %cst_187 = arith.constant dense<0.000000e+00> : vector<4x128xf32>
    %299 = tpu.matmul %297, %298, %cst_187 {dimension_numbers = #tpu.dot_dimension_numbers<[1], [0], [0], [1], [0, 0, 1, 1], [], []>, precision = #tpu.contract_precision<fp32>} : vector<4x304xf32>, vector<304x128xf32>, vector<4x128xf32> -> vector<4x128xf32>
    %c0_188 = arith.constant 0 : index
    %c0_189 = arith.constant 0 : index
    %300 = vector.load %arg6[%c0_188, %c0_189] : memref<1x128xf32, #tpu.memory_space<vmem>>, vector<1x128xf32>
    %301 = vector.broadcast %300 : vector<1x128xf32> to vector<4x128xf32>
    %302 = arith.addf %299, %301 : vector<4x128xf32>
    %c0_190 = arith.constant 0 : index
    %c0_191 = arith.constant 0 : index
    %303 = vector.load %arg7[%c0_190, %c0_191] : memref<4x128xf32, #tpu.memory_space<vmem>>, vector<4x128xf32>
    tpu.vector_store %arg7[%c0_190, %c0_191], %302 {strides = array<i32>} : memref<4x128xf32, #tpu.memory_space<vmem>>, vector<4x128xf32>,
    return
  }
}

</mosaic_0001>

<llo_original>
// kernel: pglcn_forward.1
$region0: #{pglcn_forward.1}
  #allocation0 [shape = 'u32[]', space=smem, size = 0x4, offset = 0x4, fixed_abs, tag = 'smem constant byte address 0x4 - core index']
  #allocation1 [shape = 'u32[72,128]{1,0:T(1,128)}', space=vmem, size = 0x9000, scoped, tag = 'internal scratch']
  #allocation2 [shape = 'f32[4,16,16]{2,1,0:T(8,128)}', space=vmem, size = 0x8000, scoped, tag = 'scratch operand']
  #allocation3 [shape = 'f32[4,16,3]{2,1,0:T(8,128)}', space=vmem, size = 0x8000, scoped, tag = 'scratch operand']
  #allocation4 [shape = 'f32[4,304]{1,0:T(4,128)}', space=vmem, size = 0x1800, scoped, tag = 'scratch operand']
  %s0 = inlined_call_operand.vmem [shape: f32[4,16,44], index: 0, kind: input, shape index: {}]
  %s1 = inlined_call_operand.vmem [shape: f32[64,64], index: 1, kind: input, shape index: {}]
  %s2 = inlined_call_operand.vmem [shape: f32[44,24], index: 2, kind: input, shape index: {}]
  %s3 = inlined_call_operand.vmem [shape: f32[1,8], index: 3, kind: input, shape index: {}]
  %s4 = inlined_call_operand.vmem [shape: f32[16,3], index: 4, kind: input, shape index: {}]
  %s5 = inlined_call_operand.vmem [shape: f32[304,128], index: 5, kind: input, shape index: {}]
  %s6 = inlined_call_operand.vmem [shape: f32[1,128], index: 6, kind: input, shape index: {}]
  %s7 = inlined_call_operand.hbm [shape: f32[4,128], index: 7, kind: output, shape index: {}]
  %s8 = sld [smem:[#allocation0]]
  $region42: #{pglcn_forward.1} parent=0
    _
  %s10 = ssub.s32 1, %s8
  %s11 = scalar_select 0, %s10, %s8
  $region1: #{pglcn_forward.1} parent=0
    #allocation5 [shape = 'u8[512]{0}', space=smem, size = 0x200, scoped, tag = 'input window, operand 3, single buffered']
    #allocation6 [shape = 's32[1]{0}', space=sflag, size = 0x4, scoped, tag = 'scoped memory for pglcn_forward.1']
    #allocation7 [shape = 's32[1]{0}', space=sflag, size = 0x4, scoped, tag = 'scoped memory for pglcn_forward.1']
    #allocation8 [shape = 'u8[2048]{0}', space=vmem, size = 0x800, scoped, tag = 'output window, operand 0, single buffered']
    %12 = vsyncpa [#allocation7], 0
    %13 = vsyncpa [#allocation6], 0
    // Predicated region
    $region2: #{pglcn_forward.1} parent=1 // pred_check
      _
    $region3: #{pglcn_forward.1} parent=1 // pred_check_branch
      %15 = sbr.rel (0) target = $region5
    $region4: #{pglcn_forward.1} parent=1 // pred_region
      _
    $region5: #{pglcn_forward.1} parent=1 // pred_fallthru
      _
    // Predicated region
    $region6: #{pglcn_forward.1} parent=1 // pred_check
      _
    $region7: #{pglcn_forward.1} parent=1 // pred_check_branch
      %17 = sbr.rel (0) target = $region9
    $region8: #{pglcn_forward.1} parent=1 // pred_region
      _
    $region9: #{pglcn_forward.1} parent=1 // pred_fallthru
      _
    // Predicated region
    $region10: #{pglcn_forward.1} parent=1 // pred_check
      _
    $region11: #{pglcn_forward.1} parent=1 // pred_check_branch
      %19 = sbr.rel (0) target = $region13
    $region12: #{pglcn_forward.1} parent=1 // pred_region
      _
    $region13: #{pglcn_forward.1} parent=1 // pred_fallthru
      _
    // Predicated region
    $region14: #{pglcn_forward.1} parent=1 // pred_check
      _
    $region15: #{pglcn_forward.1} parent=1 // pred_check_branch
      %21 = sbr.rel (0) target = $region17
    $region16: #{pglcn_forward.1} parent=1 // pred_region
      %23 = vsyncadd [#allocation7], 0
      %s25 = sshll.u32 %s3, 4
      %s26 = int_to_ptr.vmem [resolvable:$true] %s25
      %28 = dma.vmem_to_smem %s26, 16, [#allocation5], [#allocation7]
    $region17: #{pglcn_forward.1} parent=1 // pred_fallthru
      _
    // Predicated region
    $region18: #{pglcn_forward.1} parent=1 // pred_check
      _
    $region19: #{pglcn_forward.1} parent=1 // pred_check_branch
      %30 = sbr.rel (0) target = $region21
    $region20: #{pglcn_forward.1} parent=1 // pred_region
      _
    $region21: #{pglcn_forward.1} parent=1 // pred_fallthru
      _
    // Predicated region
    $region22: #{pglcn_forward.1} parent=1 // pred_check
      _
    $region23: #{pglcn_forward.1} parent=1 // pred_check_branch
      %32 = sbr.rel (0) target = $region25
    $region24: #{pglcn_forward.1} parent=1 // pred_region
      _
    $region25: #{pglcn_forward.1} parent=1 // pred_fallthru
      _
    // Predicated region
    $region26: #{pglcn_forward.1} parent=1 // pred_check
      _
    $region27: #{pglcn_forward.1} parent=1 // pred_check_branch
      %34 = sbr.rel (0) target = $region29
    $region28: #{pglcn_forward.1} parent=1 // pred_region
      _
    $region29: #{pglcn_forward.1} parent=1 // pred_fallthru
      _
    // Predicated region
    $region30: #{pglcn_forward.1} parent=1 // pred_check
      _
    $region31: #{pglcn_forward.1} parent=1 // pred_check_branch
      %36 = sbr.rel (0) target = $region33
    $region32: #{pglcn_forward.1} parent=1 // pred_region
      %38 = dma.done [#allocation7], 16
    $region33: #{pglcn_forward.1} parent=1 // pred_fallthru
      _
    %39 = sfence
    %v40 = vld [vmem:[%s0] sm:$0xff]
    %v41 = vld [vmem:[%s0 + $0x8] sm:$0xff]
    %v42 = vld [vmem:[%s0 + $0x10] sm:$0xff]
    %v43 = vld [vmem:[%s0 + $0x18] sm:$0xff]
    %v44 = vld [vmem:[%s0 + $0x20] sm:$0xff]
    %v45 = vld [vmem:[%s0 + $0x28] sm:$0xff]
    %v46 = vld [vmem:[%s0 + $0x30] sm:$0xff]
    %v47 = vld [vmem:[%s0 + $0x38] sm:$0xff]
    %v48 = vlaneseq
    %v49 = vand.u32 %v48, 127
    %vm50 = vcmp.ge.s32.totalorder %v49, 32
    %v51 = vsel %vm50, %v40, 0.0
    %v52 = vsel %vm50, %v41, 0.0
    %v53 = vsel %vm50, %v42, 0.0
    %v54 = vsel %vm50, %v43, 0.0
    %v55 = vsel %vm50, %v44, 0.0
    %v56 = vsel %vm50, %v45, 0.0
    %v57 = vsel %vm50, %v46, 0.0
    %v58 = vsel %vm50, %v47, 0.0
    %vm59 = vcmask 359424
    %v60 = vsel %vm59, %v51, 0.0
    %61 = vadd.xlane.f32.xlu0 %v60
    %v62 = vpop.xlane.xlu0 %61
    %v63 = vsel %vm59, %v52, 0.0
    %64 = vadd.xlane.f32.xlu0 %v63
    %v65 = vpop.xlane.xlu0 %64
    %v66 = vsel %vm59, %v53, 0.0
    %67 = vadd.xlane.f32.xlu0 %v66
    %v68 = vpop.xlane.xlu0 %67
    %v69 = vsel %vm59, %v54, 0.0
    %70 = vadd.xlane.f32.xlu0 %v69
    %v71 = vpop.xlane.xlu0 %70
    %v72 = vsel %vm59, %v55, 0.0
    %73 = vadd.xlane.f32.xlu0 %v72
    %v74 = vpop.xlane.xlu0 %73
    %v75 = vsel %vm59, %v56, 0.0
    %76 = vadd.xlane.f32.xlu0 %v75
    %v77 = vpop.xlane.xlu0 %76
    %v78 = vsel %vm59, %v57, 0.0
    %79 = vadd.xlane.f32.xlu0 %v78
    %v80 = vpop.xlane.xlu0 %79
    %v81 = vsel %vm59, %v58, 0.0
    %82 = vadd.xlane.f32.xlu0 %v81
    %v83 = vpop.xlane.xlu0 %82
    %v84 = vadd.f32 %v62, %v68
    %v85 = vadd.f32 %v84, %v74
    %v86 = vadd.f32 %v85, %v80
    %v87 = vadd.f32 %v65, %v71
    %v88 = vadd.f32 %v87, %v77
    %v89 = vadd.f32 %v88, %v83
    %v90 = vrcp.pop 48.0
    %v91 = vmul.f32 48.0, %v90
    %v92 = vsub.f32 1.0, %v91
    %v93 = vmul.f32 %v90, %v92
    %v94 = vadd.f32 %v90, %v93
    %vm95 = vweird.f32 %v90
    %v96 = vsel %vm95, %v90, %v94
    %v97 = vmul.f32 %v86, %v96
    %v98 = vmul.f32 %v89, %v96
    %v99 = vsub.f32 %v40, %v97
    %v100 = vsub.f32 %v41, %v98
    %v101 = vsub.f32 %v42, %v97
    %v102 = vsub.f32 %v43, %v98
    %v103 = vsub.f32 %v44, %v97
    %v104 = vsub.f32 %v45, %v98
    %v105 = vsub.f32 %v46, %v97
    %v106 = vsub.f32 %v47, %v98
    %v107 = vsel %vm50, %v99, 0.0
    %v108 = vsel %vm50, %v100, 0.0
    %v109 = vsel %vm50, %v101, 0.0
    %v110 = vsel %vm50, %v102, 0.0
    %v111 = vsel %vm50, %v103, 0.0
    %v112 = vsel %vm50, %v104, 0.0
    %v113 = vsel %vm50, %v105, 0.0
    %v114 = vsel %vm50, %v106, 0.0
    %v115 = vmul.f32 %v107, %v107
    %v116 = vmul.f32 %v108, %v108
    %v117 = vmul.f32 %v109, %v109
    %v118 = vmul.f32 %v110, %v110
    %v119 = vmul.f32 %v111, %v111
    %v120 = vmul.f32 %v112, %v112
    %v121 = vmul.f32 %v113, %v113
    %v122 = vmul.f32 %v114, %v114
    %v123 = vsel %vm59, %v115, 0.0
    %124 = vadd.xlane.f32.xlu0 %v123
    %v125 = vpop.xlane.xlu0 %124
    %v126 = vsel %vm59, %v116, 0.0
    %127 = vadd.xlane.f32.xlu0 %v126
    %v128 = vpop.xlane.xlu0 %127
    %v129 = vsel %vm59, %v117, 0.0
    %130 = vadd.xlane.f32.xlu0 %v129
    %v131 = vpop.xlane.xlu0 %130
    %v132 = vsel %vm59, %v118, 0.0
    %133 = vadd.xlane.f32.xlu0 %v132
    %v134 = vpop.xlane.xlu0 %133
    %v135 = vsel %vm59, %v119, 0.0
    %136 = vadd.xlane.f32.xlu0 %v135
    %v137 = vpop.xlane.xlu0 %136
    %v138 = vsel %vm59, %v120, 0.0
    %139 = vadd.xlane.f32.xlu0 %v138
    %v140 = vpop.xlane.xlu0 %139
    %v141 = vsel %vm59, %v121, 0.0
    %142 = vadd.xlane.f32.xlu0 %v141
    %v143 = vpop.xlane.xlu0 %142
    %v144 = vsel %vm59, %v122, 0.0
    %145 = vadd.xlane.f32.xlu0 %v144
    %v146 = vpop.xlane.xlu0 %145
    %v147 = vadd.f32 %v125, %v131
    %v148 = vadd.f32 %v147, %v137
    %v149 = vadd.f32 %v148, %v143
    %v150 = vadd.f32 %v128, %v134
    %v151 = vadd.f32 %v150, %v140
    %v152 = vadd.f32 %v151, %v146
    %v153 = vmul.f32 %v149, %v96
    %v154 = vmul.f32 %v152, %v96
    %v155 = vadd.f32 %v153, 1e-05
    %v156 = vadd.f32 %v154, 1e-05
    %v157 = vrsqrt.pop %v155
    %v158 = vmul.f32 %v157, %v155
    %v159 = vmul.f32 %v158, %v157
    %v160 = vmul.f32 0.5, %v159
    %v161 = vsub.f32 1.5, %v160
    %v162 = vmul.f32 %v157, %v161
    %vm163 = vweird.f32 %v155
    %vm164 = vweird.f32 %v157
    %vm165 = vmor %vm163, %vm164
    %v166 = vsel %vm165, %v157, %v162
    %v167 = vrsqrt.pop %v156
    %v168 = vmul.f32 %v167, %v156
    %v169 = vmul.f32 %v168, %v167
    %v170 = vmul.f32 0.5, %v169
    %v171 = vsub.f32 1.5, %v170
    %v172 = vmul.f32 %v167, %v171
    %vm173 = vweird.f32 %v156
    %vm174 = vweird.f32 %v167
    %vm175 = vmor %vm173, %vm174
    %v176 = vsel %vm175, %v167, %v172
    %v177 = vmul.f32 %v99, %v166
    %v178 = vmul.f32 %v100, %v176
    %v179 = vmul.f32 %v101, %v166
    %v180 = vmul.f32 %v102, %v176
    %v181 = vmul.f32 %v103, %v166
    %v182 = vmul.f32 %v104, %v176
    %v183 = vmul.f32 %v105, %v166
    %v184 = vmul.f32 %v106, %v176
    %v185 = vsel %vm50, %v177, %v40
    %v186 = vsel %vm50, %v178, %v41
    %v187 = vsel %vm50, %v179, %v42
    %v188 = vsel %vm50, %v180, %v43
    %v189 = vsel %vm50, %v181, %v44
    %v190 = vsel %vm50, %v182, %v45
    %v191 = vsel %vm50, %v183, %v46
    %v192 = vsel %vm50, %v184, %v47
    %v193 = vld [vmem:[%s2] sm:$0xff]
    %v194 = vld [vmem:[%s2 + $0x8] sm:$0xff]
    %v195 = vld [vmem:[%s2 + $0x10] sm:$0xff]
    %v196 = vld [vmem:[%s2 + $0x18] sm:$0xff]
    %v197 = vld [vmem:[%s2 + $0x20] sm:$0xff]
    %v198 = vld [vmem:[%s2 + $0x28] sm:$0xf]
    %v200 = vsel %vm59, %v185, 0
    %v203 = vsel %vm59, %v186, 0
    %v206 = vsel %vm59, %v187, 0
    %v209 = vsel %vm59, %v188, 0
    %v212 = vsel %vm59, %v189, 0
    %v215 = vsel %vm59, %v190, 0
    %v218 = vsel %vm59, %v191, 0
    %v221 = vsel %vm59, %v192, 0
    %vm223 = vcmask 1043456
    %v225 = vsel %vm223, %v198, 0
    %227 = vmatpush.msra.mxu0 0.0
    %228 = vmatpush.msra.mxu0 0.0
    %229 = vmatpush.msra.mxu0 0.0
    %230 = vmatpush.msra.mxu0 0.0
    %231 = vmatpush.msra.mxu0 0.0
    %232 = vmatpush.msra.mxu0 0.0
    %233 = vmatpush.msra.mxu0 0.0
    %234 = vmatpush.msra.mxu0 0.0
    %235 = vmatpush.msra.mxu0 0.0
    %236 = vmatpush.msra.mxu0 0.0
    %v237 = vand.u32 %v225, 4294901760
    %238 = vmatpush.msra.mxu0 %v237
    %v239 = vand.u32 %v197, 4294901760
    %240 = vmatpush.msra.mxu0 %v239
    %v241 = vand.u32 %v196, 4294901760
    %242 = vmatpush.msra.mxu0 %v241
    %v243 = vand.u32 %v195, 4294901760
    %244 = vmatpush.msra.mxu0 %v243
    %v245 = vand.u32 %v194, 4294901760
    %246 = vmatpush.msra.mxu0 %v245
    %v247 = vand.u32 %v193, 4294901760
    %248 = vmatpush.msra.mxu0 %v247
    %v249 = vand.u32 %v200, 4294901760
    %v250 = vsub.f32 %v200, %v249
    %v251 = vand.u32 %v250, 4294901760
    %v252 = vsub.f32 %v250, %v251
    %v253 = vand.u32 %v252, 4294901760
    %254 = vmatmul.f32.gmra.mxu0 %v253
    %v255 = vpop.f32.mrf.mxu0
    %v256 = vadd.f32 0.0, %v255
    %v257 = vand.u32 %v203, 4294901760
    %v258 = vsub.f32 %v203, %v257
    %v259 = vand.u32 %v258, 4294901760
    %v260 = vsub.f32 %v258, %v259
    %v261 = vand.u32 %v260, 4294901760
    %262 = vmatmul.f32.gmra.mxu0 %v261
    %v263 = vpop.f32.mrf.mxu0
    %v264 = vadd.f32 0.0, %v263
    %v265 = vand.u32 %v206, 4294901760
    %v266 = vsub.f32 %v206, %v265
    %v267 = vand.u32 %v266, 4294901760
    %v268 = vsub.f32 %v266, %v267
    %v269 = vand.u32 %v268, 4294901760
    %270 = vmatmul.f32.gmra.mxu0 %v269
    %v271 = vpop.f32.mrf.mxu0
    %v272 = vadd.f32 0.0, %v271
    %v273 = vand.u32 %v209, 4294901760
    %v274 = vsub.f32 %v209, %v273
    %v275 = vand.u32 %v274, 4294901760
    %v276 = vsub.f32 %v274, %v275
    %v277 = vand.u32 %v276, 4294901760
    %278 = vmatmul.f32.gmra.mxu0 %v277
    %v279 = vpop.f32.mrf.mxu0
    %v280 = vadd.f32 0.0, %v279
    %v281 = vand.u32 %v212, 4294901760
    %v282 = vsub.f32 %v212, %v281
    %v283 = vand.u32 %v282, 4294901760
    %v284 = vsub.f32 %v282, %v283
    %v285 = vand.u32 %v284, 4294901760
    %286 = vmatmul.f32.gmra.mxu0 %v285
    %v287 = vpop.f32.mrf.mxu0
    %v288 = vadd.f32 0.0, %v287
    %v289 = vand.u32 %v215, 4294901760
    %v290 = vsub.f32 %v215, %v289
    %v291 = vand.u32 %v290, 4294901760
    %v292 = vsub.f32 %v290, %v291
    %v293 = vand.u32 %v292, 4294901760
    %294 = vmatmul.f32.gmra.mxu0 %v293
    %v295 = vpop.f32.mrf.mxu0
    %v296 = vadd.f32 0.0, %v295
    %v297 = vand.u32 %v218, 4294901760
    %v298 = vsub.f32 %v218, %v297
    %v299 = vand.u32 %v298, 4294901760
    %v300 = vsub.f32 %v298, %v299
    %v301 = vand.u32 %v300, 4294901760
    %302 = vmatmul.f32.gmra.mxu0 %v301
    %v303 = vpop.f32.mrf.mxu0
    %v304 = vadd.f32 0.0, %v303
    %v305 = vand.u32 %v221, 4294901760
    %v306 = vsub.f32 %v221, %v305
    %v307 = vand.u32 %v306, 4294901760
    %v308 = vsub.f32 %v306, %v307
    %v309 = vand.u32 %v308, 4294901760
    %310 = vmatmul.f32.gmra.mxu0 %v309
    %v311 = vpop.f32.mrf.mxu0
    %v312 = vadd.f32 0.0, %v311
    %313 = vdwg.mxu0
    %314 = vmatpush.msra.mxu0 0.0
    %315 = vmatpush.msra.mxu0 0.0
    %316 = vmatpush.msra.mxu0 0.0
    %317 = vmatpush.msra.mxu0 0.0
    %318 = vmatpush.msra.mxu0 0.0
    %319 = vmatpush.msra.mxu0 0.0
    %320 = vmatpush.msra.mxu0 0.0
    %321 = vmatpush.msra.mxu0 0.0
    %322 = vmatpush.msra.mxu0 0.0
    %323 = vmatpush.msra.mxu0 0.0
    %v324 = vand.u32 %v225, 4294901760
    %v325 = vsub.f32 %v225, %v324
    %v326 = vand.u32 %v325, 4294901760
    %v327 = vsub.f32 %v325, %v326
    %v328 = vand.u32 %v327, 4294901760
    %329 = vmatpush.msra.mxu0 %v328
    %v330 = vand.u32 %v197, 4294901760
    %v331 = vsub.f32 %v197, %v330
    %v332 = vand.u32 %v331, 4294901760
    %v333 = vsub.f32 %v331, %v332
    %v334 = vand.u32 %v333, 4294901760
    %335 = vmatpush.msra.mxu0 %v334
    %v336 = vand.u32 %v196, 4294901760
    %v337 = vsub.f32 %v196, %v336
    %v338 = vand.u32 %v337, 4294901760
    %v339 = vsub.f32 %v337, %v338
    %v340 = vand.u32 %v339, 4294901760
    %341 = vmatpush.msra.mxu0 %v340
    %v342 = vand.u32 %v195, 4294901760
    %v343 = vsub.f32 %v195, %v342
    %v344 = vand.u32 %v343, 4294901760
    %v345 = vsub.f32 %v343, %v344
    %v346 = vand.u32 %v345, 4294901760
    %347 = vmatpush.msra.mxu0 %v346
    %v348 = vand.u32 %v194, 4294901760
    %v349 = vsub.f32 %v194, %v348
    %v350 = vand.u32 %v349, 4294901760
    %v351 = vsub.f32 %v349, %v350
    %v352 = vand.u32 %v351, 4294901760
    %353 = vmatpush.msra.mxu0 %v352
    %v354 = vand.u32 %v193, 4294901760
    %v355 = vsub.f32 %v193, %v354
    %v356 = vand.u32 %v355, 4294901760
    %v357 = vsub.f32 %v355, %v356
    %v358 = vand.u32 %v357, 4294901760
    %359 = vmatpush.msra.mxu0 %v358
    %v360 = vand.u32 %v200, 4294901760
    %361 = vmatmul.f32.gmra.mxu0 %v360
    %v362 = vpop.f32.mrf.mxu0
    %v363 = vadd.f32 %v256, %v362
    %v364 = vand.u32 %v203, 4294901760
    %365 = vmatmul.f32.gmra.mxu0 %v364
    %v366 = vpop.f32.mrf.mxu0
    %v367 = vadd.f32 %v264, %v366
    %v368 = vand.u32 %v206, 4294901760
    %369 = vmatmul.f32.gmra.mxu0 %v368
    %v370 = vpop.f32.mrf.mxu0
    %v371 = vadd.f32 %v272, %v370
    %v372 = vand.u32 %v209, 4294901760
    %373 = vmatmul.f32.gmra.mxu0 %v372
    %v374 = vpop.f32.mrf.mxu0
    %v375 = vadd.f32 %v280, %v374
    %v376 = vand.u32 %v212, 4294901760
    %377 = vmatmul.f32.gmra.mxu0 %v376
    %v378 = vpop.f32.mrf.mxu0
    %v379 = vadd.f32 %v288, %v378
    %v380 = vand.u32 %v215, 4294901760
    %381 = vmatmul.f32.gmra.mxu0 %v380
    %v382 = vpop.f32.mrf.mxu0
    %v383 = vadd.f32 %v296, %v382
    %v384 = vand.u32 %v218, 4294901760
    %385 = vmatmul.f32.gmra.mxu0 %v384
    %v386 = vpop.f32.mrf.mxu0
    %v387 = vadd.f32 %v304, %v386
    %v388 = vand.u32 %v221, 4294901760
    %389 = vmatmul.f32.gmra.mxu0 %v388
    %v390 = vpop.f32.mrf.mxu0
    %v391 = vadd.f32 %v312, %v390
    %392 = vdwg.mxu0
    %393 = vmatpush.msra.mxu0 0.0
    %394 = vmatpush.msra.mxu0 0.0
    %395 = vmatpush.msra.mxu0 0.0
    %396 = vmatpush.msra.mxu0 0.0
    %397 = vmatpush.msra.mxu0 0.0
    %398 = vmatpush.msra.mxu0 0.0
    %399 = vmatpush.msra.mxu0 0.0
    %400 = vmatpush.msra.mxu0 0.0
    %401 = vmatpush.msra.mxu0 0.0
    %402 = vmatpush.msra.mxu0 0.0
    %v403 = vand.u32 %v225, 4294901760
    %v404 = vsub.f32 %v225, %v403
    %405 = vmatpush.msra.mxu0 %v404
    %v406 = vand.u32 %v197, 4294901760
    %v407 = vsub.f32 %v197, %v406
    %408 = vmatpush.msra.mxu0 %v407
    %v409 = vand.u32 %v196, 4294901760
    %v410 = vsub.f32 %v196, %v409
    %411 = vmatpush.msra.mxu0 %v410
    %v412 = vand.u32 %v195, 4294901760
    %v413 = vsub.f32 %v195, %v412
    %414 = vmatpush.msra.mxu0 %v413
    %v415 = vand.u32 %v194, 4294901760
    %v416 = vsub.f32 %v194, %v415
    %417 = vmatpush.msra.mxu0 %v416
    %v418 = vand.u32 %v193, 4294901760
    %v419 = vsub.f32 %v193, %v418
    %420 = vmatpush.msra.mxu0 %v419
    %v421 = vand.u32 %v200, 4294901760
    %v422 = vsub.f32 %v200, %v421
    %423 = vmatmul.f32.gmra.mxu0 %v422
    %v424 = vpop.f32.mrf.mxu0
    %v425 = vadd.f32 %v363, %v424
    %v426 = vand.u32 %v203, 4294901760
    %v427 = vsub.f32 %v203, %v426
    %428 = vmatmul.f32.gmra.mxu0 %v427
    %v429 = vpop.f32.mrf.mxu0
    %v430 = vadd.f32 %v367, %v429
    %v431 = vand.u32 %v206, 4294901760
    %v432 = vsub.f32 %v206, %v431
    %433 = vmatmul.f32.gmra.mxu0 %v432
    %v434 = vpop.f32.mrf.mxu0
    %v435 = vadd.f32 %v371, %v434
    %v436 = vand.u32 %v209, 4294901760
    %v437 = vsub.f32 %v209, %v436
    %438 = vmatmul.f32.gmra.mxu0 %v437
    %v439 = vpop.f32.mrf.mxu0
    %v440 = vadd.f32 %v375, %v439
    %v441 = vand.u32 %v212, 4294901760
    %v442 = vsub.f32 %v212, %v441
    %443 = vmatmul.f32.gmra.mxu0 %v442
    %v444 = vpop.f32.mrf.mxu0
    %v445 = vadd.f32 %v379, %v444
    %v446 = vand.u32 %v215, 4294901760
    %v447 = vsub.f32 %v215, %v446
    %448 = vmatmul.f32.gmra.mxu0 %v447
    %v449 = vpop.f32.mrf.mxu0
    %v450 = vadd.f32 %v383, %v449
    %v451 = vand.u32 %v218, 4294901760
    %v452 = vsub.f32 %v218, %v451
    %453 = vmatmul.f32.gmra.mxu0 %v452
    %v454 = vpop.f32.mrf.mxu0
    %v455 = vadd.f32 %v387, %v454
    %v456 = vand.u32 %v221, 4294901760
    %v457 = vsub.f32 %v221, %v456
    %458 = vmatmul.f32.gmra.mxu0 %v457
    %v459 = vpop.f32.mrf.mxu0
    %v460 = vadd.f32 %v391, %v459
    %461 = vdwg.mxu0
    %462 = vmatpush.msra.mxu0 0.0
    %463 = vmatpush.msra.mxu0 0.0
    %464 = vmatpush.msra.mxu0 0.0
    %465 = vmatpush.msra.mxu0 0.0
    %466 = vmatpush.msra.mxu0 0.0
    %467 = vmatpush.msra.mxu0 0.0
    %468 = vmatpush.msra.mxu0 0.0
    %469 = vmatpush.msra.mxu0 0.0
    %470 = vmatpush.msra.mxu0 0.0
    %471 = vmatpush.msra.mxu0 0.0
    %v472 = vand.u32 %v225, 4294901760
    %473 = vmatpush.msra.mxu0 %v472
    %v474 = vand.u32 %v197, 4294901760
    %475 = vmatpush.msra.mxu0 %v474
    %v476 = vand.u32 %v196, 4294901760
    %477 = vmatpush.msra.mxu0 %v476
    %v478 = vand.u32 %v195, 4294901760
    %479 = vmatpush.msra.mxu0 %v478
    %v480 = vand.u32 %v194, 4294901760
    %481 = vmatpush.msra.mxu0 %v480
    %v482 = vand.u32 %v193, 4294901760
    %483 = vmatpush.msra.mxu0 %v482
    %v484 = vand.u32 %v200, 4294901760
    %v485 = vsub.f32 %v200, %v484
    %v486 = vand.u32 %v485, 4294901760
    %487 = vmatmul.f32.gmra.mxu0 %v486
    %v488 = vpop.f32.mrf.mxu0
    %v489 = vadd.f32 %v425, %v488
    %v490 = vand.u32 %v203, 4294901760
    %v491 = vsub.f32 %v203, %v490
    %v492 = vand.u32 %v491, 4294901760
    %493 = vmatmul.f32.gmra.mxu0 %v492
    %v494 = vpop.f32.mrf.mxu0
    %v495 = vadd.f32 %v430, %v494
    %v496 = vand.u32 %v206, 4294901760
    %v497 = vsub.f32 %v206, %v496
    %v498 = vand.u32 %v497, 4294901760
    %499 = vmatmul.f32.gmra.mxu0 %v498
    %v500 = vpop.f32.mrf.mxu0
    %v501 = vadd.f32 %v435, %v500
    %v502 = vand.u32 %v209, 4294901760
    %v503 = vsub.f32 %v209, %v502
    %v504 = vand.u32 %v503, 4294901760
    %505 = vmatmul.f32.gmra.mxu0 %v504
    %v506 = vpop.f32.mrf.mxu0
    %v507 = vadd.f32 %v440, %v506
    %v508 = vand.u32 %v212, 4294901760
    %v509 = vsub.f32 %v212, %v508
    %v510 = vand.u32 %v509, 4294901760
    %511 = vmatmul.f32.gmra.mxu0 %v510
    %v512 = vpop.f32.mrf.mxu0
    %v513 = vadd.f32 %v445, %v512
    %v514 = vand.u32 %v215, 4294901760
    %v515 = vsub.f32 %v215, %v514
    %v516 = vand.u32 %v515, 4294901760
    %517 = vmatmul.f32.gmra.mxu0 %v516
    %v518 = vpop.f32.mrf.mxu0
    %v519 = vadd.f32 %v450, %v518
    %v520 = vand.u32 %v218, 4294901760
    %v521 = vsub.f32 %v218, %v520
    %v522 = vand.u32 %v521, 4294901760
    %523 = vmatmul.f32.gmra.mxu0 %v522
    %v524 = vpop.f32.mrf.mxu0
    %v525 = vadd.f32 %v455, %v524
    %v526 = vand.u32 %v221, 4294901760
    %v527 = vsub.f32 %v221, %v526
    %v528 = vand.u32 %v527, 4294901760
    %529 = vmatmul.f32.gmra.mxu0 %v528
    %v530 = vpop.f32.mrf.mxu0
    %v531 = vadd.f32 %v460, %v530
    %532 = vdwg.mxu0
    %533 = vmatpush.msra.mxu0 0.0
    %534 = vmatpush.msra.mxu0 0.0
    %535 = vmatpush.msra.mxu0 0.0
    %536 = vmatpush.msra.mxu0 0.0
    %537 = vmatpush.msra.mxu0 0.0
    %538 = vmatpush.msra.mxu0 0.0
    %539 = vmatpush.msra.mxu0 0.0
    %540 = vmatpush.msra.mxu0 0.0
    %541 = vmatpush.msra.mxu0 0.0
    %542 = vmatpush.msra.mxu0 0.0
    %v543 = vand.u32 %v225, 4294901760
    %v544 = vsub.f32 %v225, %v543
    %v545 = vand.u32 %v544, 4294901760
    %546 = vmatpush.msra.mxu0 %v545
    %v547 = vand.u32 %v197, 4294901760
    %v548 = vsub.f32 %v197, %v547
    %v549 = vand.u32 %v548, 4294901760
    %550 = vmatpush.msra.mxu0 %v549
    %v551 = vand.u32 %v196, 4294901760
    %v552 = vsub.f32 %v196, %v551
    %v553 = vand.u32 %v552, 4294901760
    %554 = vmatpush.msra.mxu0 %v553
    %v555 = vand.u32 %v195, 4294901760
    %v556 = vsub.f32 %v195, %v555
    %v557 = vand.u32 %v556, 4294901760
    %558 = vmatpush.msra.mxu0 %v557
    %v559 = vand.u32 %v194, 4294901760
    %v560 = vsub.f32 %v194, %v559
    %v561 = vand.u32 %v560, 4294901760
    %562 = vmatpush.msra.mxu0 %v561
    %v563 = vand.u32 %v193, 4294901760
    %v564 = vsub.f32 %v193, %v563
    %v565 = vand.u32 %v564, 4294901760
    %566 = vmatpush.msra.mxu0 %v565
    %v567 = vand.u32 %v200, 4294901760
    %568 = vmatmul.f32.gmra.mxu0 %v567
    %v569 = vpop.f32.mrf.mxu0
    %v570 = vadd.f32 %v489, %v569
    %v571 = vand.u32 %v203, 4294901760
    %572 = vmatmul.f32.gmra.mxu0 %v571
    %v573 = vpop.f32.mrf.mxu0
    %v574 = vadd.f32 %v495, %v573
    %v575 = vand.u32 %v206, 4294901760
    %576 = vmatmul.f32.gmra.mxu0 %v575
    %v577 = vpop.f32.mrf.mxu0
    %v578 = vadd.f32 %v501, %v577
    %v579 = vand.u32 %v209, 4294901760
    %580 = vmatmul.f32.gmra.mxu0 %v579
    %v581 = vpop.f32.mrf.mxu0
    %v582 = vadd.f32 %v507, %v581
    %v583 = vand.u32 %v212, 4294901760
    %584 = vmatmul.f32.gmra.mxu0 %v583
    %v585 = vpop.f32.mrf.mxu0
    %v586 = vadd.f32 %v513, %v585
    %v587 = vand.u32 %v215, 4294901760
    %588 = vmatmul.f32.gmra.mxu0 %v587
    %v589 = vpop.f32.mrf.mxu0
    %v590 = vadd.f32 %v519, %v589
    %v591 = vand.u32 %v218, 4294901760
    %592 = vmatmul.f32.gmra.mxu0 %v591
    %v593 = vpop.f32.mrf.mxu0
    %v594 = vadd.f32 %v525, %v593
    %v595 = vand.u32 %v221, 4294901760
    %596 = vmatmul.f32.gmra.mxu0 %v595
    %v597 = vpop.f32.mrf.mxu0
    %v598 = vadd.f32 %v531, %v597
    %599 = vdwg.mxu0
    %600 = vmatpush.msra.mxu0 0.0
    %601 = vmatpush.msra.mxu0 0.0
    %602 = vmatpush.msra.mxu0 0.0
    %603 = vmatpush.msra.mxu0 0.0
    %604 = vmatpush.msra.mxu0 0.0
    %605 = vmatpush.msra.mxu0 0.0
    %606 = vmatpush.msra.mxu0 0.0
    %607 = vmatpush.msra.mxu0 0.0
    %608 = vmatpush.msra.mxu0 0.0
    %609 = vmatpush.msra.mxu0 0.0
    %v610 = vand.u32 %v225, 4294901760
    %611 = vmatpush.msra.mxu0 %v610
    %v612 = vand.u32 %v197, 4294901760
    %613 = vmatpush.msra.mxu0 %v612
    %v614 = vand.u32 %v196, 4294901760
    %615 = vmatpush.msra.mxu0 %v614
    %v616 = vand.u32 %v195, 4294901760
    %617 = vmatpush.msra.mxu0 %v616
    %v618 = vand.u32 %v194, 4294901760
    %619 = vmatpush.msra.mxu0 %v618
    %v620 = vand.u32 %v193, 4294901760
    %621 = vmatpush.msra.mxu0 %v620
    %v622 = vand.u32 %v200, 4294901760
    %623 = vmatmul.f32.gmra.mxu0 %v622
    %v624 = vpop.f32.mrf.mxu0
    %v625 = vadd.f32 %v570, %v624
    %v626 = vand.u32 %v203, 4294901760
    %627 = vmatmul.f32.gmra.mxu0 %v626
    %v628 = vpop.f32.mrf.mxu0
    %v629 = vadd.f32 %v574, %v628
    %v630 = vand.u32 %v206, 4294901760
    %631 = vmatmul.f32.gmra.mxu0 %v630
    %v632 = vpop.f32.mrf.mxu0
    %v633 = vadd.f32 %v578, %v632
    %v634 = vand.u32 %v209, 4294901760
    %635 = vmatmul.f32.gmra.mxu0 %v634
    %v636 = vpop.f32.mrf.mxu0
    %v637 = vadd.f32 %v582, %v636
    %v638 = vand.u32 %v212, 4294901760
    %639 = vmatmul.f32.gmra.mxu0 %v638
    %v640 = vpop.f32.mrf.mxu0
    %v641 = vadd.f32 %v586, %v640
    %v642 = vand.u32 %v215, 4294901760
    %643 = vmatmul.f32.gmra.mxu0 %v642
    %v644 = vpop.f32.mrf.mxu0
    %v645 = vadd.f32 %v590, %v644
    %v646 = vand.u32 %v218, 4294901760
    %647 = vmatmul.f32.gmra.mxu0 %v646
    %v648 = vpop.f32.mrf.mxu0
    %v649 = vadd.f32 %v594, %v648
    %v650 = vand.u32 %v221, 4294901760
    %651 = vmatmul.f32.gmra.mxu0 %v650
    %v652 = vpop.f32.mrf.mxu0
    %v653 = vadd.f32 %v598, %v652
    %654 = vdwg.mxu0
    %655 = vxpose.xlu0.b32.start [1/16] %v625, 128
    %656 = vxpose.xlu0.b32.cont [2/16] %v629, 128
    %657 = vxpose.xlu0.b32.cont [3/16] %v633, 128
    %658 = vxpose.xlu0.b32.cont [4/16] %v637, 128
    %659 = vxpose.xlu0.b32.cont [5/16] %v641, 128
    %660 = vxpose.xlu0.b32.cont [6/16] %v645, 128
    %661 = vxpose.xlu0.b32.cont [7/16] %v649, 128
    %662 = vxpose.xlu0.b32.cont [8/16] %v653, 128
    %663 = vxpose.xlu0.b32.cont [9/16] 0.0, 128
    %664 = vxpose.xlu0.b32.cont [10/16] 0.0, 128
    %665 = vxpose.xlu0.b32.cont [11/16] 0.0, 128
    %666 = vxpose.xlu0.b32.cont [12/16] 0.0, 128
    %667 = vxpose.xlu0.b32.cont [13/16] 0.0, 128
    %668 = vxpose.xlu0.b32.cont [14/16] 0.0, 128
    %669 = vxpose.xlu0.b32.cont [15/16] 0.0, 128
    %670 = vxpose.xlu0.b32.end [16/16] 0.0, 128
    %v671 = vpop.trf.xlu0
    %v672 = vpop.trf.xlu0
    %v673 = vpop.trf.xlu0
    %v674 = vpop.trf.xlu0
    %v675 = vpop.trf.xlu0
    %v676 = vpop.trf.xlu0
    %v677 = vpop.trf.xlu0
    %v678 = vpop.trf.xlu0
    %v679 = vpop.trf.xlu0
    %v680 = vpop.trf.xlu0
    %v681 = vpop.trf.xlu0
    %v682 = vpop.trf.xlu0
    %v683 = vpop.trf.xlu0
    %v684 = vpop.trf.xlu0
    %v685 = vpop.trf.xlu0
    %v686 = vpop.trf.xlu0
    %s687 = sld [smem:[#allocation5]]
    %689 = vset.pattern.permute.xlu0 0
    %690 = vperm.xlu0 %689, %v625
    %v691 = vpop.permute.xlu0 %690
    %694 = vset.pattern.permute.xlu0 0
    %695 = vperm.xlu0 %694, %v629
    %v696 = vpop.permute.xlu0 %695
    %699 = vset.pattern.permute.xlu0 0
    %700 = vperm.xlu0 %699, %v633
    %v701 = vpop.permute.xlu0 %700
    %704 = vset.pattern.permute.xlu0 0
    %705 = vperm.xlu0 %704, %v637
    %v706 = vpop.permute.xlu0 %705
    %709 = vset.pattern.permute.xlu0 0
    %710 = vperm.xlu0 %709, %v641
    %v711 = vpop.permute.xlu0 %710
    %714 = vset.pattern.permute.xlu0 0
    %715 = vperm.xlu0 %714, %v645
    %v716 = vpop.permute.xlu0 %715
    %719 = vset.pattern.permute.xlu0 0
    %720 = vperm.xlu0 %719, %v649
    %v721 = vpop.permute.xlu0 %720
    %724 = vset.pattern.permute.xlu0 0
    %725 = vperm.xlu0 %724, %v653
    %v726 = vpop.permute.xlu0 %725
    %v728 = vperm.slane %v671, 0
    %v729 = vsub.f32 %v691, %v728
    %v730 = vsub.f32 %v696, %v728
    %v731 = vsub.f32 %v701, %v728
    %v732 = vsub.f32 %v706, %v728
    %v733 = vsub.f32 %v711, %v728
    %v734 = vsub.f32 %v716, %v728
    %v735 = vsub.f32 %v721, %v728
    %v736 = vsub.f32 %v726, %v728
    %v737 = vand.u32 2147483647, %v729
    %v738 = vand.u32 2147483647, %v730
    %v739 = vand.u32 2147483647, %v731
    %v740 = vand.u32 2147483647, %v732
    %v741 = vand.u32 2147483647, %v733
    %v742 = vand.u32 2147483647, %v734
    %v743 = vand.u32 2147483647, %v735
    %v744 = vand.u32 2147483647, %v736
    %v745 = vstv %s687
    %v746 = vmul.f32 %v745, %v737
    %v747 = vmul.f32 %v745, %v738
    %v748 = vmul.f32 %v745, %v739
    %v749 = vmul.f32 %v745, %v740
    %v750 = vmul.f32 %v745, %v741
    %v751 = vmul.f32 %v745, %v742
    %v752 = vmul.f32 %v745, %v743
    %v753 = vmul.f32 %v745, %v744
    %v754 = vadd.f32 %v746, 0.0
    %v755 = vadd.f32 %v747, 0.0
    %v756 = vadd.f32 %v748, 0.0
    %v757 = vadd.f32 %v749, 0.0
    %v758 = vadd.f32 %v750, 0.0
    %v759 = vadd.f32 %v751, 0.0
    %v760 = vadd.f32 %v752, 0.0
    %v761 = vadd.f32 %v753, 0.0
    %s762 = sld [smem:[#allocation5 + $0x1]]
    %763 = vset.pattern.permute.xlu0 1
    %764 = vperm.xlu0 %763, %v625
    %v765 = vpop.permute.xlu0 %764
    %767 = vset.pattern.permute.xlu0 1
    %768 = vperm.xlu0 %767, %v629
    %v769 = vpop.permute.xlu0 %768
    %771 = vset.pattern.permute.xlu0 1
    %772 = vperm.xlu0 %771, %v633
    %v773 = vpop.permute.xlu0 %772
    %775 = vset.pattern.permute.xlu0 1
    %776 = vperm.xlu0 %775, %v637
    %v777 = vpop.permute.xlu0 %776
    %779 = vset.pattern.permute.xlu0 1
    %780 = vperm.xlu0 %779, %v641
    %v781 = vpop.permute.xlu0 %780
    %783 = vset.pattern.permute.xlu0 1
    %784 = vperm.xlu0 %783, %v645
    %v785 = vpop.permute.xlu0 %784
    %787 = vset.pattern.permute.xlu0 1
    %788 = vperm.xlu0 %787, %v649
    %v789 = vpop.permute.xlu0 %788
    %791 = vset.pattern.permute.xlu0 1
    %792 = vperm.xlu0 %791, %v653
    %v793 = vpop.permute.xlu0 %792
    %v795 = vperm.slane %v671, 1
    %v796 = vsub.f32 %v765, %v795
    %v797 = vsub.f32 %v769, %v795
    %v798 = vsub.f32 %v773, %v795
    %v799 = vsub.f32 %v777, %v795
    %v800 = vsub.f32 %v781, %v795
    %v801 = vsub.f32 %v785, %v795
    %v802 = vsub.f32 %v789, %v795
    %v803 = vsub.f32 %v793, %v795
    %v804 = vand.u32 2147483647, %v796
    %v805 = vand.u32 2147483647, %v797
    %v806 = vand.u32 2147483647, %v798
    %v807 = vand.u32 2147483647, %v799
    %v808 = vand.u32 2147483647, %v800
    %v809 = vand.u32 2147483647, %v801
    %v810 = vand.u32 2147483647, %v802
    %v811 = vand.u32 2147483647, %v803
    %v812 = vstv %s762
    %v813 = vmul.f32 %v812, %v804
    %v814 = vmul.f32 %v812, %v805
    %v815 = vmul.f32 %v812, %v806
    %v816 = vmul.f32 %v812, %v807
    %v817 = vmul.f32 %v812, %v808
    %v818 = vmul.f32 %v812, %v809
    %v819 = vmul.f32 %v812, %v810
    %v820 = vmul.f32 %v812, %v811
    %v821 = vadd.f32 %v754, %v813
    %v822 = vadd.f32 %v755, %v814
    %v823 = vadd.f32 %v756, %v815
    %v824 = vadd.f32 %v757, %v816
    %v825 = vadd.f32 %v758, %v817
    %v826 = vadd.f32 %v759, %v818
    %v827 = vadd.f32 %v760, %v819
    %v828 = vadd.f32 %v761, %v820
    %s829 = sld [smem:[#allocation5 + $0x2]]
    %830 = vset.pattern.permute.xlu0 2
    %831 = vperm.xlu0 %830, %v625
    %v832 = vpop.permute.xlu0 %831
    %834 = vset.pattern.permute.xlu0 2
    %835 = vperm.xlu0 %834, %v629
    %v836 = vpop.permute.xlu0 %835
    %838 = vset.pattern.permute.xlu0 2
    %839 = vperm.xlu0 %838, %v633
    %v840 = vpop.permute.xlu0 %839
    %842 = vset.pattern.permute.xlu0 2
    %843 = vperm.xlu0 %842, %v637
    %v844 = vpop.permute.xlu0 %843
    %846 = vset.pattern.permute.xlu0 2
    %847 = vperm.xlu0 %846, %v641
    %v848 = vpop.permute.xlu0 %847
    %850 = vset.pattern.permute.xlu0 2
    %851 = vperm.xlu0 %850, %v645
    %v852 = vpop.permute.xlu0 %851
    %854 = vset.pattern.permute.xlu0 2
    %855 = vperm.xlu0 %854, %v649
    %v856 = vpop.permute.xlu0 %855
    %858 = vset.pattern.permute.xlu0 2
    %859 = vperm.xlu0 %858, %v653
    %v860 = vpop.permute.xlu0 %859
    %v862 = vperm.slane %v671, 2
    %v863 = vsub.f32 %v832, %v862
    %v864 = vsub.f32 %v836, %v862
    %v865 = vsub.f32 %v840, %v862
    %v866 = vsub.f32 %v844, %v862
    %v867 = vsub.f32 %v848, %v862
    %v868 = vsub.f32 %v852, %v862
    %v869 = vsub.f32 %v856, %v862
    %v870 = vsub.f32 %v860, %v862
    %v871 = vand.u32 2147483647, %v863
    %v872 = vand.u32 2147483647, %v864
    %v873 = vand.u32 2147483647, %v865
    %v874 = vand.u32 2147483647, %v866
    %v875 = vand.u32 2147483647, %v867
    %v876 = vand.u32 2147483647, %v868
    %v877 = vand.u32 2147483647, %v869
    %v878 = vand.u32 2147483647, %v870
    %v879 = vstv %s829
    %v880 = vmul.f32 %v879, %v871
    %v881 = vmul.f32 %v879, %v872
    %v882 = vmul.f32 %v879, %v873
    %v883 = vmul.f32 %v879, %v874
    %v884 = vmul.f32 %v879, %v875
    %v885 = vmul.f32 %v879, %v876
    %v886 = vmul.f32 %v879, %v877
    %v887 = vmul.f32 %v879, %v878
    %v888 = vadd.f32 %v821, %v880
    %v889 = vadd.f32 %v822, %v881
    %v890 = vadd.f32 %v823, %v882
    %v891 = vadd.f32 %v824, %v883
    %v892 = vadd.f32 %v825, %v884
    %v893 = vadd.f32 %v826, %v885
    %v894 = vadd.f32 %v827, %v886
    %v895 = vadd.f32 %v828, %v887
    %s896 = sld [smem:[#allocation5 + $0x3]]
    %897 = vset.pattern.permute.xlu0 3
    %898 = vperm.xlu0 %897, %v625
    %v899 = vpop.permute.xlu0 %898
    %901 = vset.pattern.permute.xlu0 3
    %902 = vperm.xlu0 %901, %v629
    %v903 = vpop.permute.xlu0 %902
    %905 = vset.pattern.permute.xlu0 3
    %906 = vperm.xlu0 %905, %v633
    %v907 = vpop.permute.xlu0 %906
    %909 = vset.pattern.permute.xlu0 3
    %910 = vperm.xlu0 %909, %v637
    %v911 = vpop.permute.xlu0 %910
    %913 = vset.pattern.permute.xlu0 3
    %914 = vperm.xlu0 %913, %v641
    %v915 = vpop.permute.xlu0 %914
    %917 = vset.pattern.permute.xlu0 3
    %918 = vperm.xlu0 %917, %v645
    %v919 = vpop.permute.xlu0 %918
    %921 = vset.pattern.permute.xlu0 3
    %922 = vperm.xlu0 %921, %v649
    %v923 = vpop.permute.xlu0 %922
    %925 = vset.pattern.permute.xlu0 3
    %926 = vperm.xlu0 %925, %v653
    %v927 = vpop.permute.xlu0 %926
    %v929 = vperm.slane %v671, 3
    %v930 = vsub.f32 %v899, %v929
    %v931 = vsub.f32 %v903, %v929
    %v932 = vsub.f32 %v907, %v929
    %v933 = vsub.f32 %v911, %v929
    %v934 = vsub.f32 %v915, %v929
    %v935 = vsub.f32 %v919, %v929
    %v936 = vsub.f32 %v923, %v929
    %v937 = vsub.f32 %v927, %v929
    %v938 = vand.u32 2147483647, %v930
    %v939 = vand.u32 2147483647, %v931
    %v940 = vand.u32 2147483647, %v932
    %v941 = vand.u32 2147483647, %v933
    %v942 = vand.u32 2147483647, %v934
    %v943 = vand.u32 2147483647, %v935
    %v944 = vand.u32 2147483647, %v936
    %v945 = vand.u32 2147483647, %v937
    %v946 = vstv %s896
    %v947 = vmul.f32 %v946, %v938
    %v948 = vmul.f32 %v946, %v939
    %v949 = vmul.f32 %v946, %v940
    %v950 = vmul.f32 %v946, %v941
    %v951 = vmul.f32 %v946, %v942
    %v952 = vmul.f32 %v946, %v943
    %v953 = vmul.f32 %v946, %v944
    %v954 = vmul.f32 %v946, %v945
    %v955 = vadd.f32 %v888, %v947
    %v956 = vadd.f32 %v889, %v948
    %v957 = vadd.f32 %v890, %v949
    %v958 = vadd.f32 %v891, %v950
    %v959 = vadd.f32 %v892, %v951
    %v960 = vadd.f32 %v893, %v952
    %v961 = vadd.f32 %v894, %v953
    %v962 = vadd.f32 %v895, %v954
    %s963 = sld [smem:[#allocation5 + $0x4]]
    %964 = vset.pattern.permute.xlu0 4
    %965 = vperm.xlu0 %964, %v625
    %v966 = vpop.permute.xlu0 %965
    %968 = vset.pattern.permute.xlu0 4
    %969 = vperm.xlu0 %968, %v629
    %v970 = vpop.permute.xlu0 %969
    %972 = vset.pattern.permute.xlu0 4
    %973 = vperm.xlu0 %972, %v633
    %v974 = vpop.permute.xlu0 %973
    %976 = vset.pattern.permute.xlu0 4
    %977 = vperm.xlu0 %976, %v637
    %v978 = vpop.permute.xlu0 %977
    %980 = vset.pattern.permute.xlu0 4
    %981 = vperm.xlu0 %980, %v641
    %v982 = vpop.permute.xlu0 %981
    %984 = vset.pattern.permute.xlu0 4
    %985 = vperm.xlu0 %984, %v645
    %v986 = vpop.permute.xlu0 %985
    %988 = vset.pattern.permute.xlu0 4
    %989 = vperm.xlu0 %988, %v649
    %v990 = vpop.permute.xlu0 %989
    %992 = vset.pattern.permute.xlu0 4
    %993 = vperm.xlu0 %992, %v653
    %v994 = vpop.permute.xlu0 %993
    %v996 = vperm.slane %v671, 4
    %v997 = vsub.f32 %v966, %v996
    %v998 = vsub.f32 %v970, %v996
    %v999 = vsub.f32 %v974, %v996
    %v1000 = vsub.f32 %v978, %v996
    %v1001 = vsub.f32 %v982, %v996
    %v1002 = vsub.f32 %v986, %v996
    %v1003 = vsub.f32 %v990, %v996
    %v1004 = vsub.f32 %v994, %v996
    %v1005 = vand.u32 2147483647, %v997
    %v1006 = vand.u32 2147483647, %v998
    %v1007 = vand.u32 2147483647, %v999
    %v1008 = vand.u32 2147483647, %v1000
    %v1009 = vand.u32 2147483647, %v1001
    %v1010 = vand.u32 2147483647, %v1002
    %v1011 = vand.u32 2147483647, %v1003
    %v1012 = vand.u32 2147483647, %v1004
    %v1013 = vstv %s963
    %v1014 = vmul.f32 %v1013, %v1005
    %v1015 = vmul.f32 %v1013, %v1006
    %v1016 = vmul.f32 %v1013, %v1007
    %v1017 = vmul.f32 %v1013, %v1008
    %v1018 = vmul.f32 %v1013, %v1009
    %v1019 = vmul.f32 %v1013, %v1010
    %v1020 = vmul.f32 %v1013, %v1011
    %v1021 = vmul.f32 %v1013, %v1012
    %v1022 = vadd.f32 %v955, %v1014
    %v1023 = vadd.f32 %v956, %v1015
    %v1024 = vadd.f32 %v957, %v1016
    %v1025 = vadd.f32 %v958, %v1017
    %v1026 = vadd.f32 %v959, %v1018
    %v1027 = vadd.f32 %v960, %v1019
    %v1028 = vadd.f32 %v961, %v1020
    %v1029 = vadd.f32 %v962, %v1021
    %s1030 = sld [smem:[#allocation5 + $0x5]]
    %1031 = vset.pattern.permute.xlu0 5
    %1032 = vperm.xlu0 %1031, %v625
    %v1033 = vpop.permute.xlu0 %1032
    %1035 = vset.pattern.permute.xlu0 5
    %1036 = vperm.xlu0 %1035, %v629
    %v1037 = vpop.permute.xlu0 %1036
    %1039 = vset.pattern.permute.xlu0 5
    %1040 = vperm.xlu0 %1039, %v633
    %v1041 = vpop.permute.xlu0 %1040
    %1043 = vset.pattern.permute.xlu0 5
    %1044 = vperm.xlu0 %1043, %v637
    %v1045 = vpop.permute.xlu0 %1044
    %1047 = vset.pattern.permute.xlu0 5
    %1048 = vperm.xlu0 %1047, %v641
    %v1049 = vpop.permute.xlu0 %1048
    %1051 = vset.pattern.permute.xlu0 5
    %1052 = vperm.xlu0 %1051, %v645
    %v1053 = vpop.permute.xlu0 %1052
    %1055 = vset.pattern.permute.xlu0 5
    %1056 = vperm.xlu0 %1055, %v649
    %v1057 = vpop.permute.xlu0 %1056
    %1059 = vset.pattern.permute.xlu0 5
    %1060 = vperm.xlu0 %1059, %v653
    %v1061 = vpop.permute.xlu0 %1060
    %v1063 = vperm.slane %v671, 5
    %v1064 = vsub.f32 %v1033, %v1063
    %v1065 = vsub.f32 %v1037, %v1063
    %v1066 = vsub.f32 %v1041, %v1063
    %v1067 = vsub.f32 %v1045, %v1063
    %v1068 = vsub.f32 %v1049, %v1063
    %v1069 = vsub.f32 %v1053, %v1063
    %v1070 = vsub.f32 %v1057, %v1063
    %v1071 = vsub.f32 %v1061, %v1063
    %v1072 = vand.u32 2147483647, %v1064
    %v1073 = vand.u32 2147483647, %v1065
    %v1074 = vand.u32 2147483647, %v1066
    %v1075 = vand.u32 2147483647, %v1067
    %v1076 = vand.u32 2147483647, %v1068
    %v1077 = vand.u32 2147483647, %v1069
    %v1078 = vand.u32 2147483647, %v1070
    %v1079 = vand.u32 2147483647, %v1071
    %v1080 = vstv %s1030
    %v1081 = vmul.f32 %v1080, %v1072
    %v1082 = vmul.f32 %v1080, %v1073
    %v1083 = vmul.f32 %v1080, %v1074
    %v1084 = vmul.f32 %v1080, %v1075
    %v1085 = vmul.f32 %v1080, %v1076
    %v1086 = vmul.f32 %v1080, %v1077
    %v1087 = vmul.f32 %v1080, %v1078
    %v1088 = vmul.f32 %v1080, %v1079
    %v1089 = vadd.f32 %v1022, %v1081
    %v1090 = vadd.f32 %v1023, %v1082
    %v1091 = vadd.f32 %v1024, %v1083
    %v1092 = vadd.f32 %v1025, %v1084
    %v1093 = vadd.f32 %v1026, %v1085
    %v1094 = vadd.f32 %v1027, %v1086
    %v1095 = vadd.f32 %v1028, %v1087
    %v1096 = vadd.f32 %v1029, %v1088
    %s1097 = sld [smem:[#allocation5 + $0x6]]
    %1098 = vset.pattern.permute.xlu0 6
    %1099 = vperm.xlu0 %1098, %v625
    %v1100 = vpop.permute.xlu0 %1099
    %1102 = vset.pattern.permute.xlu0 6
    %1103 = vperm.xlu0 %1102, %v629
    %v1104 = vpop.permute.xlu0 %1103
    %1106 = vset.pattern.permute.xlu0 6
    %1107 = vperm.xlu0 %1106, %v633
    %v1108 = vpop.permute.xlu0 %1107
    %1110 = vset.pattern.permute.xlu0 6
    %1111 = vperm.xlu0 %1110, %v637
    %v1112 = vpop.permute.xlu0 %1111
    %1114 = vset.pattern.permute.xlu0 6
    %1115 = vperm.xlu0 %1114, %v641
    %v1116 = vpop.permute.xlu0 %1115
    %1118 = vset.pattern.permute.xlu0 6
    %1119 = vperm.xlu0 %1118, %v645
    %v1120 = vpop.permute.xlu0 %1119
    %1122 = vset.pattern.permute.xlu0 6
    %1123 = vperm.xlu0 %1122, %v649
    %v1124 = vpop.permute.xlu0 %1123
    %1126 = vset.pattern.permute.xlu0 6
    %1127 = vperm.xlu0 %1126, %v653
    %v1128 = vpop.permute.xlu0 %1127
    %v1130 = vperm.slane %v671, 6
    %v1131 = vsub.f32 %v1100, %v1130
    %v1132 = vsub.f32 %v1104, %v1130
    %v1133 = vsub.f32 %v1108, %v1130
    %v1134 = vsub.f32 %v1112, %v1130
    %v1135 = vsub.f32 %v1116, %v1130
    %v1136 = vsub.f32 %v1120, %v1130
    %v1137 = vsub.f32 %v1124, %v1130
    %v1138 = vsub.f32 %v1128, %v1130
    %v1139 = vand.u32 2147483647, %v1131
    %v1140 = vand.u32 2147483647, %v1132
    %v1141 = vand.u32 2147483647, %v1133
    %v1142 = vand.u32 2147483647, %v1134
    %v1143 = vand.u32 2147483647, %v1135
    %v1144 = vand.u32 2147483647, %v1136
    %v1145 = vand.u32 2147483647, %v1137
    %v1146 = vand.u32 2147483647, %v1138
    %v1147 = vstv %s1097
    %v1148 = vmul.f32 %v1147, %v1139
    %v1149 = vmul.f32 %v1147, %v1140
    %v1150 = vmul.f32 %v1147, %v1141
    %v1151 = vmul.f32 %v1147, %v1142
    %v1152 = vmul.f32 %v1147, %v1143
    %v1153 = vmul.f32 %v1147, %v1144
    %v1154 = vmul.f32 %v1147, %v1145
    %v1155 = vmul.f32 %v1147, %v1146
    %v1156 = vadd.f32 %v1089, %v1148
    %v1157 = vadd.f32 %v1090, %v1149
    %v1158 = vadd.f32 %v1091, %v1150
    %v1159 = vadd.f32 %v1092, %v1151
    %v1160 = vadd.f32 %v1093, %v1152
    %v1161 = vadd.f32 %v1094, %v1153
    %v1162 = vadd.f32 %v1095, %v1154
    %v1163 = vadd.f32 %v1096, %v1155
    %s1164 = sld [smem:[#allocation5 + $0x7]]
    %1165 = vset.pattern.permute.xlu0 7
    %1166 = vperm.xlu0 %1165, %v625
    %v1167 = vpop.permute.xlu0 %1166
    %1169 = vset.pattern.permute.xlu0 7
    %1170 = vperm.xlu0 %1169, %v629
    %v1171 = vpop.permute.xlu0 %1170
    %1173 = vset.pattern.permute.xlu0 7
    %1174 = vperm.xlu0 %1173, %v633
    %v1175 = vpop.permute.xlu0 %1174
    %1177 = vset.pattern.permute.xlu0 7
    %1178 = vperm.xlu0 %1177, %v637
    %v1179 = vpop.permute.xlu0 %1178
    %1181 = vset.pattern.permute.xlu0 7
    %1182 = vperm.xlu0 %1181, %v641
    %v1183 = vpop.permute.xlu0 %1182
    %1185 = vset.pattern.permute.xlu0 7
    %1186 = vperm.xlu0 %1185, %v645
    %v1187 = vpop.permute.xlu0 %1186
    %1189 = vset.pattern.permute.xlu0 7
    %1190 = vperm.xlu0 %1189, %v649
    %v1191 = vpop.permute.xlu0 %1190
    %1193 = vset.pattern.permute.xlu0 7
    %1194 = vperm.xlu0 %1193, %v653
    %v1195 = vpop.permute.xlu0 %1194
    %v1197 = vperm.slane %v671, 7
    %v1198 = vsub.f32 %v1167, %v1197
    %v1199 = vsub.f32 %v1171, %v1197
    %v1200 = vsub.f32 %v1175, %v1197
    %v1201 = vsub.f32 %v1179, %v1197
    %v1202 = vsub.f32 %v1183, %v1197
    %v1203 = vsub.f32 %v1187, %v1197
    %v1204 = vsub.f32 %v1191, %v1197
    %v1205 = vsub.f32 %v1195, %v1197
    %v1206 = vand.u32 2147483647, %v1198
    %v1207 = vand.u32 2147483647, %v1199
    %v1208 = vand.u32 2147483647, %v1200
    %v1209 = vand.u32 2147483647, %v1201
    %v1210 = vand.u32 2147483647, %v1202
    %v1211 = vand.u32 2147483647, %v1203
    %v1212 = vand.u32 2147483647, %v1204
    %v1213 = vand.u32 2147483647, %v1205
    %v1214 = vstv %s1164
    %v1215 = vmul.f32 %v1214, %v1206
    %v1216 = vmul.f32 %v1214, %v1207
    %v1217 = vmul.f32 %v1214, %v1208
    %v1218 = vmul.f32 %v1214, %v1209
    %v1219 = vmul.f32 %v1214, %v1210
    %v1220 = vmul.f32 %v1214, %v1211
    %v1221 = vmul.f32 %v1214, %v1212
    %v1222 = vmul.f32 %v1214, %v1213
    %v1223 = vadd.f32 %v1156, %v1215
    %v1224 = vadd.f32 %v1157, %v1216
    %v1225 = vadd.f32 %v1158, %v1217
    %v1226 = vadd.f32 %v1159, %v1218
    %v1227 = vadd.f32 %v1160, %v1219
    %v1228 = vadd.f32 %v1161, %v1220
    %v1229 = vadd.f32 %v1162, %v1221
    %v1230 = vadd.f32 %v1163, %v1222
    %v1231 = vmax.f32 %v1223, 0.0
    %v1232 = vmax.f32 %v1224, 0.0
    %v1233 = vmax.f32 %v1225, 0.0
    %v1234 = vmax.f32 %v1226, 0.0
    %v1235 = vmax.f32 %v1227, 0.0
    %v1236 = vmax.f32 %v1228, 0.0
    %v1237 = vmax.f32 %v1229, 0.0
    %v1238 = vmax.f32 %v1230, 0.0
    %v1239 = vld [vmem:[%s1] sm:$0xff]
    %v1240 = vld [vmem:[%s1 + $0x8] sm:$0xff]
    %v1241 = vld [vmem:[%s1 + $0x10] sm:$0xff]
    %v1242 = vld [vmem:[%s1 + $0x18] sm:$0xff]
    %v1243 = vld [vmem:[%s1 + $0x20] sm:$0xff]
    %v1244 = vld [vmem:[%s1 + $0x28] sm:$0xff]
    %v1245 = vld [vmem:[%s1 + $0x30] sm:$0xff]
    %v1246 = vld [vmem:[%s1 + $0x38] sm:$0xff]
    %vm1247 = vcmp.gt.f32.partialorder %v1239, 0.0
    %vm1248 = vcmp.gt.f32.partialorder %v1240, 0.0
    %vm1249 = vcmp.gt.f32.partialorder %v1241, 0.0
    %vm1250 = vcmp.gt.f32.partialorder %v1242, 0.0
    %vm1251 = vcmp.gt.f32.partialorder %v1243, 0.0
    %vm1252 = vcmp.gt.f32.partialorder %v1244, 0.0
    %vm1253 = vcmp.gt.f32.partialorder %v1245, 0.0
    %vm1254 = vcmp.gt.f32.partialorder %v1246, 0.0
    %v1255 = vsel %vm1247, %v1231, -1e+30
    %v1256 = vsel %vm1248, %v1232, -1e+30
    %v1257 = vsel %vm1249, %v1233, -1e+30
    %v1258 = vsel %vm1250, %v1234, -1e+30
    %v1259 = vsel %vm1251, %v1235, -1e+30
    %v1260 = vsel %vm1252, %v1236, -1e+30
    %v1261 = vsel %vm1253, %v1237, -1e+30
    %v1262 = vsel %vm1254, %v1238, -1e+30
    %vm1263 = vcmask 523264
    %v1264 = vsel %vm1263, %v1255, -inf
    %1265 = vmax.xlane.f32.xlu0 %v1264
    %v1266 = vpop.xlane.xlu0 %1265
    %v1267 = vsel %vm1263, %v1256, -inf
    %1268 = vmax.xlane.f32.xlu0 %v1267
    %v1269 = vpop.xlane.xlu0 %1268
    %v1270 = vsel %vm1263, %v1257, -inf
    %1271 = vmax.xlane.f32.xlu0 %v1270
    %v1272 = vpop.xlane.xlu0 %1271
    %v1273 = vsel %vm1263, %v1258, -inf
    %1274 = vmax.xlane.f32.xlu0 %v1273
    %v1275 = vpop.xlane.xlu0 %1274
    %v1276 = vsel %vm1263, %v1259, -inf
    %1277 = vmax.xlane.f32.xlu0 %v1276
    %v1278 = vpop.xlane.xlu0 %1277
    %v1279 = vsel %vm1263, %v1260, -inf
    %1280 = vmax.xlane.f32.xlu0 %v1279
    %v1281 = vpop.xlane.xlu0 %1280
    %v1282 = vsel %vm1263, %v1261, -inf
    %1283 = vmax.xlane.f32.xlu0 %v1282
    %v1284 = vpop.xlane.xlu0 %1283
    %v1285 = vsel %vm1263, %v1262, -inf
    %1286 = vmax.xlane.f32.xlu0 %v1285
    %v1287 = vpop.xlane.xlu0 %1286
    %v1288 = vsub.f32 %v1255, %v1266
    %v1289 = vsub.f32 %v1256, %v1269
    %v1290 = vsub.f32 %v1257, %v1272
    %v1291 = vsub.f32 %v1258, %v1275
    %v1292 = vsub.f32 %v1259, %v1278
    %v1293 = vsub.f32 %v1260, %v1281
    %v1294 = vsub.f32 %v1261, %v1284
    %v1295 = vsub.f32 %v1262, %v1287
    %v1296 = vmul.f32 %v1288, 1.442695
    %v1297 = vpow.pop %v1296
    %v1298 = vmul.f32 %v1289, 1.442695
    %v1299 = vpow.pop %v1298
    %v1300 = vmul.f32 %v1290, 1.442695
    %v1301 = vpow.pop %v1300
    %v1302 = vmul.f32 %v1291, 1.442695
    %v1303 = vpow.pop %v1302
    %v1304 = vmul.f32 %v1292, 1.442695
    %v1305 = vpow.pop %v1304
    %v1306 = vmul.f32 %v1293, 1.442695
    %v1307 = vpow.pop %v1306
    %v1308 = vmul.f32 %v1294, 1.442695
    %v1309 = vpow.pop %v1308
    %v1310 = vmul.f32 %v1295, 1.442695
    %v1311 = vpow.pop %v1310
    %v1312 = vsel %vm1263, %v1297, 0.0
    %1313 = vadd.xlane.f32.xlu0 %v1312
    %v1314 = vpop.xlane.xlu0 %1313
    %v1315 = vsel %vm1263, %v1299, 0.0
    %1316 = vadd.xlane.f32.xlu0 %v1315
    %v1317 = vpop.xlane.xlu0 %1316
    %v1318 = vsel %vm1263, %v1301, 0.0
    %1319 = vadd.xlane.f32.xlu0 %v1318
    %v1320 = vpop.xlane.xlu0 %1319
    %v1321 = vsel %vm1263, %v1303, 0.0
    %1322 = vadd.xlane.f32.xlu0 %v1321
    %v1323 = vpop.xlane.xlu0 %1322
    %v1324 = vsel %vm1263, %v1305, 0.0
    %1325 = vadd.xlane.f32.xlu0 %v1324
    %v1326 = vpop.xlane.xlu0 %1325
    %v1327 = vsel %vm1263, %v1307, 0.0
    %1328 = vadd.xlane.f32.xlu0 %v1327
    %v1329 = vpop.xlane.xlu0 %1328
    %v1330 = vsel %vm1263, %v1309, 0.0
    %1331 = vadd.xlane.f32.xlu0 %v1330
    %v1332 = vpop.xlane.xlu0 %1331
    %v1333 = vsel %vm1263, %v1311, 0.0
    %1334 = vadd.xlane.f32.xlu0 %v1333
    %v1335 = vpop.xlane.xlu0 %1334
    %v1336 = vrcp.pop %v1314
    %v1337 = vmul.f32 %v1314, %v1336
    %v1338 = vsub.f32 1.0, %v1337
    %v1339 = vmul.f32 %v1336, %v1338
    %v1340 = vadd.f32 %v1336, %v1339
    %vm1341 = vweird.f32 %v1314
    %vm1342 = vweird.f32 %v1336
    %vm1343 = vmor %vm1341, %vm1342
    %v1344 = vsel %vm1343, %v1336, %v1340
    %v1345 = vand.u32 2147483647, %v1314
    %vm1346 = vcmp.eq.f32.partialorder %v1345, 8.507059e+37
    %v1347 = vand.u32 %v1314, 2147483648
    %v1348 = vor.u32 1.1754944e-38, %v1347
    %v1349 = vsel %vm1346, %v1348, %v1344
    %v1350 = vmul.f32 %v1297, %v1349
    %v1351 = vrcp.pop %v1317
    %v1352 = vmul.f32 %v1317, %v1351
    %v1353 = vsub.f32 1.0, %v1352
    %v1354 = vmul.f32 %v1351, %v1353
    %v1355 = vadd.f32 %v1351, %v1354
    %vm1356 = vweird.f32 %v1317
    %vm1357 = vweird.f32 %v1351
    %vm1358 = vmor %vm1356, %vm1357
    %v1359 = vsel %vm1358, %v1351, %v1355
    %v1360 = vand.u32 2147483647, %v1317
    %vm1361 = vcmp.eq.f32.partialorder %v1360, 8.507059e+37
    %v1362 = vand.u32 %v1317, 2147483648
    %v1363 = vor.u32 1.1754944e-38, %v1362
    %v1364 = vsel %vm1361, %v1363, %v1359
    %v1365 = vmul.f32 %v1299, %v1364
    %v1366 = vrcp.pop %v1320
    %v1367 = vmul.f32 %v1320, %v1366
    %v1368 = vsub.f32 1.0, %v1367
    %v1369 = vmul.f32 %v1366, %v1368
    %v1370 = vadd.f32 %v1366, %v1369
    %vm1371 = vweird.f32 %v1320
    %vm1372 = vweird.f32 %v1366
    %vm1373 = vmor %vm1371, %vm1372
    %v1374 = vsel %vm1373, %v1366, %v1370
    %v1375 = vand.u32 2147483647, %v1320
    %vm1376 = vcmp.eq.f32.partialorder %v1375, 8.507059e+37
    %v1377 = vand.u32 %v1320, 2147483648
    %v1378 = vor.u32 1.1754944e-38, %v1377
    %v1379 = vsel %vm1376, %v1378, %v1374
    %v1380 = vmul.f32 %v1301, %v1379
    %v1381 = vrcp.pop %v1323
    %v1382 = vmul.f32 %v1323, %v1381
    %v1383 = vsub.f32 1.0, %v1382
    %v1384 = vmul.f32 %v1381, %v1383
    %v1385 = vadd.f32 %v1381, %v1384
    %vm1386 = vweird.f32 %v1323
    %vm1387 = vweird.f32 %v1381
    %vm1388 = vmor %vm1386, %vm1387
    %v1389 = vsel %vm1388, %v1381, %v1385
    %v1390 = vand.u32 2147483647, %v1323
    %vm1391 = vcmp.eq.f32.partialorder %v1390, 8.507059e+37
    %v1392 = vand.u32 %v1323, 2147483648
    %v1393 = vor.u32 1.1754944e-38, %v1392
    %v1394 = vsel %vm1391, %v1393, %v1389
    %v1395 = vmul.f32 %v1303, %v1394
    %v1396 = vrcp.pop %v1326
    %v1397 = vmul.f32 %v1326, %v1396
    %v1398 = vsub.f32 1.0, %v1397
    %v1399 = vmul.f32 %v1396, %v1398
    %v1400 = vadd.f32 %v1396, %v1399
    %vm1401 = vweird.f32 %v1326
    %vm1402 = vweird.f32 %v1396
    %vm1403 = vmor %vm1401, %vm1402
    %v1404 = vsel %vm1403, %v1396, %v1400
    %v1405 = vand.u32 2147483647, %v1326
    %vm1406 = vcmp.eq.f32.partialorder %v1405, 8.507059e+37
    %v1407 = vand.u32 %v1326, 2147483648
    %v1408 = vor.u32 1.1754944e-38, %v1407
    %v1409 = vsel %vm1406, %v1408, %v1404
    %v1410 = vmul.f32 %v1305, %v1409
    %v1411 = vrcp.pop %v1329
    %v1412 = vmul.f32 %v1329, %v1411
    %v1413 = vsub.f32 1.0, %v1412
    %v1414 = vmul.f32 %v1411, %v1413
    %v1415 = vadd.f32 %v1411, %v1414
    %vm1416 = vweird.f32 %v1329
    %vm1417 = vweird.f32 %v1411
    %vm1418 = vmor %vm1416, %vm1417
    %v1419 = vsel %vm1418, %v1411, %v1415
    %v1420 = vand.u32 2147483647, %v1329
    %vm1421 = vcmp.eq.f32.partialorder %v1420, 8.507059e+37
    %v1422 = vand.u32 %v1329, 2147483648
    %v1423 = vor.u32 1.1754944e-38, %v1422
    %v1424 = vsel %vm1421, %v1423, %v1419
    %v1425 = vmul.f32 %v1307, %v1424
    %v1426 = vrcp.pop %v1332
    %v1427 = vmul.f32 %v1332, %v1426
    %v1428 = vsub.f32 1.0, %v1427
    %v1429 = vmul.f32 %v1426, %v1428
    %v1430 = vadd.f32 %v1426, %v1429
    %vm1431 = vweird.f32 %v1332
    %vm1432 = vweird.f32 %v1426
    %vm1433 = vmor %vm1431, %vm1432
    %v1434 = vsel %vm1433, %v1426, %v1430
    %v1435 = vand.u32 2147483647, %v1332
    %vm1436 = vcmp.eq.f32.partialorder %v1435, 8.507059e+37
    %v1437 = vand.u32 %v1332, 2147483648
    %v1438 = vor.u32 1.1754944e-38, %v1437
    %v1439 = vsel %vm1436, %v1438, %v1434
    %v1440 = vmul.f32 %v1309, %v1439
    %v1441 = vrcp.pop %v1335
    %v1442 = vmul.f32 %v1335, %v1441
    %v1443 = vsub.f32 1.0, %v1442
    %v1444 = vmul.f32 %v1441, %v1443
    %v1445 = vadd.f32 %v1441, %v1444
    %vm1446 = vweird.f32 %v1335
    %vm1447 = vweird.f32 %v1441
    %vm1448 = vmor %vm1446, %vm1447
    %v1449 = vsel %vm1448, %v1441, %v1445
    %v1450 = vand.u32 2147483647, %v1335
    %vm1451 = vcmp.eq.f32.partialorder %v1450, 8.507059e+37
    %v1452 = vand.u32 %v1335, 2147483648
    %v1453 = vor.u32 1.1754944e-38, %v1452
    %v1454 = vsel %vm1451, %v1453, %v1449
    %v1455 = vmul.f32 %v1311, %v1454
    %1456 = vrot.lane.b32.xlu0 %v625, 120
    %v1457 = vpop.permute.xlu0 %1456
    %1458 = vrot.lane.b32.xlu0 %v629, 120
    %v1459 = vpop.permute.xlu0 %1458
    %1460 = vrot.lane.b32.xlu0 %v633, 120
    %v1461 = vpop.permute.xlu0 %1460
    %1462 = vrot.lane.b32.xlu0 %v637, 120
    %v1463 = vpop.permute.xlu0 %1462
    %1464 = vrot.lane.b32.xlu0 %v641, 120
    %v1465 = vpop.permute.xlu0 %1464
    %1466 = vrot.lane.b32.xlu0 %v645, 120
    %v1467 = vpop.permute.xlu0 %1466
    %1468 = vrot.lane.b32.xlu0 %v649, 120
    %v1469 = vpop.permute.xlu0 %1468
    %1470 = vrot.lane.b32.xlu0 %v653, 120
    %v1471 = vpop.permute.xlu0 %1470
    %v1481 = vsel %vm1263, %v1350, 0
    %v1484 = vsel %vm1263, %v1365, 0
    %v1487 = vsel %vm1263, %v1380, 0
    %v1490 = vsel %vm1263, %v1395, 0
    %v1493 = vsel %vm1263, %v1410, 0
    %v1496 = vsel %vm1263, %v1425, 0
    %v1499 = vsel %vm1263, %v1440, 0
    %v1502 = vsel %vm1263, %v1455, 0
    %1504 = vmatpush.msra.mxu0 0.0
    %1505 = vmatpush.msra.mxu0 0.0
    %1506 = vmatpush.msra.mxu0 0.0
    %1507 = vmatpush.msra.mxu0 0.0
    %1508 = vmatpush.msra.mxu0 0.0
    %1509 = vmatpush.msra.mxu0 0.0
    %1510 = vmatpush.msra.mxu0 0.0
    %1511 = vmatpush.msra.mxu0 0.0
    %v1512 = vand.u32 %v1471, 4294901760
    %1513 = vmatpush.msra.mxu0 %v1512
    %v1514 = vand.u32 %v1469, 4294901760
    %1515 = vmatpush.msra.mxu0 %v1514
    %v1516 = vand.u32 %v1467, 4294901760
    %1517 = vmatpush.msra.mxu0 %v1516
    %v1518 = vand.u32 %v1465, 4294901760
    %1519 = vmatpush.msra.mxu0 %v1518
    %v1520 = vand.u32 %v1463, 4294901760
    %1521 = vmatpush.msra.mxu0 %v1520
    %v1522 = vand.u32 %v1461, 4294901760
    %1523 = vmatpush.msra.mxu0 %v1522
    %v1524 = vand.u32 %v1459, 4294901760
    %1525 = vmatpush.msra.mxu0 %v1524
    %v1526 = vand.u32 %v1457, 4294901760
    %1527 = vmatpush.msra.mxu0 %v1526
    %v1528 = vand.u32 %v1481, 4294901760
    %v1529 = vsub.f32 %v1481, %v1528
    %v1530 = vand.u32 %v1529, 4294901760
    %v1531 = vsub.f32 %v1529, %v1530
    %v1532 = vand.u32 %v1531, 4294901760
    %1533 = vmatmul.f32.gmra.mxu0 %v1532
    %v1534 = vpop.f32.mrf.mxu0
    %v1535 = vadd.f32 0.0, %v1534
    %v1536 = vand.u32 %v1484, 4294901760
    %v1537 = vsub.f32 %v1484, %v1536
    %v1538 = vand.u32 %v1537, 4294901760
    %v1539 = vsub.f32 %v1537, %v1538
    %v1540 = vand.u32 %v1539, 4294901760
    %1541 = vmatmul.f32.gmra.mxu0 %v1540
    %v1542 = vpop.f32.mrf.mxu0
    %v1543 = vadd.f32 0.0, %v1542
    %v1544 = vand.u32 %v1487, 4294901760
    %v1545 = vsub.f32 %v1487, %v1544
    %v1546 = vand.u32 %v1545, 4294901760
    %v1547 = vsub.f32 %v1545, %v1546
    %v1548 = vand.u32 %v1547, 4294901760
    %1549 = vmatmul.f32.gmra.mxu0 %v1548
    %v1550 = vpop.f32.mrf.mxu0
    %v1551 = vadd.f32 0.0, %v1550
    %v1552 = vand.u32 %v1490, 4294901760
    %v1553 = vsub.f32 %v1490, %v1552
    %v1554 = vand.u32 %v1553, 4294901760
    %v1555 = vsub.f32 %v1553, %v1554
    %v1556 = vand.u32 %v1555, 4294901760
    %1557 = vmatmul.f32.gmra.mxu0 %v1556
    %v1558 = vpop.f32.mrf.mxu0
    %v1559 = vadd.f32 0.0, %v1558
    %v1560 = vand.u32 %v1493, 4294901760
    %v1561 = vsub.f32 %v1493, %v1560
    %v1562 = vand.u32 %v1561, 4294901760
    %v1563 = vsub.f32 %v1561, %v1562
    %v1564 = vand.u32 %v1563, 4294901760
    %1565 = vmatmul.f32.gmra.mxu0 %v1564
    %v1566 = vpop.f32.mrf.mxu0
    %v1567 = vadd.f32 0.0, %v1566
    %v1568 = vand.u32 %v1496, 4294901760
    %v1569 = vsub.f32 %v1496, %v1568
    %v1570 = vand.u32 %v1569, 4294901760
    %v1571 = vsub.f32 %v1569, %v1570
    %v1572 = vand.u32 %v1571, 4294901760
    %1573 = vmatmul.f32.gmra.mxu0 %v1572
    %v1574 = vpop.f32.mrf.mxu0
    %v1575 = vadd.f32 0.0, %v1574
    %v1576 = vand.u32 %v1499, 4294901760
    %v1577 = vsub.f32 %v1499, %v1576
    %v1578 = vand.u32 %v1577, 4294901760
    %v1579 = vsub.f32 %v1577, %v1578
    %v1580 = vand.u32 %v1579, 4294901760
    %1581 = vmatmul.f32.gmra.mxu0 %v1580
    %v1582 = vpop.f32.mrf.mxu0
    %v1583 = vadd.f32 0.0, %v1582
    %v1584 = vand.u32 %v1502, 4294901760
    %v1585 = vsub.f32 %v1502, %v1584
    %v1586 = vand.u32 %v1585, 4294901760
    %v1587 = vsub.f32 %v1585, %v1586
    %v1588 = vand.u32 %v1587, 4294901760
    %1589 = vmatmul.f32.gmra.mxu0 %v1588
    %v1590 = vpop.f32.mrf.mxu0
    %v1591 = vadd.f32 0.0, %v1590
    %1592 = vdwg.mxu0
    %1593 = vmatpush.msra.mxu0 0.0
    %1594 = vmatpush.msra.mxu0 0.0
    %1595 = vmatpush.msra.mxu0 0.0
    %1596 = vmatpush.msra.mxu0 0.0
    %1597 = vmatpush.msra.mxu0 0.0
    %1598 = vmatpush.msra.mxu0 0.0
    %1599 = vmatpush.msra.mxu0 0.0
    %1600 = vmatpush.msra.mxu0 0.0
    %v1601 = vand.u32 %v1471, 4294901760
    %v1602 = vsub.f32 %v1471, %v1601
    %v1603 = vand.u32 %v1602, 4294901760
    %v1604 = vsub.f32 %v1602, %v1603
    %v1605 = vand.u32 %v1604, 4294901760
    %1606 = vmatpush.msra.mxu0 %v1605
    %v1607 = vand.u32 %v1469, 4294901760
    %v1608 = vsub.f32 %v1469, %v1607
    %v1609 = vand.u32 %v1608, 4294901760
    %v1610 = vsub.f32 %v1608, %v1609
    %v1611 = vand.u32 %v1610, 4294901760
    %1612 = vmatpush.msra.mxu0 %v1611
    %v1613 = vand.u32 %v1467, 4294901760
    %v1614 = vsub.f32 %v1467, %v1613
    %v1615 = vand.u32 %v1614, 4294901760
    %v1616 = vsub.f32 %v1614, %v1615
    %v1617 = vand.u32 %v1616, 4294901760
    %1618 = vmatpush.msra.mxu0 %v1617
    %v1619 = vand.u32 %v1465, 4294901760
    %v1620 = vsub.f32 %v1465, %v1619
    %v1621 = vand.u32 %v1620, 4294901760
    %v1622 = vsub.f32 %v1620, %v1621
    %v1623 = vand.u32 %v1622, 4294901760
    %1624 = vmatpush.msra.mxu0 %v1623
    %v1625 = vand.u32 %v1463, 4294901760
    %v1626 = vsub.f32 %v1463, %v1625
    %v1627 = vand.u32 %v1626, 4294901760
    %v1628 = vsub.f32 %v1626, %v1627
    %v1629 = vand.u32 %v1628, 4294901760
    %1630 = vmatpush.msra.mxu0 %v1629
    %v1631 = vand.u32 %v1461, 4294901760
    %v1632 = vsub.f32 %v1461, %v1631
    %v1633 = vand.u32 %v1632, 4294901760
    %v1634 = vsub.f32 %v1632, %v1633
    %v1635 = vand.u32 %v1634, 4294901760
    %1636 = vmatpush.msra.mxu0 %v1635
    %v1637 = vand.u32 %v1459, 4294901760
    %v1638 = vsub.f32 %v1459, %v1637
    %v1639 = vand.u32 %v1638, 4294901760
    %v1640 = vsub.f32 %v1638, %v1639
    %v1641 = vand.u32 %v1640, 4294901760
    %1642 = vmatpush.msra.mxu0 %v1641
    %v1643 = vand.u32 %v1457, 4294901760
    %v1644 = vsub.f32 %v1457, %v1643
    %v1645 = vand.u32 %v1644, 4294901760
    %v1646 = vsub.f32 %v1644, %v1645
    %v1647 = vand.u32 %v1646, 4294901760
    %1648 = vmatpush.msra.mxu0 %v1647
    %v1649 = vand.u32 %v1481, 4294901760
    %1650 = vmatmul.f32.gmra.mxu0 %v1649
    %v1651 = vpop.f32.mrf.mxu0
    %v1652 = vadd.f32 %v1535, %v1651
    %v1653 = vand.u32 %v1484, 4294901760
    %1654 = vmatmul.f32.gmra.mxu0 %v1653
    %v1655 = vpop.f32.mrf.mxu0
    %v1656 = vadd.f32 %v1543, %v1655
    %v1657 = vand.u32 %v1487, 4294901760
    %1658 = vmatmul.f32.gmra.mxu0 %v1657
    %v1659 = vpop.f32.mrf.mxu0
    %v1660 = vadd.f32 %v1551, %v1659
    %v1661 = vand.u32 %v1490, 4294901760
    %1662 = vmatmul.f32.gmra.mxu0 %v1661
    %v1663 = vpop.f32.mrf.mxu0
    %v1664 = vadd.f32 %v1559, %v1663
    %v1665 = vand.u32 %v1493, 4294901760
    %1666 = vmatmul.f32.gmra.mxu0 %v1665
    %v1667 = vpop.f32.mrf.mxu0
    %v1668 = vadd.f32 %v1567, %v1667
    %v1669 = vand.u32 %v1496, 4294901760
    %1670 = vmatmul.f32.gmra.mxu0 %v1669
    %v1671 = vpop.f32.mrf.mxu0
    %v1672 = vadd.f32 %v1575, %v1671
    %v1673 = vand.u32 %v1499, 4294901760
    %1674 = vmatmul.f32.gmra.mxu0 %v1673
    %v1675 = vpop.f32.mrf.mxu0
    %v1676 = vadd.f32 %v1583, %v1675
    %v1677 = vand.u32 %v1502, 4294901760
    %1678 = vmatmul.f32.gmra.mxu0 %v1677
    %v1679 = vpop.f32.mrf.mxu0
    %v1680 = vadd.f32 %v1591, %v1679
    %1681 = vdwg.mxu0
    %1682 = vmatpush.msra.mxu0 0.0
    %1683 = vmatpush.msra.mxu0 0.0
    %1684 = vmatpush.msra.mxu0 0.0
    %1685 = vmatpush.msra.mxu0 0.0
    %1686 = vmatpush.msra.mxu0 0.0
    %1687 = vmatpush.msra.mxu0 0.0
    %1688 = vmatpush.msra.mxu0 0.0
    %1689 = vmatpush.msra.mxu0 0.0
    %v1690 = vand.u32 %v1471, 4294901760
    %v1691 = vsub.f32 %v1471, %v1690
    %1692 = vmatpush.msra.mxu0 %v1691
    %v1693 = vand.u32 %v1469, 4294901760
    %v1694 = vsub.f32 %v1469, %v1693
    %1695 = vmatpush.msra.mxu0 %v1694
    %v1696 = vand.u32 %v1467, 4294901760
    %v1697 = vsub.f32 %v1467, %v1696
    %1698 = vmatpush.msra.mxu0 %v1697
    %v1699 = vand.u32 %v1465, 4294901760
    %v1700 = vsub.f32 %v1465, %v1699
    %1701 = vmatpush.msra.mxu0 %v1700
    %v1702 = vand.u32 %v1463, 4294901760
    %v1703 = vsub.f32 %v1463, %v1702
    %1704 = vmatpush.msra.mxu0 %v1703
    %v1705 = vand.u32 %v1461, 4294901760
    %v1706 = vsub.f32 %v1461, %v1705
    %1707 = vmatpush.msra.mxu0 %v1706
    %v1708 = vand.u32 %v1459, 4294901760
    %v1709 = vsub.f32 %v1459, %v1708
    %1710 = vmatpush.msra.mxu0 %v1709
    %v1711 = vand.u32 %v1457, 4294901760
    %v1712 = vsub.f32 %v1457, %v1711
    %1713 = vmatpush.msra.mxu0 %v1712
    %v1714 = vand.u32 %v1481, 4294901760
    %v1715 = vsub.f32 %v1481, %v1714
    %1716 = vmatmul.f32.gmra.mxu0 %v1715
    %v1717 = vpop.f32.mrf.mxu0
    %v1718 = vadd.f32 %v1652, %v1717
    %v1719 = vand.u32 %v1484, 4294901760
    %v1720 = vsub.f32 %v1484, %v1719
    %1721 = vmatmul.f32.gmra.mxu0 %v1720
    %v1722 = vpop.f32.mrf.mxu0
    %v1723 = vadd.f32 %v1656, %v1722
    %v1724 = vand.u32 %v1487, 4294901760
    %v1725 = vsub.f32 %v1487, %v1724
    %1726 = vmatmul.f32.gmra.mxu0 %v1725
    %v1727 = vpop.f32.mrf.mxu0
    %v1728 = vadd.f32 %v1660, %v1727
    %v1729 = vand.u32 %v1490, 4294901760
    %v1730 = vsub.f32 %v1490, %v1729
    %1731 = vmatmul.f32.gmra.mxu0 %v1730
    %v1732 = vpop.f32.mrf.mxu0
    %v1733 = vadd.f32 %v1664, %v1732
    %v1734 = vand.u32 %v1493, 4294901760
    %v1735 = vsub.f32 %v1493, %v1734
    %1736 = vmatmul.f32.gmra.mxu0 %v1735
    %v1737 = vpop.f32.mrf.mxu0
    %v1738 = vadd.f32 %v1668, %v1737
    %v1739 = vand.u32 %v1496, 4294901760
    %v1740 = vsub.f32 %v1496, %v1739
    %1741 = vmatmul.f32.gmra.mxu0 %v1740
    %v1742 = vpop.f32.mrf.mxu0
    %v1743 = vadd.f32 %v1672, %v1742
    %v1744 = vand.u32 %v1499, 4294901760
    %v1745 = vsub.f32 %v1499, %v1744
    %1746 = vmatmul.f32.gmra.mxu0 %v1745
    %v1747 = vpop.f32.mrf.mxu0
    %v1748 = vadd.f32 %v1676, %v1747
    %v1749 = vand.u32 %v1502, 4294901760
    %v1750 = vsub.f32 %v1502, %v1749
    %1751 = vmatmul.f32.gmra.mxu0 %v1750
    %v1752 = vpop.f32.mrf.mxu0
    %v1753 = vadd.f32 %v1680, %v1752
    %1754 = vdwg.mxu0
    %1755 = vmatpush.msra.mxu0 0.0
    %1756 = vmatpush.msra.mxu0 0.0
    %1757 = vmatpush.msra.mxu0 0.0
    %1758 = vmatpush.msra.mxu0 0.0
    %1759 = vmatpush.msra.mxu0 0.0
    %1760 = vmatpush.msra.mxu0 0.0
    %1761 = vmatpush.msra.mxu0 0.0
    %1762 = vmatpush.msra.mxu0 0.0
    %v1763 = vand.u32 %v1471, 4294901760
    %1764 = vmatpush.msra.mxu0 %v1763
    %v1765 = vand.u32 %v1469, 4294901760
    %1766 = vmatpush.msra.mxu0 %v1765
    %v1767 = vand.u32 %v1467, 4294901760
    %1768 = vmatpush.msra.mxu0 %v1767
    %v1769 = vand.u32 %v1465, 4294901760
    %1770 = vmatpush.msra.mxu0 %v1769
    %v1771 = vand.u32 %v1463, 4294901760
    %1772 = vmatpush.msra.mxu0 %v1771
    %v1773 = vand.u32 %v1461, 4294901760
    %1774 = vmatpush.msra.mxu0 %v1773
    %v1775 = vand.u32 %v1459, 4294901760
    %1776 = vmatpush.msra.mxu0 %v1775
    %v1777 = vand.u32 %v1457, 4294901760
    %1778 = vmatpush.msra.mxu0 %v1777
    %v1779 = vand.u32 %v1481, 4294901760
    %v1780 = vsub.f32 %v1481, %v1779
    %v1781 = vand.u32 %v1780, 4294901760
    %1782 = vmatmul.f32.gmra.mxu0 %v1781
    %v1783 = vpop.f32.mrf.mxu0
    %v1784 = vadd.f32 %v1718, %v1783
    %v1785 = vand.u32 %v1484, 4294901760
    %v1786 = vsub.f32 %v1484, %v1785
    %v1787 = vand.u32 %v1786, 4294901760
    %1788 = vmatmul.f32.gmra.mxu0 %v1787
    %v1789 = vpop.f32.mrf.mxu0
    %v1790 = vadd.f32 %v1723, %v1789
    %v1791 = vand.u32 %v1487, 4294901760
    %v1792 = vsub.f32 %v1487, %v1791
    %v1793 = vand.u32 %v1792, 4294901760
    %1794 = vmatmul.f32.gmra.mxu0 %v1793
    %v1795 = vpop.f32.mrf.mxu0
    %v1796 = vadd.f32 %v1728, %v1795
    %v1797 = vand.u32 %v1490, 4294901760
    %v1798 = vsub.f32 %v1490, %v1797
    %v1799 = vand.u32 %v1798, 4294901760
    %1800 = vmatmul.f32.gmra.mxu0 %v1799
    %v1801 = vpop.f32.mrf.mxu0
    %v1802 = vadd.f32 %v1733, %v1801
    %v1803 = vand.u32 %v1493, 4294901760
    %v1804 = vsub.f32 %v1493, %v1803
    %v1805 = vand.u32 %v1804, 4294901760
    %1806 = vmatmul.f32.gmra.mxu0 %v1805
    %v1807 = vpop.f32.mrf.mxu0
    %v1808 = vadd.f32 %v1738, %v1807
    %v1809 = vand.u32 %v1496, 4294901760
    %v1810 = vsub.f32 %v1496, %v1809
    %v1811 = vand.u32 %v1810, 4294901760
    %1812 = vmatmul.f32.gmra.mxu0 %v1811
    %v1813 = vpop.f32.mrf.mxu0
    %v1814 = vadd.f32 %v1743, %v1813
    %v1815 = vand.u32 %v1499, 4294901760
    %v1816 = vsub.f32 %v1499, %v1815
    %v1817 = vand.u32 %v1816, 4294901760
    %1818 = vmatmul.f32.gmra.mxu0 %v1817
    %v1819 = vpop.f32.mrf.mxu0
    %v1820 = vadd.f32 %v1748, %v1819
    %v1821 = vand.u32 %v1502, 4294901760
    %v1822 = vsub.f32 %v1502, %v1821
    %v1823 = vand.u32 %v1822, 4294901760
    %1824 = vmatmul.f32.gmra.mxu0 %v1823
    %v1825 = vpop.f32.mrf.mxu0
    %v1826 = vadd.f32 %v1753, %v1825
    %1827 = vdwg.mxu0
    %1828 = vmatpush.msra.mxu0 0.0
    %1829 = vmatpush.msra.mxu0 0.0
    %1830 = vmatpush.msra.mxu0 0.0
    %1831 = vmatpush.msra.mxu0 0.0
    %1832 = vmatpush.msra.mxu0 0.0
    %1833 = vmatpush.msra.mxu0 0.0
    %1834 = vmatpush.msra.mxu0 0.0
    %1835 = vmatpush.msra.mxu0 0.0
    %v1836 = vand.u32 %v1471, 4294901760
    %v1837 = vsub.f32 %v1471, %v1836
    %v1838 = vand.u32 %v1837, 4294901760
    %1839 = vmatpush.msra.mxu0 %v1838
    %v1840 = vand.u32 %v1469, 4294901760
    %v1841 = vsub.f32 %v1469, %v1840
    %v1842 = vand.u32 %v1841, 4294901760
    %1843 = vmatpush.msra.mxu0 %v1842
    %v1844 = vand.u32 %v1467, 4294901760
    %v1845 = vsub.f32 %v1467, %v1844
    %v1846 = vand.u32 %v1845, 4294901760
    %1847 = vmatpush.msra.mxu0 %v1846
    %v1848 = vand.u32 %v1465, 4294901760
    %v1849 = vsub.f32 %v1465, %v1848
    %v1850 = vand.u32 %v1849, 4294901760
    %1851 = vmatpush.msra.mxu0 %v1850
    %v1852 = vand.u32 %v1463, 4294901760
    %v1853 = vsub.f32 %v1463, %v1852
    %v1854 = vand.u32 %v1853, 4294901760
    %1855 = vmatpush.msra.mxu0 %v1854
    %v1856 = vand.u32 %v1461, 4294901760
    %v1857 = vsub.f32 %v1461, %v1856
    %v1858 = vand.u32 %v1857, 4294901760
    %1859 = vmatpush.msra.mxu0 %v1858
    %v1860 = vand.u32 %v1459, 4294901760
    %v1861 = vsub.f32 %v1459, %v1860
    %v1862 = vand.u32 %v1861, 4294901760
    %1863 = vmatpush.msra.mxu0 %v1862
    %v1864 = vand.u32 %v1457, 4294901760
    %v1865 = vsub.f32 %v1457, %v1864
    %v1866 = vand.u32 %v1865, 4294901760
    %1867 = vmatpush.msra.mxu0 %v1866
    %v1868 = vand.u32 %v1481, 4294901760
    %1869 = vmatmul.f32.gmra.mxu0 %v1868
    %v1870 = vpop.f32.mrf.mxu0
    %v1871 = vadd.f32 %v1784, %v1870
    %v1872 = vand.u32 %v1484, 4294901760
    %1873 = vmatmul.f32.gmra.mxu0 %v1872
    %v1874 = vpop.f32.mrf.mxu0
    %v1875 = vadd.f32 %v1790, %v1874
    %v1876 = vand.u32 %v1487, 4294901760
    %1877 = vmatmul.f32.gmra.mxu0 %v1876
    %v1878 = vpop.f32.mrf.mxu0
    %v1879 = vadd.f32 %v1796, %v1878
    %v1880 = vand.u32 %v1490, 4294901760
    %1881 = vmatmul.f32.gmra.mxu0 %v1880
    %v1882 = vpop.f32.mrf.mxu0
    %v1883 = vadd.f32 %v1802, %v1882
    %v1884 = vand.u32 %v1493, 4294901760
    %1885 = vmatmul.f32.gmra.mxu0 %v1884
    %v1886 = vpop.f32.mrf.mxu0
    %v1887 = vadd.f32 %v1808, %v1886
    %v1888 = vand.u32 %v1496, 4294901760
    %1889 = vmatmul.f32.gmra.mxu0 %v1888
    %v1890 = vpop.f32.mrf.mxu0
    %v1891 = vadd.f32 %v1814, %v1890
    %v1892 = vand.u32 %v1499, 4294901760
    %1893 = vmatmul.f32.gmra.mxu0 %v1892
    %v1894 = vpop.f32.mrf.mxu0
    %v1895 = vadd.f32 %v1820, %v1894
    %v1896 = vand.u32 %v1502, 4294901760
    %1897 = vmatmul.f32.gmra.mxu0 %v1896
    %v1898 = vpop.f32.mrf.mxu0
    %v1899 = vadd.f32 %v1826, %v1898
    %1900 = vdwg.mxu0
    %1901 = vmatpush.msra.mxu0 0.0
    %1902 = vmatpush.msra.mxu0 0.0
    %1903 = vmatpush.msra.mxu0 0.0
    %1904 = vmatpush.msra.mxu0 0.0
    %1905 = vmatpush.msra.mxu0 0.0
    %1906 = vmatpush.msra.mxu0 0.0
    %1907 = vmatpush.msra.mxu0 0.0
    %1908 = vmatpush.msra.mxu0 0.0
    %v1909 = vand.u32 %v1471, 4294901760
    %1910 = vmatpush.msra.mxu0 %v1909
    %v1911 = vand.u32 %v1469, 4294901760
    %1912 = vmatpush.msra.mxu0 %v1911
    %v1913 = vand.u32 %v1467, 4294901760
    %1914 = vmatpush.msra.mxu0 %v1913
    %v1915 = vand.u32 %v1465, 4294901760
    %1916 = vmatpush.msra.mxu0 %v1915
    %v1917 = vand.u32 %v1463, 4294901760
    %1918 = vmatpush.msra.mxu0 %v1917
    %v1919 = vand.u32 %v1461, 4294901760
    %1920 = vmatpush.msra.mxu0 %v1919
    %v1921 = vand.u32 %v1459, 4294901760
    %1922 = vmatpush.msra.mxu0 %v1921
    %v1923 = vand.u32 %v1457, 4294901760
    %1924 = vmatpush.msra.mxu0 %v1923
    %v1925 = vand.u32 %v1481, 4294901760
    %1926 = vmatmul.f32.gmra.mxu0 %v1925
    %v1927 = vpop.f32.mrf.mxu0
    %v1928 = vadd.f32 %v1871, %v1927
    %v1929 = vand.u32 %v1484, 4294901760
    %1930 = vmatmul.f32.gmra.mxu0 %v1929
    %v1931 = vpop.f32.mrf.mxu0
    %v1932 = vadd.f32 %v1875, %v1931
    %v1933 = vand.u32 %v1487, 4294901760
    %1934 = vmatmul.f32.gmra.mxu0 %v1933
    %v1935 = vpop.f32.mrf.mxu0
    %v1936 = vadd.f32 %v1879, %v1935
    %v1937 = vand.u32 %v1490, 4294901760
    %1938 = vmatmul.f32.gmra.mxu0 %v1937
    %v1939 = vpop.f32.mrf.mxu0
    %v1940 = vadd.f32 %v1883, %v1939
    %v1941 = vand.u32 %v1493, 4294901760
    %1942 = vmatmul.f32.gmra.mxu0 %v1941
    %v1943 = vpop.f32.mrf.mxu0
    %v1944 = vadd.f32 %v1887, %v1943
    %v1945 = vand.u32 %v1496, 4294901760
    %1946 = vmatmul.f32.gmra.mxu0 %v1945
    %v1947 = vpop.f32.mrf.mxu0
    %v1948 = vadd.f32 %v1891, %v1947
    %v1949 = vand.u32 %v1499, 4294901760
    %1950 = vmatmul.f32.gmra.mxu0 %v1949
    %v1951 = vpop.f32.mrf.mxu0
    %v1952 = vadd.f32 %v1895, %v1951
    %v1953 = vand.u32 %v1502, 4294901760
    %1954 = vmatmul.f32.gmra.mxu0 %v1953
    %v1955 = vpop.f32.mrf.mxu0
    %v1956 = vadd.f32 %v1899, %v1955
    %1957 = vdwg.mxu0
    %v1958 = vmax.f32 %v1928, 0.0
    %v1959 = vmax.f32 %v1932, 0.0
    %v1960 = vmax.f32 %v1936, 0.0
    %v1961 = vmax.f32 %v1940, 0.0
    %v1962 = vmax.f32 %v1944, 0.0
    %v1963 = vmax.f32 %v1948, 0.0
    %v1964 = vmax.f32 %v1952, 0.0
    %v1965 = vmax.f32 %v1956, 0.0
    %vm1966 = vcmask 130048
    %v1967 = vsel %vm1966, %v1958, 0.0
    %1968 = vadd.xlane.f32.xlu0 %v1967
    %v1969 = vpop.xlane.xlu0 %1968
    %v1970 = vsel %vm1966, %v1959, 0.0
    %1971 = vadd.xlane.f32.xlu0 %v1970
    %v1972 = vpop.xlane.xlu0 %1971
    %v1973 = vsel %vm1966, %v1960, 0.0
    %1974 = vadd.xlane.f32.xlu0 %v1973
    %v1975 = vpop.xlane.xlu0 %1974
    %v1976 = vsel %vm1966, %v1961, 0.0
    %1977 = vadd.xlane.f32.xlu0 %v1976
    %v1978 = vpop.xlane.xlu0 %1977
    %v1979 = vsel %vm1966, %v1962, 0.0
    %1980 = vadd.xlane.f32.xlu0 %v1979
    %v1981 = vpop.xlane.xlu0 %1980
    %v1982 = vsel %vm1966, %v1963, 0.0
    %1983 = vadd.xlane.f32.xlu0 %v1982
    %v1984 = vpop.xlane.xlu0 %1983
    %v1985 = vsel %vm1966, %v1964, 0.0
    %1986 = vadd.xlane.f32.xlu0 %v1985
    %v1987 = vpop.xlane.xlu0 %1986
    %v1988 = vsel %vm1966, %v1965, 0.0
    %1989 = vadd.xlane.f32.xlu0 %v1988
    %v1990 = vpop.xlane.xlu0 %1989
    %v1991 = vrcp.pop 16.0
    %v1992 = vmul.f32 16.0, %v1991
    %v1993 = vsub.f32 1.0, %v1992
    %v1994 = vmul.f32 %v1991, %v1993
    %v1995 = vadd.f32 %v1991, %v1994
    %vm1996 = vweird.f32 %v1991
    %v1997 = vsel %vm1996, %v1991, %v1995
    %v1998 = vmul.f32 %v1969, %v1997
    %v1999 = vmul.f32 %v1972, %v1997
    %v2000 = vmul.f32 %v1975, %v1997
    %v2001 = vmul.f32 %v1978, %v1997
    %v2002 = vmul.f32 %v1981, %v1997
    %v2003 = vmul.f32 %v1984, %v1997
    %v2004 = vmul.f32 %v1987, %v1997
    %v2005 = vmul.f32 %v1990, %v1997
    %v2006 = vadd.f32 %v1998, %v2000
    %v2007 = vadd.f32 %v2006, %v2002
    %v2008 = vadd.f32 %v2007, %v2004
    %v2009 = vadd.f32 %v1999, %v2001
    %v2010 = vadd.f32 %v2009, %v2003
    %v2011 = vadd.f32 %v2010, %v2005
    %v2012 = vrcp.pop 4.0
    %v2013 = vmul.f32 4.0, %v2012
    %v2014 = vsub.f32 1.0, %v2013
    %v2015 = vmul.f32 %v2012, %v2014
    %v2016 = vadd.f32 %v2012, %v2015
    %vm2017 = vweird.f32 %v2012
    %v2018 = vsel %vm2017, %v2012, %v2016
    %v2019 = vmul.f32 %v2008, %v2018
    %v2020 = vmul.f32 %v2011, %v2018
    %v2021 = vsub.f32 %v1958, %v2019
    %v2022 = vsub.f32 %v1959, %v2020
    %v2023 = vsub.f32 %v1960, %v2019
    %v2024 = vsub.f32 %v1961, %v2020
    %v2025 = vsub.f32 %v1962, %v2019
    %v2026 = vsub.f32 %v1963, %v2020
    %v2027 = vsub.f32 %v1964, %v2019
    %v2028 = vsub.f32 %v1965, %v2020
    %v2029 = vmul.f32 %v2021, %v2021
    %v2030 = vmul.f32 %v2022, %v2022
    %v2031 = vmul.f32 %v2023, %v2023
    %v2032 = vmul.f32 %v2024, %v2024
    %v2033 = vmul.f32 %v2025, %v2025
    %v2034 = vmul.f32 %v2026, %v2026
    %v2035 = vmul.f32 %v2027, %v2027
    %v2036 = vmul.f32 %v2028, %v2028
    %v2037 = vsel %vm1966, %v2029, 0.0
    %2038 = vadd.xlane.f32.xlu0 %v2037
    %v2039 = vpop.xlane.xlu0 %2038
    %v2040 = vsel %vm1966, %v2030, 0.0
    %2041 = vadd.xlane.f32.xlu0 %v2040
    %v2042 = vpop.xlane.xlu0 %2041
    %v2043 = vsel %vm1966, %v2031, 0.0
    %2044 = vadd.xlane.f32.xlu0 %v2043
    %v2045 = vpop.xlane.xlu0 %2044
    %v2046 = vsel %vm1966, %v2032, 0.0
    %2047 = vadd.xlane.f32.xlu0 %v2046
    %v2048 = vpop.xlane.xlu0 %2047
    %v2049 = vsel %vm1966, %v2033, 0.0
    %2050 = vadd.xlane.f32.xlu0 %v2049
    %v2051 = vpop.xlane.xlu0 %2050
    %v2052 = vsel %vm1966, %v2034, 0.0
    %2053 = vadd.xlane.f32.xlu0 %v2052
    %v2054 = vpop.xlane.xlu0 %2053
    %v2055 = vsel %vm1966, %v2035, 0.0
    %2056 = vadd.xlane.f32.xlu0 %v2055
    %v2057 = vpop.xlane.xlu0 %2056
    %v2058 = vsel %vm1966, %v2036, 0.0
    %2059 = vadd.xlane.f32.xlu0 %v2058
    %v2060 = vpop.xlane.xlu0 %2059
    %v2061 = vmul.f32 %v2039, %v1997
    %v2062 = vmul.f32 %v2042, %v1997
    %v2063 = vmul.f32 %v2045, %v1997
    %v2064 = vmul.f32 %v2048, %v1997
    %v2065 = vmul.f32 %v2051, %v1997
    %v2066 = vmul.f32 %v2054, %v1997
    %v2067 = vmul.f32 %v2057, %v1997
    %v2068 = vmul.f32 %v2060, %v1997
    %v2069 = vadd.f32 %v2061, %v2063
    %v2070 = vadd.f32 %v2069, %v2065
    %v2071 = vadd.f32 %v2070, %v2067
    %v2072 = vadd.f32 %v2062, %v2064
    %v2073 = vadd.f32 %v2072, %v2066
    %v2074 = vadd.f32 %v2073, %v2068
    %v2075 = vmul.f32 %v2071, %v2018
    %v2076 = vmul.f32 %v2074, %v2018
    %v2077 = vadd.f32 %v2075, 1e-05
    %v2078 = vadd.f32 %v2076, 1e-05
    %v2079 = vrsqrt.pop %v2077
    %v2080 = vmul.f32 %v2079, %v2077
    %v2081 = vmul.f32 %v2080, %v2079
    %v2082 = vmul.f32 0.5, %v2081
    %v2083 = vsub.f32 1.5, %v2082
    %v2084 = vmul.f32 %v2079, %v2083
    %vm2085 = vweird.f32 %v2077
    %vm2086 = vweird.f32 %v2079
    %vm2087 = vmor %vm2085, %vm2086
    %v2088 = vsel %vm2087, %v2079, %v2084
    %v2089 = vrsqrt.pop %v2078
    %v2090 = vmul.f32 %v2089, %v2078
    %v2091 = vmul.f32 %v2090, %v2089
    %v2092 = vmul.f32 0.5, %v2091
    %v2093 = vsub.f32 1.5, %v2092
    %v2094 = vmul.f32 %v2089, %v2093
    %vm2095 = vweird.f32 %v2078
    %vm2096 = vweird.f32 %v2089
    %vm2097 = vmor %vm2095, %vm2096
    %v2098 = vsel %vm2097, %v2089, %v2094
    %v2099 = vmul.f32 %v2021, %v2088
    %v2100 = vmul.f32 %v2022, %v2098
    %v2101 = vmul.f32 %v2023, %v2088
    %v2102 = vmul.f32 %v2024, %v2098
    %v2103 = vmul.f32 %v2025, %v2088
    %v2104 = vmul.f32 %v2026, %v2098
    %v2105 = vmul.f32 %v2027, %v2088
    %v2106 = vmul.f32 %v2028, %v2098
    %v2107 = vld [vmem:[%s4] sm:$0xff]
    %v2108 = vld [vmem:[%s4 + $0x8] sm:$0xff]
    %v2110 = vsel %vm1966, %v2099, 0
    %v2113 = vsel %vm1966, %v2100, 0
    %v2116 = vsel %vm1966, %v2101, 0
    %v2119 = vsel %vm1966, %v2102, 0
    %v2122 = vsel %vm1966, %v2103, 0
    %v2125 = vsel %vm1966, %v2104, 0
    %v2128 = vsel %vm1966, %v2105, 0
    %v2131 = vsel %vm1966, %v2106, 0
    %2133 = vmatpush.msra.mxu0 0.0
    %2134 = vmatpush.msra.mxu0 0.0
    %2135 = vmatpush.msra.mxu0 0.0
    %2136 = vmatpush.msra.mxu0 0.0
    %2137 = vmatpush.msra.mxu0 0.0
    %2138 = vmatpush.msra.mxu0 0.0
    %2139 = vmatpush.msra.mxu0 0.0
    %2140 = vmatpush.msra.mxu0 0.0
    %2141 = vmatpush.msra.mxu0 0.0
    %2142 = vmatpush.msra.mxu0 0.0
    %2143 = vmatpush.msra.mxu0 0.0
    %2144 = vmatpush.msra.mxu0 0.0
    %2145 = vmatpush.msra.mxu0 0.0
    %2146 = vmatpush.msra.mxu0 0.0
    %v2147 = vand.u32 %v2108, 4294901760
    %2148 = vmatpush.msra.mxu0 %v2147
    %v2149 = vand.u32 %v2107, 4294901760
    %2150 = vmatpush.msra.mxu0 %v2149
    %v2151 = vand.u32 %v2110, 4294901760
    %v2152 = vsub.f32 %v2110, %v2151
    %v2153 = vand.u32 %v2152, 4294901760
    %v2154 = vsub.f32 %v2152, %v2153
    %v2155 = vand.u32 %v2154, 4294901760
    %2156 = vmatmul.f32.gmra.mxu0 %v2155
    %v2157 = vpop.f32.mrf.mxu0
    %v2158 = vadd.f32 0.0, %v2157
    %v2159 = vand.u32 %v2113, 4294901760
    %v2160 = vsub.f32 %v2113, %v2159
    %v2161 = vand.u32 %v2160, 4294901760
    %v2162 = vsub.f32 %v2160, %v2161
    %v2163 = vand.u32 %v2162, 4294901760
    %2164 = vmatmul.f32.gmra.mxu0 %v2163
    %v2165 = vpop.f32.mrf.mxu0
    %v2166 = vadd.f32 0.0, %v2165
    %v2167 = vand.u32 %v2116, 4294901760
    %v2168 = vsub.f32 %v2116, %v2167
    %v2169 = vand.u32 %v2168, 4294901760
    %v2170 = vsub.f32 %v2168, %v2169
    %v2171 = vand.u32 %v2170, 4294901760
    %2172 = vmatmul.f32.gmra.mxu0 %v2171
    %v2173 = vpop.f32.mrf.mxu0
    %v2174 = vadd.f32 0.0, %v2173
    %v2175 = vand.u32 %v2119, 4294901760
    %v2176 = vsub.f32 %v2119, %v2175
    %v2177 = vand.u32 %v2176, 4294901760
    %v2178 = vsub.f32 %v2176, %v2177
    %v2179 = vand.u32 %v2178, 4294901760
    %2180 = vmatmul.f32.gmra.mxu0 %v2179
    %v2181 = vpop.f32.mrf.mxu0
    %v2182 = vadd.f32 0.0, %v2181
    %v2183 = vand.u32 %v2122, 4294901760
    %v2184 = vsub.f32 %v2122, %v2183
    %v2185 = vand.u32 %v2184, 4294901760
    %v2186 = vsub.f32 %v2184, %v2185
    %v2187 = vand.u32 %v2186, 4294901760
    %2188 = vmatmul.f32.gmra.mxu0 %v2187
    %v2189 = vpop.f32.mrf.mxu0
    %v2190 = vadd.f32 0.0, %v2189
    %v2191 = vand.u32 %v2125, 4294901760
    %v2192 = vsub.f32 %v2125, %v2191
    %v2193 = vand.u32 %v2192, 4294901760
    %v2194 = vsub.f32 %v2192, %v2193
    %v2195 = vand.u32 %v2194, 4294901760
    %2196 = vmatmul.f32.gmra.mxu0 %v2195
    %v2197 = vpop.f32.mrf.mxu0
    %v2198 = vadd.f32 0.0, %v2197
    %v2199 = vand.u32 %v2128, 4294901760
    %v2200 = vsub.f32 %v2128, %v2199
    %v2201 = vand.u32 %v2200, 4294901760
    %v2202 = vsub.f32 %v2200, %v2201
    %v2203 = vand.u32 %v2202, 4294901760
    %2204 = vmatmul.f32.gmra.mxu0 %v2203
    %v2205 = vpop.f32.mrf.mxu0
    %v2206 = vadd.f32 0.0, %v2205
    %v2207 = vand.u32 %v2131, 4294901760
    %v2208 = vsub.f32 %v2131, %v2207
    %v2209 = vand.u32 %v2208, 4294901760
    %v2210 = vsub.f32 %v2208, %v2209
    %v2211 = vand.u32 %v2210, 4294901760
    %2212 = vmatmul.f32.gmra.mxu0 %v2211
    %v2213 = vpop.f32.mrf.mxu0
    %v2214 = vadd.f32 0.0, %v2213
    %2215 = vdwg.mxu0
    %2216 = vmatpush.msra.mxu0 0.0
    %2217 = vmatpush.msra.mxu0 0.0
    %2218 = vmatpush.msra.mxu0 0.0
    %2219 = vmatpush.msra.mxu0 0.0
    %2220 = vmatpush.msra.mxu0 0.0
    %2221 = vmatpush.msra.mxu0 0.0
    %2222 = vmatpush.msra.mxu0 0.0
    %2223 = vmatpush.msra.mxu0 0.0
    %2224 = vmatpush.msra.mxu0 0.0
    %2225 = vmatpush.msra.mxu0 0.0
    %2226 = vmatpush.msra.mxu0 0.0
    %2227 = vmatpush.msra.mxu0 0.0
    %2228 = vmatpush.msra.mxu0 0.0
    %2229 = vmatpush.msra.mxu0 0.0
    %v2230 = vand.u32 %v2108, 4294901760
    %v2231 = vsub.f32 %v2108, %v2230
    %v2232 = vand.u32 %v2231, 4294901760
    %v2233 = vsub.f32 %v2231, %v2232
    %v2234 = vand.u32 %v2233, 4294901760
    %2235 = vmatpush.msra.mxu0 %v2234
    %v2236 = vand.u32 %v2107, 4294901760
    %v2237 = vsub.f32 %v2107, %v2236
    %v2238 = vand.u32 %v2237, 4294901760
    %v2239 = vsub.f32 %v2237, %v2238
    %v2240 = vand.u32 %v2239, 4294901760
    %2241 = vmatpush.msra.mxu0 %v2240
    %v2242 = vand.u32 %v2110, 4294901760
    %2243 = vmatmul.f32.gmra.mxu0 %v2242
    %v2244 = vpop.f32.mrf.mxu0
    %v2245 = vadd.f32 %v2158, %v2244
    %v2246 = vand.u32 %v2113, 4294901760
    %2247 = vmatmul.f32.gmra.mxu0 %v2246
    %v2248 = vpop.f32.mrf.mxu0
    %v2249 = vadd.f32 %v2166, %v2248
    %v2250 = vand.u32 %v2116, 4294901760
    %2251 = vmatmul.f32.gmra.mxu0 %v2250
    %v2252 = vpop.f32.mrf.mxu0
    %v2253 = vadd.f32 %v2174, %v2252
    %v2254 = vand.u32 %v2119, 4294901760
    %2255 = vmatmul.f32.gmra.mxu0 %v2254
    %v2256 = vpop.f32.mrf.mxu0
    %v2257 = vadd.f32 %v2182, %v2256
    %v2258 = vand.u32 %v2122, 4294901760
    %2259 = vmatmul.f32.gmra.mxu0 %v2258
    %v2260 = vpop.f32.mrf.mxu0
    %v2261 = vadd.f32 %v2190, %v2260
    %v2262 = vand.u32 %v2125, 4294901760
    %2263 = vmatmul.f32.gmra.mxu0 %v2262
    %v2264 = vpop.f32.mrf.mxu0
    %v2265 = vadd.f32 %v2198, %v2264
    %v2266 = vand.u32 %v2128, 4294901760
    %2267 = vmatmul.f32.gmra.mxu0 %v2266
    %v2268 = vpop.f32.mrf.mxu0
    %v2269 = vadd.f32 %v2206, %v2268
    %v2270 = vand.u32 %v2131, 4294901760
    %2271 = vmatmul.f32.gmra.mxu0 %v2270
    %v2272 = vpop.f32.mrf.mxu0
    %v2273 = vadd.f32 %v2214, %v2272
    %2274 = vdwg.mxu0
    %2275 = vmatpush.msra.mxu0 0.0
    %2276 = vmatpush.msra.mxu0 0.0
    %2277 = vmatpush.msra.mxu0 0.0
    %2278 = vmatpush.msra.mxu0 0.0
    %2279 = vmatpush.msra.mxu0 0.0
    %2280 = vmatpush.msra.mxu0 0.0
    %2281 = vmatpush.msra.mxu0 0.0
    %2282 = vmatpush.msra.mxu0 0.0
    %2283 = vmatpush.msra.mxu0 0.0
    %2284 = vmatpush.msra.mxu0 0.0
    %2285 = vmatpush.msra.mxu0 0.0
    %2286 = vmatpush.msra.mxu0 0.0
    %2287 = vmatpush.msra.mxu0 0.0
    %2288 = vmatpush.msra.mxu0 0.0
    %v2289 = vand.u32 %v2108, 4294901760
    %v2290 = vsub.f32 %v2108, %v2289
    %2291 = vmatpush.msra.mxu0 %v2290
    %v2292 = vand.u32 %v2107, 4294901760
    %v2293 = vsub.f32 %v2107, %v2292
    %2294 = vmatpush.msra.mxu0 %v2293
    %v2295 = vand.u32 %v2110, 4294901760
    %v2296 = vsub.f32 %v2110, %v2295
    %2297 = vmatmul.f32.gmra.mxu0 %v2296
    %v2298 = vpop.f32.mrf.mxu0
    %v2299 = vadd.f32 %v2245, %v2298
    %v2300 = vand.u32 %v2113, 4294901760
    %v2301 = vsub.f32 %v2113, %v2300
    %2302 = vmatmul.f32.gmra.mxu0 %v2301
    %v2303 = vpop.f32.mrf.mxu0
    %v2304 = vadd.f32 %v2249, %v2303
    %v2305 = vand.u32 %v2116, 4294901760
    %v2306 = vsub.f32 %v2116, %v2305
    %2307 = vmatmul.f32.gmra.mxu0 %v2306
    %v2308 = vpop.f32.mrf.mxu0
    %v2309 = vadd.f32 %v2253, %v2308
    %v2310 = vand.u32 %v2119, 4294901760
    %v2311 = vsub.f32 %v2119, %v2310
    %2312 = vmatmul.f32.gmra.mxu0 %v2311
    %v2313 = vpop.f32.mrf.mxu0
    %v2314 = vadd.f32 %v2257, %v2313
    %v2315 = vand.u32 %v2122, 4294901760
    %v2316 = vsub.f32 %v2122, %v2315
    %2317 = vmatmul.f32.gmra.mxu0 %v2316
    %v2318 = vpop.f32.mrf.mxu0
    %v2319 = vadd.f32 %v2261, %v2318
    %v2320 = vand.u32 %v2125, 4294901760
    %v2321 = vsub.f32 %v2125, %v2320
    %2322 = vmatmul.f32.gmra.mxu0 %v2321
    %v2323 = vpop.f32.mrf.mxu0
    %v2324 = vadd.f32 %v2265, %v2323
    %v2325 = vand.u32 %v2128, 4294901760
    %v2326 = vsub.f32 %v2128, %v2325
    %2327 = vmatmul.f32.gmra.mxu0 %v2326
    %v2328 = vpop.f32.mrf.mxu0
    %v2329 = vadd.f32 %v2269, %v2328
    %v2330 = vand.u32 %v2131, 4294901760
    %v2331 = vsub.f32 %v2131, %v2330
    %2332 = vmatmul.f32.gmra.mxu0 %v2331
    %v2333 = vpop.f32.mrf.mxu0
    %v2334 = vadd.f32 %v2273, %v2333
    %2335 = vdwg.mxu0
    %2336 = vmatpush.msra.mxu0 0.0
    %2337 = vmatpush.msra.mxu0 0.0
    %2338 = vmatpush.msra.mxu0 0.0
    %2339 = vmatpush.msra.mxu0 0.0
    %2340 = vmatpush.msra.mxu0 0.0
    %2341 = vmatpush.msra.mxu0 0.0
    %2342 = vmatpush.msra.mxu0 0.0
    %2343 = vmatpush.msra.mxu0 0.0
    %2344 = vmatpush.msra.mxu0 0.0
    %2345 = vmatpush.msra.mxu0 0.0
    %2346 = vmatpush.msra.mxu0 0.0
    %2347 = vmatpush.msra.mxu0 0.0
    %2348 = vmatpush.msra.mxu0 0.0
    %2349 = vmatpush.msra.mxu0 0.0
    %v2350 = vand.u32 %v2108, 4294901760
    %2351 = vmatpush.msra.mxu0 %v2350
    %v2352 = vand.u32 %v2107, 4294901760
    %2353 = vmatpush.msra.mxu0 %v2352
    %v2354 = vand.u32 %v2110, 4294901760
    %v2355 = vsub.f32 %v2110, %v2354
    %v2356 = vand.u32 %v2355, 4294901760
    %2357 = vmatmul.f32.gmra.mxu0 %v2356
    %v2358 = vpop.f32.mrf.mxu0
    %v2359 = vadd.f32 %v2299, %v2358
    %v2360 = vand.u32 %v2113, 4294901760
    %v2361 = vsub.f32 %v2113, %v2360
    %v2362 = vand.u32 %v2361, 4294901760
    %2363 = vmatmul.f32.gmra.mxu0 %v2362
    %v2364 = vpop.f32.mrf.mxu0
    %v2365 = vadd.f32 %v2304, %v2364
    %v2366 = vand.u32 %v2116, 4294901760
    %v2367 = vsub.f32 %v2116, %v2366
    %v2368 = vand.u32 %v2367, 4294901760
    %2369 = vmatmul.f32.gmra.mxu0 %v2368
    %v2370 = vpop.f32.mrf.mxu0
    %v2371 = vadd.f32 %v2309, %v2370
    %v2372 = vand.u32 %v2119, 4294901760
    %v2373 = vsub.f32 %v2119, %v2372
    %v2374 = vand.u32 %v2373, 4294901760
    %2375 = vmatmul.f32.gmra.mxu0 %v2374
    %v2376 = vpop.f32.mrf.mxu0
    %v2377 = vadd.f32 %v2314, %v2376
    %v2378 = vand.u32 %v2122, 4294901760
    %v2379 = vsub.f32 %v2122, %v2378
    %v2380 = vand.u32 %v2379, 4294901760
    %2381 = vmatmul.f32.gmra.mxu0 %v2380
    %v2382 = vpop.f32.mrf.mxu0
    %v2383 = vadd.f32 %v2319, %v2382
    %v2384 = vand.u32 %v2125, 4294901760
    %v2385 = vsub.f32 %v2125, %v2384
    %v2386 = vand.u32 %v2385, 4294901760
    %2387 = vmatmul.f32.gmra.mxu0 %v2386
    %v2388 = vpop.f32.mrf.mxu0
    %v2389 = vadd.f32 %v2324, %v2388
    %v2390 = vand.u32 %v2128, 4294901760
    %v2391 = vsub.f32 %v2128, %v2390
    %v2392 = vand.u32 %v2391, 4294901760
    %2393 = vmatmul.f32.gmra.mxu0 %v2392
    %v2394 = vpop.f32.mrf.mxu0
    %v2395 = vadd.f32 %v2329, %v2394
    %v2396 = vand.u32 %v2131, 4294901760
    %v2397 = vsub.f32 %v2131, %v2396
    %v2398 = vand.u32 %v2397, 4294901760
    %2399 = vmatmul.f32.gmra.mxu0 %v2398
    %v2400 = vpop.f32.mrf.mxu0
    %v2401 = vadd.f32 %v2334, %v2400
    %2402 = vdwg.mxu0
    %2403 = vmatpush.msra.mxu0 0.0
    %2404 = vmatpush.msra.mxu0 0.0
    %2405 = vmatpush.msra.mxu0 0.0
    %2406 = vmatpush.msra.mxu0 0.0
    %2407 = vmatpush.msra.mxu0 0.0
    %2408 = vmatpush.msra.mxu0 0.0
    %2409 = vmatpush.msra.mxu0 0.0
    %2410 = vmatpush.msra.mxu0 0.0
    %2411 = vmatpush.msra.mxu0 0.0
    %2412 = vmatpush.msra.mxu0 0.0
    %2413 = vmatpush.msra.mxu0 0.0
    %2414 = vmatpush.msra.mxu0 0.0
    %2415 = vmatpush.msra.mxu0 0.0
    %2416 = vmatpush.msra.mxu0 0.0
    %v2417 = vand.u32 %v2108, 4294901760
    %v2418 = vsub.f32 %v2108, %v2417
    %v2419 = vand.u32 %v2418, 4294901760
    %2420 = vmatpush.msra.mxu0 %v2419
    %v2421 = vand.u32 %v2107, 4294901760
    %v2422 = vsub.f32 %v2107, %v2421
    %v2423 = vand.u32 %v2422, 4294901760
    %2424 = vmatpush.msra.mxu0 %v2423
    %v2425 = vand.u32 %v2110, 4294901760
    %2426 = vmatmul.f32.gmra.mxu0 %v2425
    %v2427 = vpop.f32.mrf.mxu0
    %v2428 = vadd.f32 %v2359, %v2427
    %v2429 = vand.u32 %v2113, 4294901760
    %2430 = vmatmul.f32.gmra.mxu0 %v2429
    %v2431 = vpop.f32.mrf.mxu0
    %v2432 = vadd.f32 %v2365, %v2431
    %v2433 = vand.u32 %v2116, 4294901760
    %2434 = vmatmul.f32.gmra.mxu0 %v2433
    %v2435 = vpop.f32.mrf.mxu0
    %v2436 = vadd.f32 %v2371, %v2435
    %v2437 = vand.u32 %v2119, 4294901760
    %2438 = vmatmul.f32.gmra.mxu0 %v2437
    %v2439 = vpop.f32.mrf.mxu0
    %v2440 = vadd.f32 %v2377, %v2439
    %v2441 = vand.u32 %v2122, 4294901760
    %2442 = vmatmul.f32.gmra.mxu0 %v2441
    %v2443 = vpop.f32.mrf.mxu0
    %v2444 = vadd.f32 %v2383, %v2443
    %v2445 = vand.u32 %v2125, 4294901760
    %2446 = vmatmul.f32.gmra.mxu0 %v2445
    %v2447 = vpop.f32.mrf.mxu0
    %v2448 = vadd.f32 %v2389, %v2447
    %v2449 = vand.u32 %v2128, 4294901760
    %2450 = vmatmul.f32.gmra.mxu0 %v2449
    %v2451 = vpop.f32.mrf.mxu0
    %v2452 = vadd.f32 %v2395, %v2451
    %v2453 = vand.u32 %v2131, 4294901760
    %2454 = vmatmul.f32.gmra.mxu0 %v2453
    %v2455 = vpop.f32.mrf.mxu0
    %v2456 = vadd.f32 %v2401, %v2455
    %2457 = vdwg.mxu0
    %2458 = vmatpush.msra.mxu0 0.0
    %2459 = vmatpush.msra.mxu0 0.0
    %2460 = vmatpush.msra.mxu0 0.0
    %2461 = vmatpush.msra.mxu0 0.0
    %2462 = vmatpush.msra.mxu0 0.0
    %2463 = vmatpush.msra.mxu0 0.0
    %2464 = vmatpush.msra.mxu0 0.0
    %2465 = vmatpush.msra.mxu0 0.0
    %2466 = vmatpush.msra.mxu0 0.0
    %2467 = vmatpush.msra.mxu0 0.0
    %2468 = vmatpush.msra.mxu0 0.0
    %2469 = vmatpush.msra.mxu0 0.0
    %2470 = vmatpush.msra.mxu0 0.0
    %2471 = vmatpush.msra.mxu0 0.0
    %v2472 = vand.u32 %v2108, 4294901760
    %2473 = vmatpush.msra.mxu0 %v2472
    %v2474 = vand.u32 %v2107, 4294901760
    %2475 = vmatpush.msra.mxu0 %v2474
    %v2476 = vand.u32 %v2110, 4294901760
    %2477 = vmatmul.f32.gmra.mxu0 %v2476
    %v2478 = vpop.f32.mrf.mxu0
    %v2479 = vadd.f32 %v2428, %v2478
    %v2480 = vand.u32 %v2113, 4294901760
    %2481 = vmatmul.f32.gmra.mxu0 %v2480
    %v2482 = vpop.f32.mrf.mxu0
    %v2483 = vadd.f32 %v2432, %v2482
    %v2484 = vand.u32 %v2116, 4294901760
    %2485 = vmatmul.f32.gmra.mxu0 %v2484
    %v2486 = vpop.f32.mrf.mxu0
    %v2487 = vadd.f32 %v2436, %v2486
    %v2488 = vand.u32 %v2119, 4294901760
    %2489 = vmatmul.f32.gmra.mxu0 %v2488
    %v2490 = vpop.f32.mrf.mxu0
    %v2491 = vadd.f32 %v2440, %v2490
    %v2492 = vand.u32 %v2122, 4294901760
    %2493 = vmatmul.f32.gmra.mxu0 %v2492
    %v2494 = vpop.f32.mrf.mxu0
    %v2495 = vadd.f32 %v2444, %v2494
    %v2496 = vand.u32 %v2125, 4294901760
    %2497 = vmatmul.f32.gmra.mxu0 %v2496
    %v2498 = vpop.f32.mrf.mxu0
    %v2499 = vadd.f32 %v2448, %v2498
    %v2500 = vand.u32 %v2128, 4294901760
    %2501 = vmatmul.f32.gmra.mxu0 %v2500
    %v2502 = vpop.f32.mrf.mxu0
    %v2503 = vadd.f32 %v2452, %v2502
    %v2504 = vand.u32 %v2131, 4294901760
    %2505 = vmatmul.f32.gmra.mxu0 %v2504
    %v2506 = vpop.f32.mrf.mxu0
    %v2507 = vadd.f32 %v2456, %v2506
    %2508 = vdwg.mxu0
    %2509 = vmatpush.msra.mxu0 0.0
    %2510 = vmatpush.msra.mxu0 0.0
    %2511 = vmatpush.msra.mxu0 0.0
    %2512 = vmatpush.msra.mxu0 0.0
    %2513 = vmatpush.msra.mxu0 0.0
    %2514 = vmatpush.msra.mxu0 0.0
    %2515 = vmatpush.msra.mxu0 0.0
    %2516 = vmatpush.msra.mxu0 0.0
    %v2517 = vand.u32 %v2507, 4294901760
    %2518 = vmatpush.msra.mxu0 %v2517
    %v2519 = vand.u32 %v2503, 4294901760
    %2520 = vmatpush.msra.mxu0 %v2519
    %v2521 = vand.u32 %v2499, 4294901760
    %2522 = vmatpush.msra.mxu0 %v2521
    %v2523 = vand.u32 %v2495, 4294901760
    %2524 = vmatpush.msra.mxu0 %v2523
    %v2525 = vand.u32 %v2491, 4294901760
    %2526 = vmatpush.msra.mxu0 %v2525
    %v2527 = vand.u32 %v2487, 4294901760
    %2528 = vmatpush.msra.mxu0 %v2527
    %v2529 = vand.u32 %v2483, 4294901760
    %2530 = vmatpush.msra.mxu0 %v2529
    %v2531 = vand.u32 %v2479, 4294901760
    %2532 = vmatpush.msra.mxu0 %v2531
    %v2533 = vand.u32 %v1481, 4294901760
    %v2534 = vsub.f32 %v1481, %v2533
    %v2535 = vand.u32 %v2534, 4294901760
    %v2536 = vsub.f32 %v2534, %v2535
    %v2537 = vand.u32 %v2536, 4294901760
    %2538 = vmatmul.f32.gmra.mxu0 %v2537
    %v2539 = vpop.f32.mrf.mxu0
    %v2540 = vadd.f32 0.0, %v2539
    %v2541 = vand.u32 %v1484, 4294901760
    %v2542 = vsub.f32 %v1484, %v2541
    %v2543 = vand.u32 %v2542, 4294901760
    %v2544 = vsub.f32 %v2542, %v2543
    %v2545 = vand.u32 %v2544, 4294901760
    %2546 = vmatmul.f32.gmra.mxu0 %v2545
    %v2547 = vpop.f32.mrf.mxu0
    %v2548 = vadd.f32 0.0, %v2547
    %v2549 = vand.u32 %v1487, 4294901760
    %v2550 = vsub.f32 %v1487, %v2549
    %v2551 = vand.u32 %v2550, 4294901760
    %v2552 = vsub.f32 %v2550, %v2551
    %v2553 = vand.u32 %v2552, 4294901760
    %2554 = vmatmul.f32.gmra.mxu0 %v2553
    %v2555 = vpop.f32.mrf.mxu0
    %v2556 = vadd.f32 0.0, %v2555
    %v2557 = vand.u32 %v1490, 4294901760
    %v2558 = vsub.f32 %v1490, %v2557
    %v2559 = vand.u32 %v2558, 4294901760
    %v2560 = vsub.f32 %v2558, %v2559
    %v2561 = vand.u32 %v2560, 4294901760
    %2562 = vmatmul.f32.gmra.mxu0 %v2561
    %v2563 = vpop.f32.mrf.mxu0
    %v2564 = vadd.f32 0.0, %v2563
    %v2565 = vand.u32 %v1493, 4294901760
    %v2566 = vsub.f32 %v1493, %v2565
    %v2567 = vand.u32 %v2566, 4294901760
    %v2568 = vsub.f32 %v2566, %v2567
    %v2569 = vand.u32 %v2568, 4294901760
    %2570 = vmatmul.f32.gmra.mxu0 %v2569
    %v2571 = vpop.f32.mrf.mxu0
    %v2572 = vadd.f32 0.0, %v2571
    %v2573 = vand.u32 %v1496, 4294901760
    %v2574 = vsub.f32 %v1496, %v2573
    %v2575 = vand.u32 %v2574, 4294901760
    %v2576 = vsub.f32 %v2574, %v2575
    %v2577 = vand.u32 %v2576, 4294901760
    %2578 = vmatmul.f32.gmra.mxu0 %v2577
    %v2579 = vpop.f32.mrf.mxu0
    %v2580 = vadd.f32 0.0, %v2579
    %v2581 = vand.u32 %v1499, 4294901760
    %v2582 = vsub.f32 %v1499, %v2581
    %v2583 = vand.u32 %v2582, 4294901760
    %v2584 = vsub.f32 %v2582, %v2583
    %v2585 = vand.u32 %v2584, 4294901760
    %2586 = vmatmul.f32.gmra.mxu0 %v2585
    %v2587 = vpop.f32.mrf.mxu0
    %v2588 = vadd.f32 0.0, %v2587
    %v2589 = vand.u32 %v1502, 4294901760
    %v2590 = vsub.f32 %v1502, %v2589
    %v2591 = vand.u32 %v2590, 4294901760
    %v2592 = vsub.f32 %v2590, %v2591
    %v2593 = vand.u32 %v2592, 4294901760
    %2594 = vmatmul.f32.gmra.mxu0 %v2593
    %v2595 = vpop.f32.mrf.mxu0
    %v2596 = vadd.f32 0.0, %v2595
    %2597 = vdwg.mxu0
    %2598 = vmatpush.msra.mxu0 0.0
    %2599 = vmatpush.msra.mxu0 0.0
    %2600 = vmatpush.msra.mxu0 0.0
    %2601 = vmatpush.msra.mxu0 0.0
    %2602 = vmatpush.msra.mxu0 0.0
    %2603 = vmatpush.msra.mxu0 0.0
    %2604 = vmatpush.msra.mxu0 0.0
    %2605 = vmatpush.msra.mxu0 0.0
    %v2606 = vand.u32 %v2507, 4294901760
    %v2607 = vsub.f32 %v2507, %v2606
    %v2608 = vand.u32 %v2607, 4294901760
    %v2609 = vsub.f32 %v2607, %v2608
    %v2610 = vand.u32 %v2609, 4294901760
    %2611 = vmatpush.msra.mxu0 %v2610
    %v2612 = vand.u32 %v2503, 4294901760
    %v2613 = vsub.f32 %v2503, %v2612
    %v2614 = vand.u32 %v2613, 4294901760
    %v2615 = vsub.f32 %v2613, %v2614
    %v2616 = vand.u32 %v2615, 4294901760
    %2617 = vmatpush.msra.mxu0 %v2616
    %v2618 = vand.u32 %v2499, 4294901760
    %v2619 = vsub.f32 %v2499, %v2618
    %v2620 = vand.u32 %v2619, 4294901760
    %v2621 = vsub.f32 %v2619, %v2620
    %v2622 = vand.u32 %v2621, 4294901760
    %2623 = vmatpush.msra.mxu0 %v2622
    %v2624 = vand.u32 %v2495, 4294901760
    %v2625 = vsub.f32 %v2495, %v2624
    %v2626 = vand.u32 %v2625, 4294901760
    %v2627 = vsub.f32 %v2625, %v2626
    %v2628 = vand.u32 %v2627, 4294901760
    %2629 = vmatpush.msra.mxu0 %v2628
    %v2630 = vand.u32 %v2491, 4294901760
    %v2631 = vsub.f32 %v2491, %v2630
    %v2632 = vand.u32 %v2631, 4294901760
    %v2633 = vsub.f32 %v2631, %v2632
    %v2634 = vand.u32 %v2633, 4294901760
    %2635 = vmatpush.msra.mxu0 %v2634
    %v2636 = vand.u32 %v2487, 4294901760
    %v2637 = vsub.f32 %v2487, %v2636
    %v2638 = vand.u32 %v2637, 4294901760
    %v2639 = vsub.f32 %v2637, %v2638
    %v2640 = vand.u32 %v2639, 4294901760
    %2641 = vmatpush.msra.mxu0 %v2640
    %v2642 = vand.u32 %v2483, 4294901760
    %v2643 = vsub.f32 %v2483, %v2642
    %v2644 = vand.u32 %v2643, 4294901760
    %v2645 = vsub.f32 %v2643, %v2644
    %v2646 = vand.u32 %v2645, 4294901760
    %2647 = vmatpush.msra.mxu0 %v2646
    %v2648 = vand.u32 %v2479, 4294901760
    %v2649 = vsub.f32 %v2479, %v2648
    %v2650 = vand.u32 %v2649, 4294901760
    %v2651 = vsub.f32 %v2649, %v2650
    %v2652 = vand.u32 %v2651, 4294901760
    %2653 = vmatpush.msra.mxu0 %v2652
    %v2654 = vand.u32 %v1481, 4294901760
    %2655 = vmatmul.f32.gmra.mxu0 %v2654
    %v2656 = vpop.f32.mrf.mxu0
    %v2657 = vadd.f32 %v2540, %v2656
    %v2658 = vand.u32 %v1484, 4294901760
    %2659 = vmatmul.f32.gmra.mxu0 %v2658
    %v2660 = vpop.f32.mrf.mxu0
    %v2661 = vadd.f32 %v2548, %v2660
    %v2662 = vand.u32 %v1487, 4294901760
    %2663 = vmatmul.f32.gmra.mxu0 %v2662
    %v2664 = vpop.f32.mrf.mxu0
    %v2665 = vadd.f32 %v2556, %v2664
    %v2666 = vand.u32 %v1490, 4294901760
    %2667 = vmatmul.f32.gmra.mxu0 %v2666
    %v2668 = vpop.f32.mrf.mxu0
    %v2669 = vadd.f32 %v2564, %v2668
    %v2670 = vand.u32 %v1493, 4294901760
    %2671 = vmatmul.f32.gmra.mxu0 %v2670
    %v2672 = vpop.f32.mrf.mxu0
    %v2673 = vadd.f32 %v2572, %v2672
    %v2674 = vand.u32 %v1496, 4294901760
    %2675 = vmatmul.f32.gmra.mxu0 %v2674
    %v2676 = vpop.f32.mrf.mxu0
    %v2677 = vadd.f32 %v2580, %v2676
    %v2678 = vand.u32 %v1499, 4294901760
    %2679 = vmatmul.f32.gmra.mxu0 %v2678
    %v2680 = vpop.f32.mrf.mxu0
    %v2681 = vadd.f32 %v2588, %v2680
    %v2682 = vand.u32 %v1502, 4294901760
    %2683 = vmatmul.f32.gmra.mxu0 %v2682
    %v2684 = vpop.f32.mrf.mxu0
    %v2685 = vadd.f32 %v2596, %v2684
    %2686 = vdwg.mxu0
    %2687 = vmatpush.msra.mxu0 0.0
    %2688 = vmatpush.msra.mxu0 0.0
    %2689 = vmatpush.msra.mxu0 0.0
    %2690 = vmatpush.msra.mxu0 0.0
    %2691 = vmatpush.msra.mxu0 0.0
    %2692 = vmatpush.msra.mxu0 0.0
    %2693 = vmatpush.msra.mxu0 0.0
    %2694 = vmatpush.msra.mxu0 0.0
    %v2695 = vand.u32 %v2507, 4294901760
    %v2696 = vsub.f32 %v2507, %v2695
    %2697 = vmatpush.msra.mxu0 %v2696
    %v2698 = vand.u32 %v2503, 4294901760
    %v2699 = vsub.f32 %v2503, %v2698
    %2700 = vmatpush.msra.mxu0 %v2699
    %v2701 = vand.u32 %v2499, 4294901760
    %v2702 = vsub.f32 %v2499, %v2701
    %2703 = vmatpush.msra.mxu0 %v2702
    %v2704 = vand.u32 %v2495, 4294901760
    %v2705 = vsub.f32 %v2495, %v2704
    %2706 = vmatpush.msra.mxu0 %v2705
    %v2707 = vand.u32 %v2491, 4294901760
    %v2708 = vsub.f32 %v2491, %v2707
    %2709 = vmatpush.msra.mxu0 %v2708
    %v2710 = vand.u32 %v2487, 4294901760
    %v2711 = vsub.f32 %v2487, %v2710
    %2712 = vmatpush.msra.mxu0 %v2711
    %v2713 = vand.u32 %v2483, 4294901760
    %v2714 = vsub.f32 %v2483, %v2713
    %2715 = vmatpush.msra.mxu0 %v2714
    %v2716 = vand.u32 %v2479, 4294901760
    %v2717 = vsub.f32 %v2479, %v2716
    %2718 = vmatpush.msra.mxu0 %v2717
    %v2719 = vand.u32 %v1481, 4294901760
    %v2720 = vsub.f32 %v1481, %v2719
    %2721 = vmatmul.f32.gmra.mxu0 %v2720
    %v2722 = vpop.f32.mrf.mxu0
    %v2723 = vadd.f32 %v2657, %v2722
    %v2724 = vand.u32 %v1484, 4294901760
    %v2725 = vsub.f32 %v1484, %v2724
    %2726 = vmatmul.f32.gmra.mxu0 %v2725
    %v2727 = vpop.f32.mrf.mxu0
    %v2728 = vadd.f32 %v2661, %v2727
    %v2729 = vand.u32 %v1487, 4294901760
    %v2730 = vsub.f32 %v1487, %v2729
    %2731 = vmatmul.f32.gmra.mxu0 %v2730
    %v2732 = vpop.f32.mrf.mxu0
    %v2733 = vadd.f32 %v2665, %v2732
    %v2734 = vand.u32 %v1490, 4294901760
    %v2735 = vsub.f32 %v1490, %v2734
    %2736 = vmatmul.f32.gmra.mxu0 %v2735
    %v2737 = vpop.f32.mrf.mxu0
    %v2738 = vadd.f32 %v2669, %v2737
    %v2739 = vand.u32 %v1493, 4294901760
    %v2740 = vsub.f32 %v1493, %v2739
    %2741 = vmatmul.f32.gmra.mxu0 %v2740
    %v2742 = vpop.f32.mrf.mxu0
    %v2743 = vadd.f32 %v2673, %v2742
    %v2744 = vand.u32 %v1496, 4294901760
    %v2745 = vsub.f32 %v1496, %v2744
    %2746 = vmatmul.f32.gmra.mxu0 %v2745
    %v2747 = vpop.f32.mrf.mxu0
    %v2748 = vadd.f32 %v2677, %v2747
    %v2749 = vand.u32 %v1499, 4294901760
    %v2750 = vsub.f32 %v1499, %v2749
    %2751 = vmatmul.f32.gmra.mxu0 %v2750
    %v2752 = vpop.f32.mrf.mxu0
    %v2753 = vadd.f32 %v2681, %v2752
    %v2754 = vand.u32 %v1502, 4294901760
    %v2755 = vsub.f32 %v1502, %v2754
    %2756 = vmatmul.f32.gmra.mxu0 %v2755
    %v2757 = vpop.f32.mrf.mxu0
    %v2758 = vadd.f32 %v2685, %v2757
    %2759 = vdwg.mxu0
    %2760 = vmatpush.msra.mxu0 0.0
    %2761 = vmatpush.msra.mxu0 0.0
    %2762 = vmatpush.msra.mxu0 0.0
    %2763 = vmatpush.msra.mxu0 0.0
    %2764 = vmatpush.msra.mxu0 0.0
    %2765 = vmatpush.msra.mxu0 0.0
    %2766 = vmatpush.msra.mxu0 0.0
    %2767 = vmatpush.msra.mxu0 0.0
    %v2768 = vand.u32 %v2507, 4294901760
    %2769 = vmatpush.msra.mxu0 %v2768
    %v2770 = vand.u32 %v2503, 4294901760
    %2771 = vmatpush.msra.mxu0 %v2770
    %v2772 = vand.u32 %v2499, 4294901760
    %2773 = vmatpush.msra.mxu0 %v2772
    %v2774 = vand.u32 %v2495, 4294901760
    %2775 = vmatpush.msra.mxu0 %v2774
    %v2776 = vand.u32 %v2491, 4294901760
    %2777 = vmatpush.msra.mxu0 %v2776
    %v2778 = vand.u32 %v2487, 4294901760
    %2779 = vmatpush.msra.mxu0 %v2778
    %v2780 = vand.u32 %v2483, 4294901760
    %2781 = vmatpush.msra.mxu0 %v2780
    %v2782 = vand.u32 %v2479, 4294901760
    %2783 = vmatpush.msra.mxu0 %v2782
    %v2784 = vand.u32 %v1481, 4294901760
    %v2785 = vsub.f32 %v1481, %v2784
    %v2786 = vand.u32 %v2785, 4294901760
    %2787 = vmatmul.f32.gmra.mxu0 %v2786
    %v2788 = vpop.f32.mrf.mxu0
    %v2789 = vadd.f32 %v2723, %v2788
    %v2790 = vand.u32 %v1484, 4294901760
    %v2791 = vsub.f32 %v1484, %v2790
    %v2792 = vand.u32 %v2791, 4294901760
    %2793 = vmatmul.f32.gmra.mxu0 %v2792
    %v2794 = vpop.f32.mrf.mxu0
    %v2795 = vadd.f32 %v2728, %v2794
    %v2796 = vand.u32 %v1487, 4294901760
    %v2797 = vsub.f32 %v1487, %v2796
    %v2798 = vand.u32 %v2797, 4294901760
    %2799 = vmatmul.f32.gmra.mxu0 %v2798
    %v2800 = vpop.f32.mrf.mxu0
    %v2801 = vadd.f32 %v2733, %v2800
    %v2802 = vand.u32 %v1490, 4294901760
    %v2803 = vsub.f32 %v1490, %v2802
    %v2804 = vand.u32 %v2803, 4294901760
    %2805 = vmatmul.f32.gmra.mxu0 %v2804
    %v2806 = vpop.f32.mrf.mxu0
    %v2807 = vadd.f32 %v2738, %v2806
    %v2808 = vand.u32 %v1493, 4294901760
    %v2809 = vsub.f32 %v1493, %v2808
    %v2810 = vand.u32 %v2809, 4294901760
    %2811 = vmatmul.f32.gmra.mxu0 %v2810
    %v2812 = vpop.f32.mrf.mxu0
    %v2813 = vadd.f32 %v2743, %v2812
    %v2814 = vand.u32 %v1496, 4294901760
    %v2815 = vsub.f32 %v1496, %v2814
    %v2816 = vand.u32 %v2815, 4294901760
    %2817 = vmatmul.f32.gmra.mxu0 %v2816
    %v2818 = vpop.f32.mrf.mxu0
    %v2819 = vadd.f32 %v2748, %v2818
    %v2820 = vand.u32 %v1499, 4294901760
    %v2821 = vsub.f32 %v1499, %v2820
    %v2822 = vand.u32 %v2821, 4294901760
    %2823 = vmatmul.f32.gmra.mxu0 %v2822
    %v2824 = vpop.f32.mrf.mxu0
    %v2825 = vadd.f32 %v2753, %v2824
    %v2826 = vand.u32 %v1502, 4294901760
    %v2827 = vsub.f32 %v1502, %v2826
    %v2828 = vand.u32 %v2827, 4294901760
    %2829 = vmatmul.f32.gmra.mxu0 %v2828
    %v2830 = vpop.f32.mrf.mxu0
    %v2831 = vadd.f32 %v2758, %v2830
    %2832 = vdwg.mxu0
    %2833 = vmatpush.msra.mxu0 0.0
    %2834 = vmatpush.msra.mxu0 0.0
    %2835 = vmatpush.msra.mxu0 0.0
    %2836 = vmatpush.msra.mxu0 0.0
    %2837 = vmatpush.msra.mxu0 0.0
    %2838 = vmatpush.msra.mxu0 0.0
    %2839 = vmatpush.msra.mxu0 0.0
    %2840 = vmatpush.msra.mxu0 0.0
    %v2841 = vand.u32 %v2507, 4294901760
    %v2842 = vsub.f32 %v2507, %v2841
    %v2843 = vand.u32 %v2842, 4294901760
    %2844 = vmatpush.msra.mxu0 %v2843
    %v2845 = vand.u32 %v2503, 4294901760
    %v2846 = vsub.f32 %v2503, %v2845
    %v2847 = vand.u32 %v2846, 4294901760
    %2848 = vmatpush.msra.mxu0 %v2847
    %v2849 = vand.u32 %v2499, 4294901760
    %v2850 = vsub.f32 %v2499, %v2849
    %v2851 = vand.u32 %v2850, 4294901760
    %2852 = vmatpush.msra.mxu0 %v2851
    %v2853 = vand.u32 %v2495, 4294901760
    %v2854 = vsub.f32 %v2495, %v2853
    %v2855 = vand.u32 %v2854, 4294901760
    %2856 = vmatpush.msra.mxu0 %v2855
    %v2857 = vand.u32 %v2491, 4294901760
    %v2858 = vsub.f32 %v2491, %v2857
    %v2859 = vand.u32 %v2858, 4294901760
    %2860 = vmatpush.msra.mxu0 %v2859
    %v2861 = vand.u32 %v2487, 4294901760
    %v2862 = vsub.f32 %v2487, %v2861
    %v2863 = vand.u32 %v2862, 4294901760
    %2864 = vmatpush.msra.mxu0 %v2863
    %v2865 = vand.u32 %v2483, 4294901760
    %v2866 = vsub.f32 %v2483, %v2865
    %v2867 = vand.u32 %v2866, 4294901760
    %2868 = vmatpush.msra.mxu0 %v2867
    %v2869 = vand.u32 %v2479, 4294901760
    %v2870 = vsub.f32 %v2479, %v2869
    %v2871 = vand.u32 %v2870, 4294901760
    %2872 = vmatpush.msra.mxu0 %v2871
    %v2873 = vand.u32 %v1481, 4294901760
    %2874 = vmatmul.f32.gmra.mxu0 %v2873
    %v2875 = vpop.f32.mrf.mxu0
    %v2876 = vadd.f32 %v2789, %v2875
    %v2877 = vand.u32 %v1484, 4294901760
    %2878 = vmatmul.f32.gmra.mxu0 %v2877
    %v2879 = vpop.f32.mrf.mxu0
    %v2880 = vadd.f32 %v2795, %v2879
    %v2881 = vand.u32 %v1487, 4294901760
    %2882 = vmatmul.f32.gmra.mxu0 %v2881
    %v2883 = vpop.f32.mrf.mxu0
    %v2884 = vadd.f32 %v2801, %v2883
    %v2885 = vand.u32 %v1490, 4294901760
    %2886 = vmatmul.f32.gmra.mxu0 %v2885
    %v2887 = vpop.f32.mrf.mxu0
    %v2888 = vadd.f32 %v2807, %v2887
    %v2889 = vand.u32 %v1493, 4294901760
    %2890 = vmatmul.f32.gmra.mxu0 %v2889
    %v2891 = vpop.f32.mrf.mxu0
    %v2892 = vadd.f32 %v2813, %v2891
    %v2893 = vand.u32 %v1496, 4294901760
    %2894 = vmatmul.f32.gmra.mxu0 %v2893
    %v2895 = vpop.f32.mrf.mxu0
    %v2896 = vadd.f32 %v2819, %v2895
    %v2897 = vand.u32 %v1499, 4294901760
    %2898 = vmatmul.f32.gmra.mxu0 %v2897
    %v2899 = vpop.f32.mrf.mxu0
    %v2900 = vadd.f32 %v2825, %v2899
    %v2901 = vand.u32 %v1502, 4294901760
    %2902 = vmatmul.f32.gmra.mxu0 %v2901
    %v2903 = vpop.f32.mrf.mxu0
    %v2904 = vadd.f32 %v2831, %v2903
    %2905 = vdwg.mxu0
    %2906 = vmatpush.msra.mxu0 0.0
    %2907 = vmatpush.msra.mxu0 0.0
    %2908 = vmatpush.msra.mxu0 0.0
    %2909 = vmatpush.msra.mxu0 0.0
    %2910 = vmatpush.msra.mxu0 0.0
    %2911 = vmatpush.msra.mxu0 0.0
    %2912 = vmatpush.msra.mxu0 0.0
    %2913 = vmatpush.msra.mxu0 0.0
    %v2914 = vand.u32 %v2507, 4294901760
    %2915 = vmatpush.msra.mxu0 %v2914
    %v2916 = vand.u32 %v2503, 4294901760
    %2917 = vmatpush.msra.mxu0 %v2916
    %v2918 = vand.u32 %v2499, 4294901760
    %2919 = vmatpush.msra.mxu0 %v2918
    %v2920 = vand.u32 %v2495, 4294901760
    %2921 = vmatpush.msra.mxu0 %v2920
    %v2922 = vand.u32 %v2491, 4294901760
    %2923 = vmatpush.msra.mxu0 %v2922
    %v2924 = vand.u32 %v2487, 4294901760
    %2925 = vmatpush.msra.mxu0 %v2924
    %v2926 = vand.u32 %v2483, 4294901760
    %2927 = vmatpush.msra.mxu0 %v2926
    %v2928 = vand.u32 %v2479, 4294901760
    %2929 = vmatpush.msra.mxu0 %v2928
    %v2930 = vand.u32 %v1481, 4294901760
    %2931 = vmatmul.f32.gmra.mxu0 %v2930
    %v2932 = vpop.f32.mrf.mxu0
    %v2933 = vadd.f32 %v2876, %v2932
    %v2934 = vand.u32 %v1484, 4294901760
    %2935 = vmatmul.f32.gmra.mxu0 %v2934
    %v2936 = vpop.f32.mrf.mxu0
    %v2937 = vadd.f32 %v2880, %v2936
    %v2938 = vand.u32 %v1487, 4294901760
    %2939 = vmatmul.f32.gmra.mxu0 %v2938
    %v2940 = vpop.f32.mrf.mxu0
    %v2941 = vadd.f32 %v2884, %v2940
    %v2942 = vand.u32 %v1490, 4294901760
    %2943 = vmatmul.f32.gmra.mxu0 %v2942
    %v2944 = vpop.f32.mrf.mxu0
    %v2945 = vadd.f32 %v2888, %v2944
    %v2946 = vand.u32 %v1493, 4294901760
    %2947 = vmatmul.f32.gmra.mxu0 %v2946
    %v2948 = vpop.f32.mrf.mxu0
    %v2949 = vadd.f32 %v2892, %v2948
    %v2950 = vand.u32 %v1496, 4294901760
    %2951 = vmatmul.f32.gmra.mxu0 %v2950
    %v2952 = vpop.f32.mrf.mxu0
    %v2953 = vadd.f32 %v2896, %v2952
    %v2954 = vand.u32 %v1499, 4294901760
    %2955 = vmatmul.f32.gmra.mxu0 %v2954
    %v2956 = vpop.f32.mrf.mxu0
    %v2957 = vadd.f32 %v2900, %v2956
    %v2958 = vand.u32 %v1502, 4294901760
    %2959 = vmatmul.f32.gmra.mxu0 %v2958
    %v2960 = vpop.f32.mrf.mxu0
    %v2961 = vadd.f32 %v2904, %v2960
    %2962 = vdwg.mxu0
    %vm2963 = vcmask 23552
    %v2964 = vsel %vm2963, %v2933, 0.0
    %2965 = vadd.xlane.f32.xlu0 %v2964
    %v2966 = vpop.xlane.xlu0 %2965
    %v2967 = vsel %vm2963, %v2937, 0.0
    %2968 = vadd.xlane.f32.xlu0 %v2967
    %v2969 = vpop.xlane.xlu0 %2968
    %v2970 = vsel %vm2963, %v2941, 0.0
    %2971 = vadd.xlane.f32.xlu0 %v2970
    %v2972 = vpop.xlane.xlu0 %2971
    %v2973 = vsel %vm2963, %v2945, 0.0
    %2974 = vadd.xlane.f32.xlu0 %v2973
    %v2975 = vpop.xlane.xlu0 %2974
    %v2976 = vsel %vm2963, %v2949, 0.0
    %2977 = vadd.xlane.f32.xlu0 %v2976
    %v2978 = vpop.xlane.xlu0 %2977
    %v2979 = vsel %vm2963, %v2953, 0.0
    %2980 = vadd.xlane.f32.xlu0 %v2979
    %v2981 = vpop.xlane.xlu0 %2980
    %v2982 = vsel %vm2963, %v2957, 0.0
    %2983 = vadd.xlane.f32.xlu0 %v2982
    %v2984 = vpop.xlane.xlu0 %2983
    %v2985 = vsel %vm2963, %v2961, 0.0
    %2986 = vadd.xlane.f32.xlu0 %v2985
    %v2987 = vpop.xlane.xlu0 %2986
    %v2988 = vrcp.pop 3.0
    %v2989 = vmul.f32 3.0, %v2988
    %v2990 = vsub.f32 1.0, %v2989
    %v2991 = vmul.f32 %v2988, %v2990
    %v2992 = vadd.f32 %v2988, %v2991
    %vm2993 = vweird.f32 %v2988
    %v2994 = vsel %vm2993, %v2988, %v2992
    %v2995 = vmul.f32 %v2966, %v2994
    %v2996 = vmul.f32 %v2969, %v2994
    %v2997 = vmul.f32 %v2972, %v2994
    %v2998 = vmul.f32 %v2975, %v2994
    %v2999 = vmul.f32 %v2978, %v2994
    %v3000 = vmul.f32 %v2981, %v2994
    %v3001 = vmul.f32 %v2984, %v2994
    %v3002 = vmul.f32 %v2987, %v2994
    %v3003 = vadd.f32 %v2995, %v2997
    %v3004 = vadd.f32 %v3003, %v2999
    %v3005 = vadd.f32 %v3004, %v3001
    %v3006 = vadd.f32 %v2996, %v2998
    %v3007 = vadd.f32 %v3006, %v3000
    %v3008 = vadd.f32 %v3007, %v3002
    %v3009 = vmul.f32 %v3005, %v2018
    %v3010 = vmul.f32 %v3008, %v2018
    %v3011 = vsub.f32 %v2933, %v3009
    %v3012 = vsub.f32 %v2937, %v3010
    %v3013 = vsub.f32 %v2941, %v3009
    %v3014 = vsub.f32 %v2945, %v3010
    %v3015 = vsub.f32 %v2949, %v3009
    %v3016 = vsub.f32 %v2953, %v3010
    %v3017 = vsub.f32 %v2957, %v3009
    %v3018 = vsub.f32 %v2961, %v3010
    %v3019 = vmul.f32 %v3011, %v3011
    %v3020 = vmul.f32 %v3012, %v3012
    %v3021 = vmul.f32 %v3013, %v3013
    %v3022 = vmul.f32 %v3014, %v3014
    %v3023 = vmul.f32 %v3015, %v3015
    %v3024 = vmul.f32 %v3016, %v3016
    %v3025 = vmul.f32 %v3017, %v3017
    %v3026 = vmul.f32 %v3018, %v3018
    %v3027 = vsel %vm2963, %v3019, 0.0
    %3028 = vadd.xlane.f32.xlu0 %v3027
    %v3029 = vpop.xlane.xlu0 %3028
    %v3030 = vsel %vm2963, %v3020, 0.0
    %3031 = vadd.xlane.f32.xlu0 %v3030
    %v3032 = vpop.xlane.xlu0 %3031
    %v3033 = vsel %vm2963, %v3021, 0.0
    %3034 = vadd.xlane.f32.xlu0 %v3033
    %v3035 = vpop.xlane.xlu0 %3034
    %v3036 = vsel %vm2963, %v3022, 0.0
    %3037 = vadd.xlane.f32.xlu0 %v3036
    %v3038 = vpop.xlane.xlu0 %3037
    %v3039 = vsel %vm2963, %v3023, 0.0
    %3040 = vadd.xlane.f32.xlu0 %v3039
    %v3041 = vpop.xlane.xlu0 %3040
    %v3042 = vsel %vm2963, %v3024, 0.0
    %3043 = vadd.xlane.f32.xlu0 %v3042
    %v3044 = vpop.xlane.xlu0 %3043
    %v3045 = vsel %vm2963, %v3025, 0.0
    %3046 = vadd.xlane.f32.xlu0 %v3045
    %v3047 = vpop.xlane.xlu0 %3046
    %v3048 = vsel %vm2963, %v3026, 0.0
    %3049 = vadd.xlane.f32.xlu0 %v3048
    %v3050 = vpop.xlane.xlu0 %3049
    %v3051 = vmul.f32 %v3029, %v2994
    %v3052 = vmul.f32 %v3032, %v2994
    %v3053 = vmul.f32 %v3035, %v2994
    %v3054 = vmul.f32 %v3038, %v2994
    %v3055 = vmul.f32 %v3041, %v2994
    %v3056 = vmul.f32 %v3044, %v2994
    %v3057 = vmul.f32 %v3047, %v2994
    %v3058 = vmul.f32 %v3050, %v2994
    %v3059 = vadd.f32 %v3051, %v3053
    %v3060 = vadd.f32 %v3059, %v3055
    %v3061 = vadd.f32 %v3060, %v3057
    %v3062 = vadd.f32 %v3052, %v3054
    %v3063 = vadd.f32 %v3062, %v3056
    %v3064 = vadd.f32 %v3063, %v3058
    %v3065 = vmul.f32 %v3061, %v2018
    %v3066 = vmul.f32 %v3064, %v2018
    %v3067 = vadd.f32 %v3065, 1e-05
    %v3068 = vadd.f32 %v3066, 1e-05
    %v3069 = vrsqrt.pop %v3067
    %v3070 = vmul.f32 %v3069, %v3067
    %v3071 = vmul.f32 %v3070, %v3069
    %v3072 = vmul.f32 0.5, %v3071
    %v3073 = vsub.f32 1.5, %v3072
    %v3074 = vmul.f32 %v3069, %v3073
    %vm3075 = vweird.f32 %v3067
    %vm3076 = vweird.f32 %v3069
    %vm3077 = vmor %vm3075, %vm3076
    %v3078 = vsel %vm3077, %v3069, %v3074
    %v3079 = vrsqrt.pop %v3068
    %v3080 = vmul.f32 %v3079, %v3068
    %v3081 = vmul.f32 %v3080, %v3079
    %v3082 = vmul.f32 0.5, %v3081
    %v3083 = vsub.f32 1.5, %v3082
    %v3084 = vmul.f32 %v3079, %v3083
    %vm3085 = vweird.f32 %v3068
    %vm3086 = vweird.f32 %v3079
    %vm3087 = vmor %vm3085, %vm3086
    %v3088 = vsel %vm3087, %v3079, %v3084
    %v3089 = vmul.f32 %v3011, %v3078
    %v3090 = vmul.f32 %v3012, %v3088
    %v3091 = vmul.f32 %v3013, %v3078
    %v3092 = vmul.f32 %v3014, %v3088
    %v3093 = vmul.f32 %v3015, %v3078
    %v3094 = vmul.f32 %v3016, %v3088
    %v3095 = vmul.f32 %v3017, %v3078
    %v3096 = vmul.f32 %v3018, %v3088
    %v3097 = vmax.f32 %v2099, 0.0
    %v3098 = vmax.f32 %v2100, 0.0
    %v3099 = vmax.f32 %v2101, 0.0
    %v3100 = vmax.f32 %v2102, 0.0
    %v3101 = vmax.f32 %v2103, 0.0
    %v3102 = vmax.f32 %v2104, 0.0
    %v3103 = vmax.f32 %v2105, 0.0
    %v3104 = vmax.f32 %v2106, 0.0
    %3105 = vst.msk [vmem:[#allocation2] sm:$0xff] %vm1966, %v3097
    %3106 = vst.msk [vmem:[#allocation2 + $0x8] sm:$0xff] %vm1966, %v3098
    %3107 = vst.msk [vmem:[#allocation2 + $0x10] sm:$0xff] %vm1966, %v3099
    %3108 = vst.msk [vmem:[#allocation2 + $0x18] sm:$0xff] %vm1966, %v3100
    %3109 = vst.msk [vmem:[#allocation2 + $0x20] sm:$0xff] %vm1966, %v3101
    %3110 = vst.msk [vmem:[#allocation2 + $0x28] sm:$0xff] %vm1966, %v3102
    %3111 = vst.msk [vmem:[#allocation2 + $0x30] sm:$0xff] %vm1966, %v3103
    %3112 = vst.msk [vmem:[#allocation2 + $0x38] sm:$0xff] %vm1966, %v3104
    %v3113 = vmax.f32 %v3089, 0.0
    %v3114 = vmax.f32 %v3090, 0.0
    %v3115 = vmax.f32 %v3091, 0.0
    %v3116 = vmax.f32 %v3092, 0.0
    %v3117 = vmax.f32 %v3093, 0.0
    %v3118 = vmax.f32 %v3094, 0.0
    %v3119 = vmax.f32 %v3095, 0.0
    %v3120 = vmax.f32 %v3096, 0.0
    %3121 = vst.msk [vmem:[#allocation3] sm:$0xff] %vm2963, %v3113
    %3122 = vst.msk [vmem:[#allocation3 + $0x8] sm:$0xff] %vm2963, %v3114
    %3123 = vst.msk [vmem:[#allocation3 + $0x10] sm:$0xff] %vm2963, %v3115
    %3124 = vst.msk [vmem:[#allocation3 + $0x18] sm:$0xff] %vm2963, %v3116
    %3125 = vst.msk [vmem:[#allocation3 + $0x20] sm:$0xff] %vm2963, %v3117
    %3126 = vst.msk [vmem:[#allocation3 + $0x28] sm:$0xff] %vm2963, %v3118
    %3127 = vst.msk [vmem:[#allocation3 + $0x30] sm:$0xff] %vm2963, %v3119
    %3128 = vst.msk [vmem:[#allocation3 + $0x38] sm:$0xff] %vm2963, %v3120
    %v3129 = vld [vmem:[#allocation2] sm:$0x1]
    %v3130 = vld [vmem:[#allocation2 + $0x10] sm:$0x1]
    %v3131 = vld [vmem:[#allocation2 + $0x20] sm:$0x1]
    %v3132 = vld [vmem:[#allocation2 + $0x30] sm:$0x1]
    %v3137 = vrot.slane %v3130, 7
    %vm3138 = vcmask 1041409
    %v3139 = vsel %vm3138, %v3137, %v3129
    %vm3140 = vcmask 1045509
    %v3141 = vsel %vm3140, %v3137, %v3139
    %v3142 = vrot.slane %v3131, 6
    %vm3143 = vcmask 1042434
    %v3144 = vsel %vm3143, %v3142, %v3141
    %vm3145 = vcmask 1046534
    %v3146 = vsel %vm3145, %v3142, %v3144
    %v3147 = vrot.slane %v3132, 5
    %vm3148 = vcmask 1043459
    %v3149 = vsel %vm3148, %v3147, %v3146
    %vm3150 = vcmask 1047559
    %v3151 = vsel %vm3150, %v3147, %v3149
    %vm3153 = vcmask 125952
    %3154 = vst.msk [vmem:[#allocation4] sm:$0xf] %vm3153, %v3151
    %v3155 = vld [vmem:[#allocation3] sm:$0x1]
    %v3156 = vld [vmem:[#allocation3 + $0x10] sm:$0x1]
    %v3157 = vld [vmem:[#allocation3 + $0x20] sm:$0x1]
    %v3158 = vld [vmem:[#allocation3 + $0x30] sm:$0x1]
    %v3163 = vrot.slane %v3156, 7
    %v3164 = vsel %vm3138, %v3163, %v3155
    %v3165 = vsel %vm3140, %v3163, %v3164
    %v3166 = vrot.slane %v3157, 6
    %v3167 = vsel %vm3143, %v3166, %v3165
    %v3168 = vsel %vm3145, %v3166, %v3167
    %v3169 = vrot.slane %v3158, 5
    %v3170 = vsel %vm3148, %v3169, %v3168
    %v3171 = vsel %vm3150, %v3169, %v3170
    %3172 = vrot.lane.b32.xlu0 %v3171, 16
    %v3173 = vpop.permute.xlu0 %3172
    %vm3175 = vcmask 150656
    %3176 = vst.msk [vmem:[#allocation4] sm:$0xf] %vm3175, %v3173
    %v3177 = vld [vmem:[#allocation2 + $0x1] sm:$0x1]
    %v3178 = vld [vmem:[#allocation2 + $0x11] sm:$0x1]
    %v3179 = vld [vmem:[#allocation2 + $0x21] sm:$0x1]
    %v3180 = vld [vmem:[#allocation2 + $0x31] sm:$0x1]
    %v3185 = vrot.slane %v3178, 7
    %v3186 = vsel %vm3138, %v3185, %v3177
    %v3187 = vsel %vm3140, %v3185, %v3186
    %v3188 = vrot.slane %v3179, 6
    %v3189 = vsel %vm3143, %v3188, %v3187
    %v3190 = vsel %vm3145, %v3188, %v3189
    %v3191 = vrot.slane %v3180, 5
    %v3192 = vsel %vm3148, %v3191, %v3190
    %v3193 = vsel %vm3150, %v3191, %v3192
    %3194 = vrot.lane.b32.xlu0 %v3193, 19
    %v3195 = vpop.permute.xlu0 %3194
    %vm3197 = vcmask 281752
    %3198 = vst.msk [vmem:[#allocation4] sm:$0xf] %vm3197, %v3195
    %v3199 = vld [vmem:[#allocation3 + $0x1] sm:$0x1]
    %v3200 = vld [vmem:[#allocation3 + $0x11] sm:$0x1]
    %v3201 = vld [vmem:[#allocation3 + $0x21] sm:$0x1]
    %v3202 = vld [vmem:[#allocation3 + $0x31] sm:$0x1]
    %v3207 = vrot.slane %v3200, 7
    %v3208 = vsel %vm3138, %v3207, %v3199
    %v3209 = vsel %vm3140, %v3207, %v3208
    %v3210 = vrot.slane %v3201, 6
    %v3211 = vsel %vm3143, %v3210, %v3209
    %v3212 = vsel %vm3145, %v3210, %v3211
    %v3213 = vrot.slane %v3202, 5
    %v3214 = vsel %vm3148, %v3213, %v3212
    %v3215 = vsel %vm3150, %v3213, %v3214
    %3216 = vrot.lane.b32.xlu0 %v3215, 35
    %v3217 = vpop.permute.xlu0 %3216
    %vm3219 = vcmask 306456
    %3220 = vst.msk [vmem:[#allocation4] sm:$0xf] %vm3219, %v3217
    %v3221 = vld [vmem:[#allocation2 + $0x2] sm:$0x1]
    %v3222 = vld [vmem:[#allocation2 + $0x12] sm:$0x1]
    %v3223 = vld [vmem:[#allocation2 + $0x22] sm:$0x1]
    %v3224 = vld [vmem:[#allocation2 + $0x32] sm:$0x1]
    %v3229 = vrot.slane %v3222, 7
    %v3230 = vsel %vm3138, %v3229, %v3221
    %v3231 = vsel %vm3140, %v3229, %v3230
    %v3232 = vrot.slane %v3223, 6
    %v3233 = vsel %vm3143, %v3232, %v3231
    %v3234 = vsel %vm3145, %v3232, %v3233
    %v3235 = vrot.slane %v3224, 5
    %v3236 = vsel %vm3148, %v3235, %v3234
    %v3237 = vsel %vm3150, %v3235, %v3236
    %3238 = vrot.lane.b32.xlu0 %v3237, 38
    %v3239 = vpop.permute.xlu0 %3238
    %vm3241 = vcmask 437552
    %3242 = vst.msk [vmem:[#allocation4] sm:$0xf] %vm3241, %v3239
    %v3243 = vld [vmem:[#allocation3 + $0x2] sm:$0x1]
    %v3244 = vld [vmem:[#allocation3 + $0x12] sm:$0x1]
    %v3245 = vld [vmem:[#allocation3 + $0x22] sm:$0x1]
    %v3246 = vld [vmem:[#allocation3 + $0x32] sm:$0x1]
    %v3251 = vrot.slane %v3244, 7
    %v3252 = vsel %vm3138, %v3251, %v3243
    %v3253 = vsel %vm3140, %v3251, %v3252
    %v3254 = vrot.slane %v3245, 6
    %v3255 = vsel %vm3143, %v3254, %v3253
    %v3256 = vsel %vm3145, %v3254, %v3255
    %v3257 = vrot.slane %v3246, 5
    %v3258 = vsel %vm3148, %v3257, %v3256
    %v3259 = vsel %vm3150, %v3257, %v3258
    %3260 = vrot.lane.b32.xlu0 %v3259, 54
    %v3261 = vpop.permute.xlu0 %3260
    %vm3263 = vcmask 462256
    %3264 = vst.msk [vmem:[#allocation4] sm:$0xf] %vm3263, %v3261
    %v3265 = vld [vmem:[#allocation2 + $0x3] sm:$0x1]
    %v3266 = vld [vmem:[#allocation2 + $0x13] sm:$0x1]
    %v3267 = vld [vmem:[#allocation2 + $0x23] sm:$0x1]
    %v3268 = vld [vmem:[#allocation2 + $0x33] sm:$0x1]
    %v3273 = vrot.slane %v3266, 7
    %v3274 = vsel %vm3138, %v3273, %v3265
    %v3275 = vsel %vm3140, %v3273, %v3274
    %v3276 = vrot.slane %v3267, 6
    %v3277 = vsel %vm3143, %v3276, %v3275
    %v3278 = vsel %vm3145, %v3276, %v3277
    %v3279 = vrot.slane %v3268, 5
    %v3280 = vsel %vm3148, %v3279, %v3278
    %v3281 = vsel %vm3150, %v3279, %v3280
    %3282 = vrot.lane.b32.xlu0 %v3281, 57
    %v3283 = vpop.permute.xlu0 %3282
    %vm3285 = vcmask 593352
    %3286 = vst.msk [vmem:[#allocation4] sm:$0xf] %vm3285, %v3283
    %v3287 = vld [vmem:[#allocation3 + $0x3] sm:$0x1]
    %v3288 = vld [vmem:[#allocation3 + $0x13] sm:$0x1]
    %v3289 = vld [vmem:[#allocation3 + $0x23] sm:$0x1]
    %v3290 = vld [vmem:[#allocation3 + $0x33] sm:$0x1]
    %v3295 = vrot.slane %v3288, 7
    %v3296 = vsel %vm3138, %v3295, %v3287
    %v3297 = vsel %vm3140, %v3295, %v3296
    %v3298 = vrot.slane %v3289, 6
    %v3299 = vsel %vm3143, %v3298, %v3297
    %v3300 = vsel %vm3145, %v3298, %v3299
    %v3301 = vrot.slane %v3290, 5
    %v3302 = vsel %vm3148, %v3301, %v3300
    %v3303 = vsel %vm3150, %v3301, %v3302
    %3304 = vrot.lane.b32.xlu0 %v3303, 73
    %v3305 = vpop.permute.xlu0 %3304
    %vm3307 = vcmask 618056
    %3308 = vst.msk [vmem:[#allocation4] sm:$0xf] %vm3307, %v3305
    %v3309 = vld [vmem:[#allocation2 + $0x4] sm:$0x1]
    %v3310 = vld [vmem:[#allocation2 + $0x14] sm:$0x1]
    %v3311 = vld [vmem:[#allocation2 + $0x24] sm:$0x1]
    %v3312 = vld [vmem:[#allocation2 + $0x34] sm:$0x1]
    %v3317 = vrot.slane %v3310, 7
    %v3318 = vsel %vm3138, %v3317, %v3309
    %v3319 = vsel %vm3140, %v3317, %v3318
    %v3320 = vrot.slane %v3311, 6
    %v3321 = vsel %vm3143, %v3320, %v3319
    %v3322 = vsel %vm3145, %v3320, %v3321
    %v3323 = vrot.slane %v3312, 5
    %v3324 = vsel %vm3148, %v3323, %v3322
    %v3325 = vsel %vm3150, %v3323, %v3324
    %3326 = vrot.lane.b32.xlu0 %v3325, 76
    %v3327 = vpop.permute.xlu0 %3326
    %vm3329 = vcmask 749152
    %3330 = vst.msk [vmem:[#allocation4] sm:$0xf] %vm3329, %v3327
    %v3331 = vld [vmem:[#allocation3 + $0x4] sm:$0x1]
    %v3332 = vld [vmem:[#allocation3 + $0x14] sm:$0x1]
    %v3333 = vld [vmem:[#allocation3 + $0x24] sm:$0x1]
    %v3334 = vld [vmem:[#allocation3 + $0x34] sm:$0x1]
    %v3339 = vrot.slane %v3332, 7
    %v3340 = vsel %vm3138, %v3339, %v3331
    %v3341 = vsel %vm3140, %v3339, %v3340
    %v3342 = vrot.slane %v3333, 6
    %v3343 = vsel %vm3143, %v3342, %v3341
    %v3344 = vsel %vm3145, %v3342, %v3343
    %v3345 = vrot.slane %v3334, 5
    %v3346 = vsel %vm3148, %v3345, %v3344
    %v3347 = vsel %vm3150, %v3345, %v3346
    %3348 = vrot.lane.b32.xlu0 %v3347, 92
    %v3349 = vpop.permute.xlu0 %3348
    %vm3351 = vcmask 773856
    %3352 = vst.msk [vmem:[#allocation4] sm:$0xf] %vm3351, %v3349
    %v3353 = vld [vmem:[#allocation2 + $0x5] sm:$0x1]
    %v3354 = vld [vmem:[#allocation2 + $0x15] sm:$0x1]
    %v3355 = vld [vmem:[#allocation2 + $0x25] sm:$0x1]
    %v3356 = vld [vmem:[#allocation2 + $0x35] sm:$0x1]
    %v3361 = vrot.slane %v3354, 7
    %v3362 = vsel %vm3138, %v3361, %v3353
    %v3363 = vsel %vm3140, %v3361, %v3362
    %v3364 = vrot.slane %v3355, 6
    %v3365 = vsel %vm3143, %v3364, %v3363
    %v3366 = vsel %vm3145, %v3364, %v3365
    %v3367 = vrot.slane %v3356, 5
    %v3368 = vsel %vm3148, %v3367, %v3366
    %v3369 = vsel %vm3150, %v3367, %v3368
    %3370 = vrot.lane.b32.xlu0 %v3369, 95
    %v3371 = vpop.permute.xlu0 %3370
    %vm3373 = vcmask 904952
    %3374 = vst.msk [vmem:[#allocation4] sm:$0xf] %vm3373, %v3371
    %v3375 = vld [vmem:[#allocation3 + $0x5] sm:$0x1]
    %v3376 = vld [vmem:[#allocation3 + $0x15] sm:$0x1]
    %v3377 = vld [vmem:[#allocation3 + $0x25] sm:$0x1]
    %v3378 = vld [vmem:[#allocation3 + $0x35] sm:$0x1]
    %v3383 = vrot.slane %v3376, 7
    %v3384 = vsel %vm3138, %v3383, %v3375
    %v3385 = vsel %vm3140, %v3383, %v3384
    %v3386 = vrot.slane %v3377, 6
    %v3387 = vsel %vm3143, %v3386, %v3385
    %v3388 = vsel %vm3145, %v3386, %v3387
    %v3389 = vrot.slane %v3378, 5
    %v3390 = vsel %vm3148, %v3389, %v3388
    %v3391 = vsel %vm3150, %v3389, %v3390
    %3392 = vrot.lane.b32.xlu0 %v3391, 111
    %v3393 = vpop.permute.xlu0 %3392
    %vm3395 = vcmask 929656
    %3396 = vst.msk [vmem:[#allocation4] sm:$0xf] %vm3395, %v3393
    %v3397 = vld [vmem:[#allocation2 + $0x6] sm:$0x1]
    %v3398 = vld [vmem:[#allocation2 + $0x16] sm:$0x1]
    %v3399 = vld [vmem:[#allocation2 + $0x26] sm:$0x1]
    %v3400 = vld [vmem:[#allocation2 + $0x36] sm:$0x1]
    %v3405 = vrot.slane %v3398, 7
    %v3406 = vsel %vm3138, %v3405, %v3397
    %v3407 = vsel %vm3140, %v3405, %v3406
    %v3408 = vrot.slane %v3399, 6
    %v3409 = vsel %vm3143, %v3408, %v3407
    %v3410 = vsel %vm3145, %v3408, %v3409
    %v3411 = vrot.slane %v3400, 5
    %v3412 = vsel %vm3148, %v3411, %v3410
    %v3413 = vsel %vm3150, %v3411, %v3412
    %3414 = vrot.lane.b32.xlu0 %v3413, 114
    %v3415 = vpop.permute.xlu0 %3414
    %v3416 = vrot.slane %v3415, 4
    %vm3417 = vcmask 932864
    %v3418 = vsel %vm3417, %v3416, %v3415
    %vm3420 = vcmask 1044368
    %vm3421 = vcmask 15364
    %vm3422 = vmor %vm3421, %vm3420
    %3423 = vst.msk [vmem:[#allocation4] sm:$0xff] %vm3422, %v3418
    %v3424 = vld [vmem:[#allocation3 + $0x6] sm:$0x1]
    %v3425 = vld [vmem:[#allocation3 + $0x16] sm:$0x1]
    %v3426 = vld [vmem:[#allocation3 + $0x26] sm:$0x1]
    %v3427 = vld [vmem:[#allocation3 + $0x36] sm:$0x1]
    %v3432 = vrot.slane %v3425, 7
    %v3433 = vsel %vm3138, %v3432, %v3424
    %v3434 = vsel %vm3140, %v3432, %v3433
    %v3435 = vrot.slane %v3426, 6
    %v3436 = vsel %vm3143, %v3435, %v3434
    %v3437 = vsel %vm3145, %v3435, %v3436
    %v3438 = vrot.slane %v3427, 5
    %v3439 = vsel %vm3148, %v3438, %v3437
    %v3440 = vsel %vm3150, %v3438, %v3439
    %3441 = vrot.lane.b32.xlu0 %v3440, 2
    %v3442 = vpop.permute.xlu0 %3441
    %vm3444 = vcmask 35856
    %3445 = vst.msk [vmem:[#allocation4 + $0x4] sm:$0xf] %vm3444, %v3442
    %v3446 = vld [vmem:[#allocation2 + $0x7] sm:$0x1]
    %v3447 = vld [vmem:[#allocation2 + $0x17] sm:$0x1]
    %v3448 = vld [vmem:[#allocation2 + $0x27] sm:$0x1]
    %v3449 = vld [vmem:[#allocation2 + $0x37] sm:$0x1]
    %v3454 = vrot.slane %v3447, 7
    %v3455 = vsel %vm3138, %v3454, %v3446
    %v3456 = vsel %vm3140, %v3454, %v3455
    %v3457 = vrot.slane %v3448, 6
    %v3458 = vsel %vm3143, %v3457, %v3456
    %v3459 = vsel %vm3145, %v3457, %v3458
    %v3460 = vrot.slane %v3449, 5
    %v3461 = vsel %vm3148, %v3460, %v3459
    %v3462 = vsel %vm3150, %v3460, %v3461
    %3463 = vrot.lane.b32.xlu0 %v3462, 5
    %v3464 = vpop.permute.xlu0 %3463
    %vm3466 = vcmask 166952
    %3467 = vst.msk [vmem:[#allocation4 + $0x4] sm:$0xf] %vm3466, %v3464
    %v3468 = vld [vmem:[#allocation3 + $0x7] sm:$0x1]
    %v3469 = vld [vmem:[#allocation3 + $0x17] sm:$0x1]
    %v3470 = vld [vmem:[#allocation3 + $0x27] sm:$0x1]
    %v3471 = vld [vmem:[#allocation3 + $0x37] sm:$0x1]
    %v3476 = vrot.slane %v3469, 7
    %v3477 = vsel %vm3138, %v3476, %v3468
    %v3478 = vsel %vm3140, %v3476, %v3477
    %v3479 = vrot.slane %v3470, 6
    %v3480 = vsel %vm3143, %v3479, %v3478
    %v3481 = vsel %vm3145, %v3479, %v3480
    %v3482 = vrot.slane %v3471, 5
    %v3483 = vsel %vm3148, %v3482, %v3481
    %v3484 = vsel %vm3150, %v3482, %v3483
    %3485 = vrot.lane.b32.xlu0 %v3484, 21
    %v3486 = vpop.permute.xlu0 %3485
    %vm3488 = vcmask 191656
    %3489 = vst.msk [vmem:[#allocation4 + $0x4] sm:$0xf] %vm3488, %v3486
    %v3490 = vld [vmem:[#allocation2 + $0x8] sm:$0x1]
    %v3491 = vld [vmem:[#allocation2 + $0x18] sm:$0x1]
    %v3492 = vld [vmem:[#allocation2 + $0x28] sm:$0x1]
    %v3493 = vld [vmem:[#allocation2 + $0x38] sm:$0x1]
    %v3498 = vrot.slane %v3491, 7
    %v3499 = vsel %vm3138, %v3498, %v3490
    %v3500 = vsel %vm3140, %v3498, %v3499
    %v3501 = vrot.slane %v3492, 6
    %v3502 = vsel %vm3143, %v3501, %v3500
    %v3503 = vsel %vm3145, %v3501, %v3502
    %v3504 = vrot.slane %v3493, 5
    %v3505 = vsel %vm3148, %v3504, %v3503
    %v3506 = vsel %vm3150, %v3504, %v3505
    %3507 = vrot.lane.b32.xlu0 %v3506, 24
    %v3508 = vpop.permute.xlu0 %3507
    %vm3510 = vcmask 322752
    %3511 = vst.msk [vmem:[#allocation4 + $0x4] sm:$0xf] %vm3510, %v3508
    %v3512 = vld [vmem:[#allocation3 + $0x8] sm:$0x1]
    %v3513 = vld [vmem:[#allocation3 + $0x18] sm:$0x1]
    %v3514 = vld [vmem:[#allocation3 + $0x28] sm:$0x1]
    %v3515 = vld [vmem:[#allocation3 + $0x38] sm:$0x1]
    %v3520 = vrot.slane %v3513, 7
    %v3521 = vsel %vm3138, %v3520, %v3512
    %v3522 = vsel %vm3140, %v3520, %v3521
    %v3523 = vrot.slane %v3514, 6
    %v3524 = vsel %vm3143, %v3523, %v3522
    %v3525 = vsel %vm3145, %v3523, %v3524
    %v3526 = vrot.slane %v3515, 5
    %v3527 = vsel %vm3148, %v3526, %v3525
    %v3528 = vsel %vm3150, %v3526, %v3527
    %3529 = vrot.lane.b32.xlu0 %v3528, 40
    %v3530 = vpop.permute.xlu0 %3529
    %vm3532 = vcmask 347456
    %3533 = vst.msk [vmem:[#allocation4 + $0x4] sm:$0xf] %vm3532, %v3530
    %v3534 = vld [vmem:[#allocation2 + $0x9] sm:$0x1]
    %v3535 = vld [vmem:[#allocation2 + $0x19] sm:$0x1]
    %v3536 = vld [vmem:[#allocation2 + $0x29] sm:$0x1]
    %v3537 = vld [vmem:[#allocation2 + $0x39] sm:$0x1]
    %v3542 = vrot.slane %v3535, 7
    %v3543 = vsel %vm3138, %v3542, %v3534
    %v3544 = vsel %vm3140, %v3542, %v3543
    %v3545 = vrot.slane %v3536, 6
    %v3546 = vsel %vm3143, %v3545, %v3544
    %v3547 = vsel %vm3145, %v3545, %v3546
    %v3548 = vrot.slane %v3537, 5
    %v3549 = vsel %vm3148, %v3548, %v3547
    %v3550 = vsel %vm3150, %v3548, %v3549
    %3551 = vrot.lane.b32.xlu0 %v3550, 43
    %v3552 = vpop.permute.xlu0 %3551
    %vm3554 = vcmask 478552
    %3555 = vst.msk [vmem:[#allocation4 + $0x4] sm:$0xf] %vm3554, %v3552
    %v3556 = vld [vmem:[#allocation3 + $0x9] sm:$0x1]
    %v3557 = vld [vmem:[#allocation3 + $0x19] sm:$0x1]
    %v3558 = vld [vmem:[#allocation3 + $0x29] sm:$0x1]
    %v3559 = vld [vmem:[#allocation3 + $0x39] sm:$0x1]
    %v3564 = vrot.slane %v3557, 7
    %v3565 = vsel %vm3138, %v3564, %v3556
    %v3566 = vsel %vm3140, %v3564, %v3565
    %v3567 = vrot.slane %v3558, 6
    %v3568 = vsel %vm3143, %v3567, %v3566
    %v3569 = vsel %vm3145, %v3567, %v3568
    %v3570 = vrot.slane %v3559, 5
    %v3571 = vsel %vm3148, %v3570, %v3569
    %v3572 = vsel %vm3150, %v3570, %v3571
    %3573 = vrot.lane.b32.xlu0 %v3572, 59
    %v3574 = vpop.permute.xlu0 %3573
    %vm3576 = vcmask 503256
    %3577 = vst.msk [vmem:[#allocation4 + $0x4] sm:$0xf] %vm3576, %v3574
    %v3578 = vld [vmem:[#allocation2 + $0xa] sm:$0x1]
    %v3579 = vld [vmem:[#allocation2 + $0x1a] sm:$0x1]
    %v3580 = vld [vmem:[#allocation2 + $0x2a] sm:$0x1]
    %v3581 = vld [vmem:[#allocation2 + $0x3a] sm:$0x1]
    %v3586 = vrot.slane %v3579, 7
    %v3587 = vsel %vm3138, %v3586, %v3578
    %v3588 = vsel %vm3140, %v3586, %v3587
    %v3589 = vrot.slane %v3580, 6
    %v3590 = vsel %vm3143, %v3589, %v3588
    %v3591 = vsel %vm3145, %v3589, %v3590
    %v3592 = vrot.slane %v3581, 5
    %v3593 = vsel %vm3148, %v3592, %v3591
    %v3594 = vsel %vm3150, %v3592, %v3593
    %3595 = vrot.lane.b32.xlu0 %v3594, 62
    %v3596 = vpop.permute.xlu0 %3595
    %vm3598 = vcmask 634352
    %3599 = vst.msk [vmem:[#allocation4 + $0x4] sm:$0xf] %vm3598, %v3596
    %v3600 = vld [vmem:[#allocation3 + $0xa] sm:$0x1]
    %v3601 = vld [vmem:[#allocation3 + $0x1a] sm:$0x1]
    %v3602 = vld [vmem:[#allocation3 + $0x2a] sm:$0x1]
    %v3603 = vld [vmem:[#allocation3 + $0x3a] sm:$0x1]
    %v3608 = vrot.slane %v3601, 7
    %v3609 = vsel %vm3138, %v3608, %v3600
    %v3610 = vsel %vm3140, %v3608, %v3609
    %v3611 = vrot.slane %v3602, 6
    %v3612 = vsel %vm3143, %v3611, %v3610
    %v3613 = vsel %vm3145, %v3611, %v3612
    %v3614 = vrot.slane %v3603, 5
    %v3615 = vsel %vm3148, %v3614, %v3613
    %v3616 = vsel %vm3150, %v3614, %v3615
    %3617 = vrot.lane.b32.xlu0 %v3616, 78
    %v3618 = vpop.permute.xlu0 %3617
    %vm3620 = vcmask 659056
    %3621 = vst.msk [vmem:[#allocation4 + $0x4] sm:$0xf] %vm3620, %v3618
    %v3622 = vld [vmem:[#allocation2 + $0xb] sm:$0x1]
    %v3623 = vld [vmem:[#allocation2 + $0x1b] sm:$0x1]
    %v3624 = vld [vmem:[#allocation2 + $0x2b] sm:$0x1]
    %v3625 = vld [vmem:[#allocation2 + $0x3b] sm:$0x1]
    %v3630 = vrot.slane %v3623, 7
    %v3631 = vsel %vm3138, %v3630, %v3622
    %v3632 = vsel %vm3140, %v3630, %v3631
    %v3633 = vrot.slane %v3624, 6
    %v3634 = vsel %vm3143, %v3633, %v3632
    %v3635 = vsel %vm3145, %v3633, %v3634
    %v3636 = vrot.slane %v3625, 5
    %v3637 = vsel %vm3148, %v3636, %v3635
    %v3638 = vsel %vm3150, %v3636, %v3637
    %3639 = vrot.lane.b32.xlu0 %v3638, 81
    %v3640 = vpop.permute.xlu0 %3639
    %vm3642 = vcmask 790152
    %3643 = vst.msk [vmem:[#allocation4 + $0x4] sm:$0xf] %vm3642, %v3640
    %v3644 = vld [vmem:[#allocation3 + $0xb] sm:$0x1]
    %v3645 = vld [vmem:[#allocation3 + $0x1b] sm:$0x1]
    %v3646 = vld [vmem:[#allocation3 + $0x2b] sm:$0x1]
    %v3647 = vld [vmem:[#allocation3 + $0x3b] sm:$0x1]
    %v3652 = vrot.slane %v3645, 7
    %v3653 = vsel %vm3138, %v3652, %v3644
    %v3654 = vsel %vm3140, %v3652, %v3653
    %v3655 = vrot.slane %v3646, 6
    %v3656 = vsel %vm3143, %v3655, %v3654
    %v3657 = vsel %vm3145, %v3655, %v3656
    %v3658 = vrot.slane %v3647, 5
    %v3659 = vsel %vm3148, %v3658, %v3657
    %v3660 = vsel %vm3150, %v3658, %v3659
    %3661 = vrot.lane.b32.xlu0 %v3660, 97
    %v3662 = vpop.permute.xlu0 %3661
    %vm3664 = vcmask 814856
    %3665 = vst.msk [vmem:[#allocation4 + $0x4] sm:$0xf] %vm3664, %v3662
    %v3666 = vld [vmem:[#allocation2 + $0xc] sm:$0x1]
    %v3667 = vld [vmem:[#allocation2 + $0x1c] sm:$0x1]
    %v3668 = vld [vmem:[#allocation2 + $0x2c] sm:$0x1]
    %v3669 = vld [vmem:[#allocation2 + $0x3c] sm:$0x1]
    %v3674 = vrot.slane %v3667, 7
    %v3675 = vsel %vm3138, %v3674, %v3666
    %v3676 = vsel %vm3140, %v3674, %v3675
    %v3677 = vrot.slane %v3668, 6
    %v3678 = vsel %vm3143, %v3677, %v3676
    %v3679 = vsel %vm3145, %v3677, %v3678
    %v3680 = vrot.slane %v3669, 5
    %v3681 = vsel %vm3148, %v3680, %v3679
    %v3682 = vsel %vm3150, %v3680, %v3681
    %3683 = vrot.lane.b32.xlu0 %v3682, 100
    %v3684 = vpop.permute.xlu0 %3683
    %vm3686 = vcmask 945952
    %3687 = vst.msk [vmem:[#allocation4 + $0x4] sm:$0xf] %vm3686, %v3684
    %v3688 = vld [vmem:[#allocation3 + $0xc] sm:$0x1]
    %v3689 = vld [vmem:[#allocation3 + $0x1c] sm:$0x1]
    %v3690 = vld [vmem:[#allocation3 + $0x2c] sm:$0x1]
    %v3691 = vld [vmem:[#allocation3 + $0x3c] sm:$0x1]
    %v3696 = vrot.slane %v3689, 7
    %v3697 = vsel %vm3138, %v3696, %v3688
    %v3698 = vsel %vm3140, %v3696, %v3697
    %v3699 = vrot.slane %v3690, 6
    %v3700 = vsel %vm3143, %v3699, %v3698
    %v3701 = vsel %vm3145, %v3699, %v3700
    %v3702 = vrot.slane %v3691, 5
    %v3703 = vsel %vm3148, %v3702, %v3701
    %v3704 = vsel %vm3150, %v3702, %v3703
    %3705 = vrot.lane.b32.xlu0 %v3704, 116
    %v3706 = vpop.permute.xlu0 %3705
    %vm3708 = vcmask 970656
    %3709 = vst.msk [vmem:[#allocation4 + $0x4] sm:$0xf] %vm3708, %v3706
    %v3710 = vld [vmem:[#allocation2 + $0xd] sm:$0x1]
    %v3711 = vld [vmem:[#allocation2 + $0x1d] sm:$0x1]
    %v3712 = vld [vmem:[#allocation2 + $0x2d] sm:$0x1]
    %v3713 = vld [vmem:[#allocation2 + $0x3d] sm:$0x1]
    %v3718 = vrot.slane %v3711, 7
    %v3719 = vsel %vm3138, %v3718, %v3710
    %v3720 = vsel %vm3140, %v3718, %v3719
    %v3721 = vrot.slane %v3712, 6
    %v3722 = vsel %vm3143, %v3721, %v3720
    %v3723 = vsel %vm3145, %v3721, %v3722
    %v3724 = vrot.slane %v3713, 5
    %v3725 = vsel %vm3148, %v3724, %v3723
    %v3726 = vsel %vm3150, %v3724, %v3725
    %3727 = vrot.lane.b32.xlu0 %v3726, 119
    %v3728 = vpop.permute.xlu0 %3727
    %v3729 = vrot.slane %v3728, 4
    %vm3730 = vcmask 973824
    %v3731 = vsel %vm3730, %v3729, %v3728
    %vm3733 = vcmask 1044408
    %vm3734 = vcmask 56324
    %vm3735 = vmor %vm3734, %vm3733
    %3736 = vst.msk [vmem:[#allocation4 + $0x4] sm:$0xff] %vm3735, %v3731
    %v3737 = vld [vmem:[#allocation3 + $0xd] sm:$0x1]
    %v3738 = vld [vmem:[#allocation3 + $0x1d] sm:$0x1]
    %v3739 = vld [vmem:[#allocation3 + $0x2d] sm:$0x1]
    %v3740 = vld [vmem:[#allocation3 + $0x3d] sm:$0x1]
    %v3745 = vrot.slane %v3738, 7
    %v3746 = vsel %vm3138, %v3745, %v3737
    %v3747 = vsel %vm3140, %v3745, %v3746
    %v3748 = vrot.slane %v3739, 6
    %v3749 = vsel %vm3143, %v3748, %v3747
    %v3750 = vsel %vm3145, %v3748, %v3749
    %v3751 = vrot.slane %v3740, 5
    %v3752 = vsel %vm3148, %v3751, %v3750
    %v3753 = vsel %vm3150, %v3751, %v3752
    %3754 = vrot.lane.b32.xlu0 %v3753, 7
    %v3755 = vpop.permute.xlu0 %3754
    %vm3757 = vcmask 76856
    %3758 = vst.msk [vmem:[#allocation4 + $0x8] sm:$0xf] %vm3757, %v3755
    %v3759 = vld [vmem:[#allocation2 + $0xe] sm:$0x1]
    %v3760 = vld [vmem:[#allocation2 + $0x1e] sm:$0x1]
    %v3761 = vld [vmem:[#allocation2 + $0x2e] sm:$0x1]
    %v3762 = vld [vmem:[#allocation2 + $0x3e] sm:$0x1]
    %v3767 = vrot.slane %v3760, 7
    %v3768 = vsel %vm3138, %v3767, %v3759
    %v3769 = vsel %vm3140, %v3767, %v3768
    %v3770 = vrot.slane %v3761, 6
    %v3771 = vsel %vm3143, %v3770, %v3769
    %v3772 = vsel %vm3145, %v3770, %v3771
    %v3773 = vrot.slane %v3762, 5
    %v3774 = vsel %vm3148, %v3773, %v3772
    %v3775 = vsel %vm3150, %v3773, %v3774
    %3776 = vrot.lane.b32.xlu0 %v3775, 10
    %v3777 = vpop.permute.xlu0 %3776
    %vm3779 = vcmask 207952
    %3780 = vst.msk [vmem:[#allocation4 + $0x8] sm:$0xf] %vm3779, %v3777
    %v3781 = vld [vmem:[#allocation3 + $0xe] sm:$0x1]
    %v3782 = vld [vmem:[#allocation3 + $0x1e] sm:$0x1]
    %v3783 = vld [vmem:[#allocation3 + $0x2e] sm:$0x1]
    %v3784 = vld [vmem:[#allocation3 + $0x3e] sm:$0x1]
    %v3789 = vrot.slane %v3782, 7
    %v3790 = vsel %vm3138, %v3789, %v3781
    %v3791 = vsel %vm3140, %v3789, %v3790
    %v3792 = vrot.slane %v3783, 6
    %v3793 = vsel %vm3143, %v3792, %v3791
    %v3794 = vsel %vm3145, %v3792, %v3793
    %v3795 = vrot.slane %v3784, 5
    %v3796 = vsel %vm3148, %v3795, %v3794
    %v3797 = vsel %vm3150, %v3795, %v3796
    %3798 = vrot.lane.b32.xlu0 %v3797, 26
    %v3799 = vpop.permute.xlu0 %3798
    %vm3801 = vcmask 232656
    %3802 = vst.msk [vmem:[#allocation4 + $0x8] sm:$0xf] %vm3801, %v3799
    %v3803 = vld [vmem:[#allocation2 + $0xf] sm:$0x1]
    %v3804 = vld [vmem:[#allocation2 + $0x1f] sm:$0x1]
    %v3805 = vld [vmem:[#allocation2 + $0x2f] sm:$0x1]
    %v3806 = vld [vmem:[#allocation2 + $0x3f] sm:$0x1]
    %v3811 = vrot.slane %v3804, 7
    %v3812 = vsel %vm3138, %v3811, %v3803
    %v3813 = vsel %vm3140, %v3811, %v3812
    %v3814 = vrot.slane %v3805, 6
    %v3815 = vsel %vm3143, %v3814, %v3813
    %v3816 = vsel %vm3145, %v3814, %v3815
    %v3817 = vrot.slane %v3806, 5
    %v3818 = vsel %vm3148, %v3817, %v3816
    %v3819 = vsel %vm3150, %v3817, %v3818
    %3820 = vrot.lane.b32.xlu0 %v3819, 29
    %v3821 = vpop.permute.xlu0 %3820
    %vm3823 = vcmask 363752
    %3824 = vst.msk [vmem:[#allocation4 + $0x8] sm:$0xf] %vm3823, %v3821
    %v3825 = vld [vmem:[#allocation3 + $0xf] sm:$0x1]
    %v3826 = vld [vmem:[#allocation3 + $0x1f] sm:$0x1]
    %v3827 = vld [vmem:[#allocation3 + $0x2f] sm:$0x1]
    %v3828 = vld [vmem:[#allocation3 + $0x3f] sm:$0x1]
    %v3833 = vrot.slane %v3826, 7
    %v3834 = vsel %vm3138, %v3833, %v3825
    %v3835 = vsel %vm3140, %v3833, %v3834
    %v3836 = vrot.slane %v3827, 6
    %v3837 = vsel %vm3143, %v3836, %v3835
    %v3838 = vsel %vm3145, %v3836, %v3837
    %v3839 = vrot.slane %v3828, 5
    %v3840 = vsel %vm3148, %v3839, %v3838
    %v3841 = vsel %vm3150, %v3839, %v3840
    %3842 = vrot.lane.b32.xlu0 %v3841, 45
    %v3843 = vpop.permute.xlu0 %3842
    %vm3845 = vcmask 388456
    %3846 = vst.msk [vmem:[#allocation4 + $0x8] sm:$0xf] %vm3845, %v3843
    %v3847 = vld [vmem:[#allocation4] sm:$0xff]
    %v3848 = vld [vmem:[#allocation4 + $0x8] sm:$0xf]
    %v3849 = vld [vmem:[%s5] sm:$0xff]
    %v3850 = vld [vmem:[%s5 + $0x8] sm:$0xff]
    %v3851 = vld [vmem:[%s5 + $0x10] sm:$0xff]
    %v3852 = vld [vmem:[%s5 + $0x18] sm:$0xff]
    %v3853 = vld [vmem:[%s5 + $0x20] sm:$0xff]
    %v3854 = vld [vmem:[%s5 + $0x28] sm:$0xff]
    %v3855 = vld [vmem:[%s5 + $0x30] sm:$0xff]
    %v3856 = vld [vmem:[%s5 + $0x38] sm:$0xff]
    %v3857 = vld [vmem:[%s5 + $0x40] sm:$0xff]
    %v3858 = vld [vmem:[%s5 + $0x48] sm:$0xff]
    %v3859 = vld [vmem:[%s5 + $0x50] sm:$0xff]
    %v3860 = vld [vmem:[%s5 + $0x58] sm:$0xff]
    %v3861 = vld [vmem:[%s5 + $0x60] sm:$0xff]
    %v3862 = vld [vmem:[%s5 + $0x68] sm:$0xff]
    %v3863 = vld [vmem:[%s5 + $0x70] sm:$0xff]
    %v3864 = vld [vmem:[%s5 + $0x78] sm:$0xff]
    %v3865 = vld [vmem:[%s5 + $0x80] sm:$0xff]
    %v3866 = vld [vmem:[%s5 + $0x88] sm:$0xff]
    %v3867 = vld [vmem:[%s5 + $0x90] sm:$0xff]
    %v3868 = vld [vmem:[%s5 + $0x98] sm:$0xff]
    %v3869 = vld [vmem:[%s5 + $0xa0] sm:$0xff]
    %v3870 = vld [vmem:[%s5 + $0xa8] sm:$0xff]
    %v3871 = vld [vmem:[%s5 + $0xb0] sm:$0xff]
    %v3872 = vld [vmem:[%s5 + $0xb8] sm:$0xff]
    %v3873 = vld [vmem:[%s5 + $0xc0] sm:$0xff]
    %v3874 = vld [vmem:[%s5 + $0xc8] sm:$0xff]
    %v3875 = vld [vmem:[%s5 + $0xd0] sm:$0xff]
    %v3876 = vld [vmem:[%s5 + $0xd8] sm:$0xff]
    %v3877 = vld [vmem:[%s5 + $0xe0] sm:$0xff]
    %v3878 = vld [vmem:[%s5 + $0xe8] sm:$0xff]
    %v3879 = vld [vmem:[%s5 + $0xf0] sm:$0xff]
    %v3880 = vld [vmem:[%s5 + $0xf8] sm:$0xff]
    %v3881 = vld [vmem:[%s5 + $0x100] sm:$0xff]
    %v3882 = vld [vmem:[%s5 + $0x108] sm:$0xff]
    %v3883 = vld [vmem:[%s5 + $0x110] sm:$0xff]
    %v3884 = vld [vmem:[%s5 + $0x118] sm:$0xff]
    %v3885 = vld [vmem:[%s5 + $0x120] sm:$0xff]
    %v3886 = vld [vmem:[%s5 + $0x128] sm:$0xff]
    %v3887 = vld [vmem:[%s6] sm:$0x1]
    %v3889 = vperm.slane %v3887, 0
    %3893 = vst [vmem:[#allocation1] ss:$2 sm:$0xff] %v3847
    %s3894 = scalar_lea.vmem [#allocation1], 16
    %3895 = vst [vmem:[%s3894] ss:$2 sm:$0xff] %v3848
    %v3896 = vld.sshfl [vmem:[#allocation1] sm:$0xff pattern:$0x75316420]
    %v3897 = vld.sshfl [vmem:[#allocation1 + $0x8] sm:$0xff pattern:$0x75316420]
    %v3898 = vld.sshfl [vmem:[#allocation1 + $0x10] sm:$0xff pattern:$0x75316420]
    %vm3901 = vcmask 392192
    %v3902 = vsel %vm3901, %v3898, 0
    %v3904 = vand.u32 %v3864, 4294901760
    %3905 = vmatpush.msra.mxu0 %v3904
    %v3906 = vand.u32 %v3863, 4294901760
    %3907 = vmatpush.msra.mxu0 %v3906
    %v3908 = vand.u32 %v3862, 4294901760
    %3909 = vmatpush.msra.mxu0 %v3908
    %v3910 = vand.u32 %v3861, 4294901760
    %3911 = vmatpush.msra.mxu0 %v3910
    %v3912 = vand.u32 %v3860, 4294901760
    %3913 = vmatpush.msra.mxu0 %v3912
    %v3914 = vand.u32 %v3859, 4294901760
    %3915 = vmatpush.msra.mxu0 %v3914
    %v3916 = vand.u32 %v3858, 4294901760
    %3917 = vmatpush.msra.mxu0 %v3916
    %v3918 = vand.u32 %v3857, 4294901760
    %3919 = vmatpush.msra.mxu0 %v3918
    %v3920 = vand.u32 %v3856, 4294901760
    %3921 = vmatpush.msra.mxu0 %v3920
    %v3922 = vand.u32 %v3855, 4294901760
    %3923 = vmatpush.msra.mxu0 %v3922
    %v3924 = vand.u32 %v3854, 4294901760
    %3925 = vmatpush.msra.mxu0 %v3924
    %v3926 = vand.u32 %v3853, 4294901760
    %3927 = vmatpush.msra.mxu0 %v3926
    %v3928 = vand.u32 %v3852, 4294901760
    %3929 = vmatpush.msra.mxu0 %v3928
    %v3930 = vand.u32 %v3851, 4294901760
    %3931 = vmatpush.msra.mxu0 %v3930
    %v3932 = vand.u32 %v3850, 4294901760
    %3933 = vmatpush.msra.mxu0 %v3932
    %v3934 = vand.u32 %v3849, 4294901760
    %3935 = vmatpush.msra.mxu0 %v3934
    %v3936 = vand.u32 %v3896, 4294901760
    %v3937 = vsub.f32 %v3896, %v3936
    %v3938 = vand.u32 %v3937, 4294901760
    %v3939 = vsub.f32 %v3937, %v3938
    %v3940 = vand.u32 %v3939, 4294901760
    %3941 = vmatmul.f32.gmra.mxu0 %v3940
    %v3942 = vpop.f32.mrf.mxu0
    %v3943 = vadd.f32 %v3889, %v3942
    %3944 = vdwg.mxu0
    %v3945 = vand.u32 %v3864, 4294901760
    %v3946 = vsub.f32 %v3864, %v3945
    %v3947 = vand.u32 %v3946, 4294901760
    %v3948 = vsub.f32 %v3946, %v3947
    %v3949 = vand.u32 %v3948, 4294901760
    %3950 = vmatpush.msra.mxu0 %v3949
    %v3951 = vand.u32 %v3863, 4294901760
    %v3952 = vsub.f32 %v3863, %v3951
    %v3953 = vand.u32 %v3952, 4294901760
    %v3954 = vsub.f32 %v3952, %v3953
    %v3955 = vand.u32 %v3954, 4294901760
    %3956 = vmatpush.msra.mxu0 %v3955
    %v3957 = vand.u32 %v3862, 4294901760
    %v3958 = vsub.f32 %v3862, %v3957
    %v3959 = vand.u32 %v3958, 4294901760
    %v3960 = vsub.f32 %v3958, %v3959
    %v3961 = vand.u32 %v3960, 4294901760
    %3962 = vmatpush.msra.mxu0 %v3961
    %v3963 = vand.u32 %v3861, 4294901760
    %v3964 = vsub.f32 %v3861, %v3963
    %v3965 = vand.u32 %v3964, 4294901760
    %v3966 = vsub.f32 %v3964, %v3965
    %v3967 = vand.u32 %v3966, 4294901760
    %3968 = vmatpush.msra.mxu0 %v3967
    %v3969 = vand.u32 %v3860, 4294901760
    %v3970 = vsub.f32 %v3860, %v3969
    %v3971 = vand.u32 %v3970, 4294901760
    %v3972 = vsub.f32 %v3970, %v3971
    %v3973 = vand.u32 %v3972, 4294901760
    %3974 = vmatpush.msra.mxu0 %v3973
    %v3975 = vand.u32 %v3859, 4294901760
    %v3976 = vsub.f32 %v3859, %v3975
    %v3977 = vand.u32 %v3976, 4294901760
    %v3978 = vsub.f32 %v3976, %v3977
    %v3979 = vand.u32 %v3978, 4294901760
    %3980 = vmatpush.msra.mxu0 %v3979
    %v3981 = vand.u32 %v3858, 4294901760
    %v3982 = vsub.f32 %v3858, %v3981
    %v3983 = vand.u32 %v3982, 4294901760
    %v3984 = vsub.f32 %v3982, %v3983
    %v3985 = vand.u32 %v3984, 4294901760
    %3986 = vmatpush.msra.mxu0 %v3985
    %v3987 = vand.u32 %v3857, 4294901760
    %v3988 = vsub.f32 %v3857, %v3987
    %v3989 = vand.u32 %v3988, 4294901760
    %v3990 = vsub.f32 %v3988, %v3989
    %v3991 = vand.u32 %v3990, 4294901760
    %3992 = vmatpush.msra.mxu0 %v3991
    %v3993 = vand.u32 %v3856, 4294901760
    %v3994 = vsub.f32 %v3856, %v3993
    %v3995 = vand.u32 %v3994, 4294901760
    %v3996 = vsub.f32 %v3994, %v3995
    %v3997 = vand.u32 %v3996, 4294901760
    %3998 = vmatpush.msra.mxu0 %v3997
    %v3999 = vand.u32 %v3855, 4294901760
    %v4000 = vsub.f32 %v3855, %v3999
    %v4001 = vand.u32 %v4000, 4294901760
    %v4002 = vsub.f32 %v4000, %v4001
    %v4003 = vand.u32 %v4002, 4294901760
    %4004 = vmatpush.msra.mxu0 %v4003
    %v4005 = vand.u32 %v3854, 4294901760
    %v4006 = vsub.f32 %v3854, %v4005
    %v4007 = vand.u32 %v4006, 4294901760
    %v4008 = vsub.f32 %v4006, %v4007
    %v4009 = vand.u32 %v4008, 4294901760
    %4010 = vmatpush.msra.mxu0 %v4009
    %v4011 = vand.u32 %v3853, 4294901760
    %v4012 = vsub.f32 %v3853, %v4011
    %v4013 = vand.u32 %v4012, 4294901760
    %v4014 = vsub.f32 %v4012, %v4013
    %v4015 = vand.u32 %v4014, 4294901760
    %4016 = vmatpush.msra.mxu0 %v4015
    %v4017 = vand.u32 %v3852, 4294901760
    %v4018 = vsub.f32 %v3852, %v4017
    %v4019 = vand.u32 %v4018, 4294901760
    %v4020 = vsub.f32 %v4018, %v4019
    %v4021 = vand.u32 %v4020, 4294901760
    %4022 = vmatpush.msra.mxu0 %v4021
    %v4023 = vand.u32 %v3851, 4294901760
    %v4024 = vsub.f32 %v3851, %v4023
    %v4025 = vand.u32 %v4024, 4294901760
    %v4026 = vsub.f32 %v4024, %v4025
    %v4027 = vand.u32 %v4026, 4294901760
    %4028 = vmatpush.msra.mxu0 %v4027
    %v4029 = vand.u32 %v3850, 4294901760
    %v4030 = vsub.f32 %v3850, %v4029
    %v4031 = vand.u32 %v4030, 4294901760
    %v4032 = vsub.f32 %v4030, %v4031
    %v4033 = vand.u32 %v4032, 4294901760
    %4034 = vmatpush.msra.mxu0 %v4033
    %v4035 = vand.u32 %v3849, 4294901760
    %v4036 = vsub.f32 %v3849, %v4035
    %v4037 = vand.u32 %v4036, 4294901760
    %v4038 = vsub.f32 %v4036, %v4037
    %v4039 = vand.u32 %v4038, 4294901760
    %4040 = vmatpush.msra.mxu0 %v4039
    %v4041 = vand.u32 %v3896, 4294901760
    %4042 = vmatmul.f32.gmra.mxu0 %v4041
    %v4043 = vpop.f32.mrf.mxu0
    %v4044 = vadd.f32 %v3943, %v4043
    %4045 = vdwg.mxu0
    %v4046 = vand.u32 %v3864, 4294901760
    %v4047 = vsub.f32 %v3864, %v4046
    %4048 = vmatpush.msra.mxu0 %v4047
    %v4049 = vand.u32 %v3863, 4294901760
    %v4050 = vsub.f32 %v3863, %v4049
    %4051 = vmatpush.msra.mxu0 %v4050
    %v4052 = vand.u32 %v3862, 4294901760
    %v4053 = vsub.f32 %v3862, %v4052
    %4054 = vmatpush.msra.mxu0 %v4053
    %v4055 = vand.u32 %v3861, 4294901760
    %v4056 = vsub.f32 %v3861, %v4055
    %4057 = vmatpush.msra.mxu0 %v4056
    %v4058 = vand.u32 %v3860, 4294901760
    %v4059 = vsub.f32 %v3860, %v4058
    %4060 = vmatpush.msra.mxu0 %v4059
    %v4061 = vand.u32 %v3859, 4294901760
    %v4062 = vsub.f32 %v3859, %v4061
    %4063 = vmatpush.msra.mxu0 %v4062
    %v4064 = vand.u32 %v3858, 4294901760
    %v4065 = vsub.f32 %v3858, %v4064
    %4066 = vmatpush.msra.mxu0 %v4065
    %v4067 = vand.u32 %v3857, 4294901760
    %v4068 = vsub.f32 %v3857, %v4067
    %4069 = vmatpush.msra.mxu0 %v4068
    %v4070 = vand.u32 %v3856, 4294901760
    %v4071 = vsub.f32 %v3856, %v4070
    %4072 = vmatpush.msra.mxu0 %v4071
    %v4073 = vand.u32 %v3855, 4294901760
    %v4074 = vsub.f32 %v3855, %v4073
    %4075 = vmatpush.msra.mxu0 %v4074
    %v4076 = vand.u32 %v3854, 4294901760
    %v4077 = vsub.f32 %v3854, %v4076
    %4078 = vmatpush.msra.mxu0 %v4077
    %v4079 = vand.u32 %v3853, 4294901760
    %v4080 = vsub.f32 %v3853, %v4079
    %4081 = vmatpush.msra.mxu0 %v4080
    %v4082 = vand.u32 %v3852, 4294901760
    %v4083 = vsub.f32 %v3852, %v4082
    %4084 = vmatpush.msra.mxu0 %v4083
    %v4085 = vand.u32 %v3851, 4294901760
    %v4086 = vsub.f32 %v3851, %v4085
    %4087 = vmatpush.msra.mxu0 %v4086
    %v4088 = vand.u32 %v3850, 4294901760
    %v4089 = vsub.f32 %v3850, %v4088
    %4090 = vmatpush.msra.mxu0 %v4089
    %v4091 = vand.u32 %v3849, 4294901760
    %v4092 = vsub.f32 %v3849, %v4091
    %4093 = vmatpush.msra.mxu0 %v4092
    %v4094 = vand.u32 %v3896, 4294901760
    %v4095 = vsub.f32 %v3896, %v4094
    %4096 = vmatmul.f32.gmra.mxu0 %v4095
    %v4097 = vpop.f32.mrf.mxu0
    %v4098 = vadd.f32 %v4044, %v4097
    %4099 = vdwg.mxu0
    %v4100 = vand.u32 %v3864, 4294901760
    %4101 = vmatpush.msra.mxu0 %v4100
    %v4102 = vand.u32 %v3863, 4294901760
    %4103 = vmatpush.msra.mxu0 %v4102
    %v4104 = vand.u32 %v3862, 4294901760
    %4105 = vmatpush.msra.mxu0 %v4104
    %v4106 = vand.u32 %v3861, 4294901760
    %4107 = vmatpush.msra.mxu0 %v4106
    %v4108 = vand.u32 %v3860, 4294901760
    %4109 = vmatpush.msra.mxu0 %v4108
    %v4110 = vand.u32 %v3859, 4294901760
    %4111 = vmatpush.msra.mxu0 %v4110
    %v4112 = vand.u32 %v3858, 4294901760
    %4113 = vmatpush.msra.mxu0 %v4112
    %v4114 = vand.u32 %v3857, 4294901760
    %4115 = vmatpush.msra.mxu0 %v4114
    %v4116 = vand.u32 %v3856, 4294901760
    %4117 = vmatpush.msra.mxu0 %v4116
    %v4118 = vand.u32 %v3855, 4294901760
    %4119 = vmatpush.msra.mxu0 %v4118
    %v4120 = vand.u32 %v3854, 4294901760
    %4121 = vmatpush.msra.mxu0 %v4120
    %v4122 = vand.u32 %v3853, 4294901760
    %4123 = vmatpush.msra.mxu0 %v4122
    %v4124 = vand.u32 %v3852, 4294901760
    %4125 = vmatpush.msra.mxu0 %v4124
    %v4126 = vand.u32 %v3851, 4294901760
    %4127 = vmatpush.msra.mxu0 %v4126
    %v4128 = vand.u32 %v3850, 4294901760
    %4129 = vmatpush.msra.mxu0 %v4128
    %v4130 = vand.u32 %v3849, 4294901760
    %4131 = vmatpush.msra.mxu0 %v4130
    %v4132 = vand.u32 %v3896, 4294901760
    %v4133 = vsub.f32 %v3896, %v4132
    %v4134 = vand.u32 %v4133, 4294901760
    %4135 = vmatmul.f32.gmra.mxu0 %v4134
    %v4136 = vpop.f32.mrf.mxu0
    %v4137 = vadd.f32 %v4098, %v4136
    %4138 = vdwg.mxu0
    %v4139 = vand.u32 %v3864, 4294901760
    %v4140 = vsub.f32 %v3864, %v4139
    %v4141 = vand.u32 %v4140, 4294901760
    %4142 = vmatpush.msra.mxu0 %v4141
    %v4143 = vand.u32 %v3863, 4294901760
    %v4144 = vsub.f32 %v3863, %v4143
    %v4145 = vand.u32 %v4144, 4294901760
    %4146 = vmatpush.msra.mxu0 %v4145
    %v4147 = vand.u32 %v3862, 4294901760
    %v4148 = vsub.f32 %v3862, %v4147
    %v4149 = vand.u32 %v4148, 4294901760
    %4150 = vmatpush.msra.mxu0 %v4149
    %v4151 = vand.u32 %v3861, 4294901760
    %v4152 = vsub.f32 %v3861, %v4151
    %v4153 = vand.u32 %v4152, 4294901760
    %4154 = vmatpush.msra.mxu0 %v4153
    %v4155 = vand.u32 %v3860, 4294901760
    %v4156 = vsub.f32 %v3860, %v4155
    %v4157 = vand.u32 %v4156, 4294901760
    %4158 = vmatpush.msra.mxu0 %v4157
    %v4159 = vand.u32 %v3859, 4294901760
    %v4160 = vsub.f32 %v3859, %v4159
    %v4161 = vand.u32 %v4160, 4294901760
    %4162 = vmatpush.msra.mxu0 %v4161
    %v4163 = vand.u32 %v3858, 4294901760
    %v4164 = vsub.f32 %v3858, %v4163
    %v4165 = vand.u32 %v4164, 4294901760
    %4166 = vmatpush.msra.mxu0 %v4165
    %v4167 = vand.u32 %v3857, 4294901760
    %v4168 = vsub.f32 %v3857, %v4167
    %v4169 = vand.u32 %v4168, 4294901760
    %4170 = vmatpush.msra.mxu0 %v4169
    %v4171 = vand.u32 %v3856, 4294901760
    %v4172 = vsub.f32 %v3856, %v4171
    %v4173 = vand.u32 %v4172, 4294901760
    %4174 = vmatpush.msra.mxu0 %v4173
    %v4175 = vand.u32 %v3855, 4294901760
    %v4176 = vsub.f32 %v3855, %v4175
    %v4177 = vand.u32 %v4176, 4294901760
    %4178 = vmatpush.msra.mxu0 %v4177
    %v4179 = vand.u32 %v3854, 4294901760
    %v4180 = vsub.f32 %v3854, %v4179
    %v4181 = vand.u32 %v4180, 4294901760
    %4182 = vmatpush.msra.mxu0 %v4181
    %v4183 = vand.u32 %v3853, 4294901760
    %v4184 = vsub.f32 %v3853, %v4183
    %v4185 = vand.u32 %v4184, 4294901760
    %4186 = vmatpush.msra.mxu0 %v4185
    %v4187 = vand.u32 %v3852, 4294901760
    %v4188 = vsub.f32 %v3852, %v4187
    %v4189 = vand.u32 %v4188, 4294901760
    %4190 = vmatpush.msra.mxu0 %v4189
    %v4191 = vand.u32 %v3851, 4294901760
    %v4192 = vsub.f32 %v3851, %v4191
    %v4193 = vand.u32 %v4192, 4294901760
    %4194 = vmatpush.msra.mxu0 %v4193
    %v4195 = vand.u32 %v3850, 4294901760
    %v4196 = vsub.f32 %v3850, %v4195
    %v4197 = vand.u32 %v4196, 4294901760
    %4198 = vmatpush.msra.mxu0 %v4197
    %v4199 = vand.u32 %v3849, 4294901760
    %v4200 = vsub.f32 %v3849, %v4199
    %v4201 = vand.u32 %v4200, 4294901760
    %4202 = vmatpush.msra.mxu0 %v4201
    %v4203 = vand.u32 %v3896, 4294901760
    %4204 = vmatmul.f32.gmra.mxu0 %v4203
    %v4205 = vpop.f32.mrf.mxu0
    %v4206 = vadd.f32 %v4137, %v4205
    %4207 = vdwg.mxu0
    %v4208 = vand.u32 %v3864, 4294901760
    %4209 = vmatpush.msra.mxu0 %v4208
    %v4210 = vand.u32 %v3863, 4294901760
    %4211 = vmatpush.msra.mxu0 %v4210
    %v4212 = vand.u32 %v3862, 4294901760
    %4213 = vmatpush.msra.mxu0 %v4212
    %v4214 = vand.u32 %v3861, 4294901760
    %4215 = vmatpush.msra.mxu0 %v4214
    %v4216 = vand.u32 %v3860, 4294901760
    %4217 = vmatpush.msra.mxu0 %v4216
    %v4218 = vand.u32 %v3859, 4294901760
    %4219 = vmatpush.msra.mxu0 %v4218
    %v4220 = vand.u32 %v3858, 4294901760
    %4221 = vmatpush.msra.mxu0 %v4220
    %v4222 = vand.u32 %v3857, 4294901760
    %4223 = vmatpush.msra.mxu0 %v4222
    %v4224 = vand.u32 %v3856, 4294901760
    %4225 = vmatpush.msra.mxu0 %v4224
    %v4226 = vand.u32 %v3855, 4294901760
    %4227 = vmatpush.msra.mxu0 %v4226
    %v4228 = vand.u32 %v3854, 4294901760
    %4229 = vmatpush.msra.mxu0 %v4228
    %v4230 = vand.u32 %v3853, 4294901760
    %4231 = vmatpush.msra.mxu0 %v4230
    %v4232 = vand.u32 %v3852, 4294901760
    %4233 = vmatpush.msra.mxu0 %v4232
    %v4234 = vand.u32 %v3851, 4294901760
    %4235 = vmatpush.msra.mxu0 %v4234
    %v4236 = vand.u32 %v3850, 4294901760
    %4237 = vmatpush.msra.mxu0 %v4236
    %v4238 = vand.u32 %v3849, 4294901760
    %4239 = vmatpush.msra.mxu0 %v4238
    %v4240 = vand.u32 %v3896, 4294901760
    %4241 = vmatmul.f32.gmra.mxu0 %v4240
    %v4242 = vpop.f32.mrf.mxu0
    %v4243 = vadd.f32 %v4206, %v4242
    %4244 = vdwg.mxu0
    %v4245 = vand.u32 %v3880, 4294901760
    %4246 = vmatpush.msra.mxu0 %v4245
    %v4247 = vand.u32 %v3879, 4294901760
    %4248 = vmatpush.msra.mxu0 %v4247
    %v4249 = vand.u32 %v3878, 4294901760
    %4250 = vmatpush.msra.mxu0 %v4249
    %v4251 = vand.u32 %v3877, 4294901760
    %4252 = vmatpush.msra.mxu0 %v4251
    %v4253 = vand.u32 %v3876, 4294901760
    %4254 = vmatpush.msra.mxu0 %v4253
    %v4255 = vand.u32 %v3875, 4294901760
    %4256 = vmatpush.msra.mxu0 %v4255
    %v4257 = vand.u32 %v3874, 4294901760
    %4258 = vmatpush.msra.mxu0 %v4257
    %v4259 = vand.u32 %v3873, 4294901760
    %4260 = vmatpush.msra.mxu0 %v4259
    %v4261 = vand.u32 %v3872, 4294901760
    %4262 = vmatpush.msra.mxu0 %v4261
    %v4263 = vand.u32 %v3871, 4294901760
    %4264 = vmatpush.msra.mxu0 %v4263
    %v4265 = vand.u32 %v3870, 4294901760
    %4266 = vmatpush.msra.mxu0 %v4265
    %v4267 = vand.u32 %v3869, 4294901760
    %4268 = vmatpush.msra.mxu0 %v4267
    %v4269 = vand.u32 %v3868, 4294901760
    %4270 = vmatpush.msra.mxu0 %v4269
    %v4271 = vand.u32 %v3867, 4294901760
    %4272 = vmatpush.msra.mxu0 %v4271
    %v4273 = vand.u32 %v3866, 4294901760
    %4274 = vmatpush.msra.mxu0 %v4273
    %v4275 = vand.u32 %v3865, 4294901760
    %4276 = vmatpush.msra.mxu0 %v4275
    %v4277 = vand.u32 %v3897, 4294901760
    %v4278 = vsub.f32 %v3897, %v4277
    %v4279 = vand.u32 %v4278, 4294901760
    %v4280 = vsub.f32 %v4278, %v4279
    %v4281 = vand.u32 %v4280, 4294901760
    %4282 = vmatmul.f32.gmra.mxu0 %v4281
    %v4283 = vpop.f32.mrf.mxu0
    %v4284 = vadd.f32 %v4243, %v4283
    %4285 = vdwg.mxu0
    %v4286 = vand.u32 %v3880, 4294901760
    %v4287 = vsub.f32 %v3880, %v4286
    %v4288 = vand.u32 %v4287, 4294901760
    %v4289 = vsub.f32 %v4287, %v4288
    %v4290 = vand.u32 %v4289, 4294901760
    %4291 = vmatpush.msra.mxu0 %v4290
    %v4292 = vand.u32 %v3879, 4294901760
    %v4293 = vsub.f32 %v3879, %v4292
    %v4294 = vand.u32 %v4293, 4294901760
    %v4295 = vsub.f32 %v4293, %v4294
    %v4296 = vand.u32 %v4295, 4294901760
    %4297 = vmatpush.msra.mxu0 %v4296
    %v4298 = vand.u32 %v3878, 4294901760
    %v4299 = vsub.f32 %v3878, %v4298
    %v4300 = vand.u32 %v4299, 4294901760
    %v4301 = vsub.f32 %v4299, %v4300
    %v4302 = vand.u32 %v4301, 4294901760
    %4303 = vmatpush.msra.mxu0 %v4302
    %v4304 = vand.u32 %v3877, 4294901760
    %v4305 = vsub.f32 %v3877, %v4304
    %v4306 = vand.u32 %v4305, 4294901760
    %v4307 = vsub.f32 %v4305, %v4306
    %v4308 = vand.u32 %v4307, 4294901760
    %4309 = vmatpush.msra.mxu0 %v4308
    %v4310 = vand.u32 %v3876, 4294901760
    %v4311 = vsub.f32 %v3876, %v4310
    %v4312 = vand.u32 %v4311, 4294901760
    %v4313 = vsub.f32 %v4311, %v4312
    %v4314 = vand.u32 %v4313, 4294901760
    %4315 = vmatpush.msra.mxu0 %v4314
    %v4316 = vand.u32 %v3875, 4294901760
    %v4317 = vsub.f32 %v3875, %v4316
    %v4318 = vand.u32 %v4317, 4294901760
    %v4319 = vsub.f32 %v4317, %v4318
    %v4320 = vand.u32 %v4319, 4294901760
    %4321 = vmatpush.msra.mxu0 %v4320
    %v4322 = vand.u32 %v3874, 4294901760
    %v4323 = vsub.f32 %v3874, %v4322
    %v4324 = vand.u32 %v4323, 4294901760
    %v4325 = vsub.f32 %v4323, %v4324
    %v4326 = vand.u32 %v4325, 4294901760
    %4327 = vmatpush.msra.mxu0 %v4326
    %v4328 = vand.u32 %v3873, 4294901760
    %v4329 = vsub.f32 %v3873, %v4328
    %v4330 = vand.u32 %v4329, 4294901760
    %v4331 = vsub.f32 %v4329, %v4330
    %v4332 = vand.u32 %v4331, 4294901760
    %4333 = vmatpush.msra.mxu0 %v4332
    %v4334 = vand.u32 %v3872, 4294901760
    %v4335 = vsub.f32 %v3872, %v4334
    %v4336 = vand.u32 %v4335, 4294901760
    %v4337 = vsub.f32 %v4335, %v4336
    %v4338 = vand.u32 %v4337, 4294901760
    %4339 = vmatpush.msra.mxu0 %v4338
    %v4340 = vand.u32 %v3871, 4294901760
    %v4341 = vsub.f32 %v3871, %v4340
    %v4342 = vand.u32 %v4341, 4294901760
    %v4343 = vsub.f32 %v4341, %v4342
    %v4344 = vand.u32 %v4343, 4294901760
    %4345 = vmatpush.msra.mxu0 %v4344
    %v4346 = vand.u32 %v3870, 4294901760
    %v4347 = vsub.f32 %v3870, %v4346
    %v4348 = vand.u32 %v4347, 4294901760
    %v4349 = vsub.f32 %v4347, %v4348
    %v4350 = vand.u32 %v4349, 4294901760
    %4351 = vmatpush.msra.mxu0 %v4350
    %v4352 = vand.u32 %v3869, 4294901760
    %v4353 = vsub.f32 %v3869, %v4352
    %v4354 = vand.u32 %v4353, 4294901760
    %v4355 = vsub.f32 %v4353, %v4354
    %v4356 = vand.u32 %v4355, 4294901760
    %4357 = vmatpush.msra.mxu0 %v4356
    %v4358 = vand.u32 %v3868, 4294901760
    %v4359 = vsub.f32 %v3868, %v4358
    %v4360 = vand.u32 %v4359, 4294901760
    %v4361 = vsub.f32 %v4359, %v4360
    %v4362 = vand.u32 %v4361, 4294901760
    %4363 = vmatpush.msra.mxu0 %v4362
    %v4364 = vand.u32 %v3867, 4294901760
    %v4365 = vsub.f32 %v3867, %v4364
    %v4366 = vand.u32 %v4365, 4294901760
    %v4367 = vsub.f32 %v4365, %v4366
    %v4368 = vand.u32 %v4367, 4294901760
    %4369 = vmatpush.msra.mxu0 %v4368
    %v4370 = vand.u32 %v3866, 4294901760
    %v4371 = vsub.f32 %v3866, %v4370
    %v4372 = vand.u32 %v4371, 4294901760
    %v4373 = vsub.f32 %v4371, %v4372
    %v4374 = vand.u32 %v4373, 4294901760
    %4375 = vmatpush.msra.mxu0 %v4374
    %v4376 = vand.u32 %v3865, 4294901760
    %v4377 = vsub.f32 %v3865, %v4376
    %v4378 = vand.u32 %v4377, 4294901760
    %v4379 = vsub.f32 %v4377, %v4378
    %v4380 = vand.u32 %v4379, 4294901760
    %4381 = vmatpush.msra.mxu0 %v4380
    %v4382 = vand.u32 %v3897, 4294901760
    %4383 = vmatmul.f32.gmra.mxu0 %v4382
    %v4384 = vpop.f32.mrf.mxu0
    %v4385 = vadd.f32 %v4284, %v4384
    %4386 = vdwg.mxu0
    %v4387 = vand.u32 %v3880, 4294901760
    %v4388 = vsub.f32 %v3880, %v4387
    %4389 = vmatpush.msra.mxu0 %v4388
    %v4390 = vand.u32 %v3879, 4294901760
    %v4391 = vsub.f32 %v3879, %v4390
    %4392 = vmatpush.msra.mxu0 %v4391
    %v4393 = vand.u32 %v3878, 4294901760
    %v4394 = vsub.f32 %v3878, %v4393
    %4395 = vmatpush.msra.mxu0 %v4394
    %v4396 = vand.u32 %v3877, 4294901760
    %v4397 = vsub.f32 %v3877, %v4396
    %4398 = vmatpush.msra.mxu0 %v4397
    %v4399 = vand.u32 %v3876, 4294901760
    %v4400 = vsub.f32 %v3876, %v4399
    %4401 = vmatpush.msra.mxu0 %v4400
    %v4402 = vand.u32 %v3875, 4294901760
    %v4403 = vsub.f32 %v3875, %v4402
    %4404 = vmatpush.msra.mxu0 %v4403
    %v4405 = vand.u32 %v3874, 4294901760
    %v4406 = vsub.f32 %v3874, %v4405
    %4407 = vmatpush.msra.mxu0 %v4406
    %v4408 = vand.u32 %v3873, 4294901760
    %v4409 = vsub.f32 %v3873, %v4408
    %4410 = vmatpush.msra.mxu0 %v4409
    %v4411 = vand.u32 %v3872, 4294901760
    %v4412 = vsub.f32 %v3872, %v4411
    %4413 = vmatpush.msra.mxu0 %v4412
    %v4414 = vand.u32 %v3871, 4294901760
    %v4415 = vsub.f32 %v3871, %v4414
    %4416 = vmatpush.msra.mxu0 %v4415
    %v4417 = vand.u32 %v3870, 4294901760
    %v4418 = vsub.f32 %v3870, %v4417
    %4419 = vmatpush.msra.mxu0 %v4418
    %v4420 = vand.u32 %v3869, 4294901760
    %v4421 = vsub.f32 %v3869, %v4420
    %4422 = vmatpush.msra.mxu0 %v4421
    %v4423 = vand.u32 %v3868, 4294901760
    %v4424 = vsub.f32 %v3868, %v4423
    %4425 = vmatpush.msra.mxu0 %v4424
    %v4426 = vand.u32 %v3867, 4294901760
    %v4427 = vsub.f32 %v3867, %v4426
    %4428 = vmatpush.msra.mxu0 %v4427
    %v4429 = vand.u32 %v3866, 4294901760
    %v4430 = vsub.f32 %v3866, %v4429
    %4431 = vmatpush.msra.mxu0 %v4430
    %v4432 = vand.u32 %v3865, 4294901760
    %v4433 = vsub.f32 %v3865, %v4432
    %4434 = vmatpush.msra.mxu0 %v4433
    %v4435 = vand.u32 %v3897, 4294901760
    %v4436 = vsub.f32 %v3897, %v4435
    %4437 = vmatmul.f32.gmra.mxu0 %v4436
    %v4438 = vpop.f32.mrf.mxu0
    %v4439 = vadd.f32 %v4385, %v4438
    %4440 = vdwg.mxu0
    %v4441 = vand.u32 %v3880, 4294901760
    %4442 = vmatpush.msra.mxu0 %v4441
    %v4443 = vand.u32 %v3879, 4294901760
    %4444 = vmatpush.msra.mxu0 %v4443
    %v4445 = vand.u32 %v3878, 4294901760
    %4446 = vmatpush.msra.mxu0 %v4445
    %v4447 = vand.u32 %v3877, 4294901760
    %4448 = vmatpush.msra.mxu0 %v4447
    %v4449 = vand.u32 %v3876, 4294901760
    %4450 = vmatpush.msra.mxu0 %v4449
    %v4451 = vand.u32 %v3875, 4294901760
    %4452 = vmatpush.msra.mxu0 %v4451
    %v4453 = vand.u32 %v3874, 4294901760
    %4454 = vmatpush.msra.mxu0 %v4453
    %v4455 = vand.u32 %v3873, 4294901760
    %4456 = vmatpush.msra.mxu0 %v4455
    %v4457 = vand.u32 %v3872, 4294901760
    %4458 = vmatpush.msra.mxu0 %v4457
    %v4459 = vand.u32 %v3871, 4294901760
    %4460 = vmatpush.msra.mxu0 %v4459
    %v4461 = vand.u32 %v3870, 4294901760
    %4462 = vmatpush.msra.mxu0 %v4461
    %v4463 = vand.u32 %v3869, 4294901760
    %4464 = vmatpush.msra.mxu0 %v4463
    %v4465 = vand.u32 %v3868, 4294901760
    %4466 = vmatpush.msra.mxu0 %v4465
    %v4467 = vand.u32 %v3867, 4294901760
    %4468 = vmatpush.msra.mxu0 %v4467
    %v4469 = vand.u32 %v3866, 4294901760
    %4470 = vmatpush.msra.mxu0 %v4469
    %v4471 = vand.u32 %v3865, 4294901760
    %4472 = vmatpush.msra.mxu0 %v4471
    %v4473 = vand.u32 %v3897, 4294901760
    %v4474 = vsub.f32 %v3897, %v4473
    %v4475 = vand.u32 %v4474, 4294901760
    %4476 = vmatmul.f32.gmra.mxu0 %v4475
    %v4477 = vpop.f32.mrf.mxu0
    %v4478 = vadd.f32 %v4439, %v4477
    %4479 = vdwg.mxu0
    %v4480 = vand.u32 %v3880, 4294901760
    %v4481 = vsub.f32 %v3880, %v4480
    %v4482 = vand.u32 %v4481, 4294901760
    %4483 = vmatpush.msra.mxu0 %v4482
    %v4484 = vand.u32 %v3879, 4294901760
    %v4485 = vsub.f32 %v3879, %v4484
    %v4486 = vand.u32 %v4485, 4294901760
    %4487 = vmatpush.msra.mxu0 %v4486
    %v4488 = vand.u32 %v3878, 4294901760
    %v4489 = vsub.f32 %v3878, %v4488
    %v4490 = vand.u32 %v4489, 4294901760
    %4491 = vmatpush.msra.mxu0 %v4490
    %v4492 = vand.u32 %v3877, 4294901760
    %v4493 = vsub.f32 %v3877, %v4492
    %v4494 = vand.u32 %v4493, 4294901760
    %4495 = vmatpush.msra.mxu0 %v4494
    %v4496 = vand.u32 %v3876, 4294901760
    %v4497 = vsub.f32 %v3876, %v4496
    %v4498 = vand.u32 %v4497, 4294901760
    %4499 = vmatpush.msra.mxu0 %v4498
    %v4500 = vand.u32 %v3875, 4294901760
    %v4501 = vsub.f32 %v3875, %v4500
    %v4502 = vand.u32 %v4501, 4294901760
    %4503 = vmatpush.msra.mxu0 %v4502
    %v4504 = vand.u32 %v3874, 4294901760
    %v4505 = vsub.f32 %v3874, %v4504
    %v4506 = vand.u32 %v4505, 4294901760
    %4507 = vmatpush.msra.mxu0 %v4506
    %v4508 = vand.u32 %v3873, 4294901760
    %v4509 = vsub.f32 %v3873, %v4508
    %v4510 = vand.u32 %v4509, 4294901760
    %4511 = vmatpush.msra.mxu0 %v4510
    %v4512 = vand.u32 %v3872, 4294901760
    %v4513 = vsub.f32 %v3872, %v4512
    %v4514 = vand.u32 %v4513, 4294901760
    %4515 = vmatpush.msra.mxu0 %v4514
    %v4516 = vand.u32 %v3871, 4294901760
    %v4517 = vsub.f32 %v3871, %v4516
    %v4518 = vand.u32 %v4517, 4294901760
    %4519 = vmatpush.msra.mxu0 %v4518
    %v4520 = vand.u32 %v3870, 4294901760
    %v4521 = vsub.f32 %v3870, %v4520
    %v4522 = vand.u32 %v4521, 4294901760
    %4523 = vmatpush.msra.mxu0 %v4522
    %v4524 = vand.u32 %v3869, 4294901760
    %v4525 = vsub.f32 %v3869, %v4524
    %v4526 = vand.u32 %v4525, 4294901760
    %4527 = vmatpush.msra.mxu0 %v4526
    %v4528 = vand.u32 %v3868, 4294901760
    %v4529 = vsub.f32 %v3868, %v4528
    %v4530 = vand.u32 %v4529, 4294901760
    %4531 = vmatpush.msra.mxu0 %v4530
    %v4532 = vand.u32 %v3867, 4294901760
    %v4533 = vsub.f32 %v3867, %v4532
    %v4534 = vand.u32 %v4533, 4294901760
    %4535 = vmatpush.msra.mxu0 %v4534
    %v4536 = vand.u32 %v3866, 4294901760
    %v4537 = vsub.f32 %v3866, %v4536
    %v4538 = vand.u32 %v4537, 4294901760
    %4539 = vmatpush.msra.mxu0 %v4538
    %v4540 = vand.u32 %v3865, 4294901760
    %v4541 = vsub.f32 %v3865, %v4540
    %v4542 = vand.u32 %v4541, 4294901760
    %4543 = vmatpush.msra.mxu0 %v4542
    %v4544 = vand.u32 %v3897, 4294901760
    %4545 = vmatmul.f32.gmra.mxu0 %v4544
    %v4546 = vpop.f32.mrf.mxu0
    %v4547 = vadd.f32 %v4478, %v4546
    %4548 = vdwg.mxu0
    %v4549 = vand.u32 %v3880, 4294901760
    %4550 = vmatpush.msra.mxu0 %v4549
    %v4551 = vand.u32 %v3879, 4294901760
    %4552 = vmatpush.msra.mxu0 %v4551
    %v4553 = vand.u32 %v3878, 4294901760
    %4554 = vmatpush.msra.mxu0 %v4553
    %v4555 = vand.u32 %v3877, 4294901760
    %4556 = vmatpush.msra.mxu0 %v4555
    %v4557 = vand.u32 %v3876, 4294901760
    %4558 = vmatpush.msra.mxu0 %v4557
    %v4559 = vand.u32 %v3875, 4294901760
    %4560 = vmatpush.msra.mxu0 %v4559
    %v4561 = vand.u32 %v3874, 4294901760
    %4562 = vmatpush.msra.mxu0 %v4561
    %v4563 = vand.u32 %v3873, 4294901760
    %4564 = vmatpush.msra.mxu0 %v4563
    %v4565 = vand.u32 %v3872, 4294901760
    %4566 = vmatpush.msra.mxu0 %v4565
    %v4567 = vand.u32 %v3871, 4294901760
    %4568 = vmatpush.msra.mxu0 %v4567
    %v4569 = vand.u32 %v3870, 4294901760
    %4570 = vmatpush.msra.mxu0 %v4569
    %v4571 = vand.u32 %v3869, 4294901760
    %4572 = vmatpush.msra.mxu0 %v4571
    %v4573 = vand.u32 %v3868, 4294901760
    %4574 = vmatpush.msra.mxu0 %v4573
    %v4575 = vand.u32 %v3867, 4294901760
    %4576 = vmatpush.msra.mxu0 %v4575
    %v4577 = vand.u32 %v3866, 4294901760
    %4578 = vmatpush.msra.mxu0 %v4577
    %v4579 = vand.u32 %v3865, 4294901760
    %4580 = vmatpush.msra.mxu0 %v4579
    %v4581 = vand.u32 %v3897, 4294901760
    %4582 = vmatmul.f32.gmra.mxu0 %v4581
    %v4583 = vpop.f32.mrf.mxu0
    %v4584 = vadd.f32 %v4547, %v4583
    %4585 = vdwg.mxu0
    %4586 = vmatpush.msra.mxu0 0.0
    %4587 = vmatpush.msra.mxu0 0.0
    %4588 = vmatpush.msra.mxu0 0.0
    %4589 = vmatpush.msra.mxu0 0.0
    %4590 = vmatpush.msra.mxu0 0.0
    %4591 = vmatpush.msra.mxu0 0.0
    %4592 = vmatpush.msra.mxu0 0.0
    %4593 = vmatpush.msra.mxu0 0.0
    %4594 = vmatpush.msra.mxu0 0.0
    %4595 = vmatpush.msra.mxu0 0.0
    %v4596 = vand.u32 %v3886, 4294901760
    %4597 = vmatpush.msra.mxu0 %v4596
    %v4598 = vand.u32 %v3885, 4294901760
    %4599 = vmatpush.msra.mxu0 %v4598
    %v4600 = vand.u32 %v3884, 4294901760
    %4601 = vmatpush.msra.mxu0 %v4600
    %v4602 = vand.u32 %v3883, 4294901760
    %4603 = vmatpush.msra.mxu0 %v4602
    %v4604 = vand.u32 %v3882, 4294901760
    %4605 = vmatpush.msra.mxu0 %v4604
    %v4606 = vand.u32 %v3881, 4294901760
    %4607 = vmatpush.msra.mxu0 %v4606
    %v4608 = vand.u32 %v3902, 4294901760
    %v4609 = vsub.f32 %v3902, %v4608
    %v4610 = vand.u32 %v4609, 4294901760
    %v4611 = vsub.f32 %v4609, %v4610
    %v4612 = vand.u32 %v4611, 4294901760
    %4613 = vmatmul.f32.gmra.mxu0 %v4612
    %v4614 = vpop.f32.mrf.mxu0
    %v4615 = vadd.f32 %v4584, %v4614
    %4616 = vdwg.mxu0
    %4617 = vmatpush.msra.mxu0 0.0
    %4618 = vmatpush.msra.mxu0 0.0
    %4619 = vmatpush.msra.mxu0 0.0
    %4620 = vmatpush.msra.mxu0 0.0
    %4621 = vmatpush.msra.mxu0 0.0
    %4622 = vmatpush.msra.mxu0 0.0
    %4623 = vmatpush.msra.mxu0 0.0
    %4624 = vmatpush.msra.mxu0 0.0
    %4625 = vmatpush.msra.mxu0 0.0
    %4626 = vmatpush.msra.mxu0 0.0
    %v4627 = vand.u32 %v3886, 4294901760
    %v4628 = vsub.f32 %v3886, %v4627
    %v4629 = vand.u32 %v4628, 4294901760
    %v4630 = vsub.f32 %v4628, %v4629
    %v4631 = vand.u32 %v4630, 4294901760
    %4632 = vmatpush.msra.mxu0 %v4631
    %v4633 = vand.u32 %v3885, 4294901760
    %v4634 = vsub.f32 %v3885, %v4633
    %v4635 = vand.u32 %v4634, 4294901760
    %v4636 = vsub.f32 %v4634, %v4635
    %v4637 = vand.u32 %v4636, 4294901760
    %4638 = vmatpush.msra.mxu0 %v4637
    %v4639 = vand.u32 %v3884, 4294901760
    %v4640 = vsub.f32 %v3884, %v4639
    %v4641 = vand.u32 %v4640, 4294901760
    %v4642 = vsub.f32 %v4640, %v4641
    %v4643 = vand.u32 %v4642, 4294901760
    %4644 = vmatpush.msra.mxu0 %v4643
    %v4645 = vand.u32 %v3883, 4294901760
    %v4646 = vsub.f32 %v3883, %v4645
    %v4647 = vand.u32 %v4646, 4294901760
    %v4648 = vsub.f32 %v4646, %v4647
    %v4649 = vand.u32 %v4648, 4294901760
    %4650 = vmatpush.msra.mxu0 %v4649
    %v4651 = vand.u32 %v3882, 4294901760
    %v4652 = vsub.f32 %v3882, %v4651
    %v4653 = vand.u32 %v4652, 4294901760
    %v4654 = vsub.f32 %v4652, %v4653
    %v4655 = vand.u32 %v4654, 4294901760
    %4656 = vmatpush.msra.mxu0 %v4655
    %v4657 = vand.u32 %v3881, 4294901760
    %v4658 = vsub.f32 %v3881, %v4657
    %v4659 = vand.u32 %v4658, 4294901760
    %v4660 = vsub.f32 %v4658, %v4659
    %v4661 = vand.u32 %v4660, 4294901760
    %4662 = vmatpush.msra.mxu0 %v4661
    %v4663 = vand.u32 %v3902, 4294901760
    %4664 = vmatmul.f32.gmra.mxu0 %v4663
    %v4665 = vpop.f32.mrf.mxu0
    %v4666 = vadd.f32 %v4615, %v4665
    %4667 = vdwg.mxu0
    %4668 = vmatpush.msra.mxu0 0.0
    %4669 = vmatpush.msra.mxu0 0.0
    %4670 = vmatpush.msra.mxu0 0.0
    %4671 = vmatpush.msra.mxu0 0.0
    %4672 = vmatpush.msra.mxu0 0.0
    %4673 = vmatpush.msra.mxu0 0.0
    %4674 = vmatpush.msra.mxu0 0.0
    %4675 = vmatpush.msra.mxu0 0.0
    %4676 = vmatpush.msra.mxu0 0.0
    %4677 = vmatpush.msra.mxu0 0.0
    %v4678 = vand.u32 %v3886, 4294901760
    %v4679 = vsub.f32 %v3886, %v4678
    %4680 = vmatpush.msra.mxu0 %v4679
    %v4681 = vand.u32 %v3885, 4294901760
    %v4682 = vsub.f32 %v3885, %v4681
    %4683 = vmatpush.msra.mxu0 %v4682
    %v4684 = vand.u32 %v3884, 4294901760
    %v4685 = vsub.f32 %v3884, %v4684
    %4686 = vmatpush.msra.mxu0 %v4685
    %v4687 = vand.u32 %v3883, 4294901760
    %v4688 = vsub.f32 %v3883, %v4687
    %4689 = vmatpush.msra.mxu0 %v4688
    %v4690 = vand.u32 %v3882, 4294901760
    %v4691 = vsub.f32 %v3882, %v4690
    %4692 = vmatpush.msra.mxu0 %v4691
    %v4693 = vand.u32 %v3881, 4294901760
    %v4694 = vsub.f32 %v3881, %v4693
    %4695 = vmatpush.msra.mxu0 %v4694
    %v4696 = vand.u32 %v3902, 4294901760
    %v4697 = vsub.f32 %v3902, %v4696
    %4698 = vmatmul.f32.gmra.mxu0 %v4697
    %v4699 = vpop.f32.mrf.mxu0
    %v4700 = vadd.f32 %v4666, %v4699
    %4701 = vdwg.mxu0
    %4702 = vmatpush.msra.mxu0 0.0
    %4703 = vmatpush.msra.mxu0 0.0
    %4704 = vmatpush.msra.mxu0 0.0
    %4705 = vmatpush.msra.mxu0 0.0
    %4706 = vmatpush.msra.mxu0 0.0
    %4707 = vmatpush.msra.mxu0 0.0
    %4708 = vmatpush.msra.mxu0 0.0
    %4709 = vmatpush.msra.mxu0 0.0
    %4710 = vmatpush.msra.mxu0 0.0
    %4711 = vmatpush.msra.mxu0 0.0
    %v4712 = vand.u32 %v3886, 4294901760
    %4713 = vmatpush.msra.mxu0 %v4712
    %v4714 = vand.u32 %v3885, 4294901760
    %4715 = vmatpush.msra.mxu0 %v4714
    %v4716 = vand.u32 %v3884, 4294901760
    %4717 = vmatpush.msra.mxu0 %v4716
    %v4718 = vand.u32 %v3883, 4294901760
    %4719 = vmatpush.msra.mxu0 %v4718
    %v4720 = vand.u32 %v3882, 4294901760
    %4721 = vmatpush.msra.mxu0 %v4720
    %v4722 = vand.u32 %v3881, 4294901760
    %4723 = vmatpush.msra.mxu0 %v4722
    %v4724 = vand.u32 %v3902, 4294901760
    %v4725 = vsub.f32 %v3902, %v4724
    %v4726 = vand.u32 %v4725, 4294901760
    %4727 = vmatmul.f32.gmra.mxu0 %v4726
    %v4728 = vpop.f32.mrf.mxu0
    %v4729 = vadd.f32 %v4700, %v4728
    %4730 = vdwg.mxu0
    %4731 = vmatpush.msra.mxu0 0.0
    %4732 = vmatpush.msra.mxu0 0.0
    %4733 = vmatpush.msra.mxu0 0.0
    %4734 = vmatpush.msra.mxu0 0.0
    %4735 = vmatpush.msra.mxu0 0.0
    %4736 = vmatpush.msra.mxu0 0.0
    %4737 = vmatpush.msra.mxu0 0.0
    %4738 = vmatpush.msra.mxu0 0.0
    %4739 = vmatpush.msra.mxu0 0.0
    %4740 = vmatpush.msra.mxu0 0.0
    %v4741 = vand.u32 %v3886, 4294901760
    %v4742 = vsub.f32 %v3886, %v4741
    %v4743 = vand.u32 %v4742, 4294901760
    %4744 = vmatpush.msra.mxu0 %v4743
    %v4745 = vand.u32 %v3885, 4294901760
    %v4746 = vsub.f32 %v3885, %v4745
    %v4747 = vand.u32 %v4746, 4294901760
    %4748 = vmatpush.msra.mxu0 %v4747
    %v4749 = vand.u32 %v3884, 4294901760
    %v4750 = vsub.f32 %v3884, %v4749
    %v4751 = vand.u32 %v4750, 4294901760
    %4752 = vmatpush.msra.mxu0 %v4751
    %v4753 = vand.u32 %v3883, 4294901760
    %v4754 = vsub.f32 %v3883, %v4753
    %v4755 = vand.u32 %v4754, 4294901760
    %4756 = vmatpush.msra.mxu0 %v4755
    %v4757 = vand.u32 %v3882, 4294901760
    %v4758 = vsub.f32 %v3882, %v4757
    %v4759 = vand.u32 %v4758, 4294901760
    %4760 = vmatpush.msra.mxu0 %v4759
    %v4761 = vand.u32 %v3881, 4294901760
    %v4762 = vsub.f32 %v3881, %v4761
    %v4763 = vand.u32 %v4762, 4294901760
    %4764 = vmatpush.msra.mxu0 %v4763
    %v4765 = vand.u32 %v3902, 4294901760
    %4766 = vmatmul.f32.gmra.mxu0 %v4765
    %v4767 = vpop.f32.mrf.mxu0
    %v4768 = vadd.f32 %v4729, %v4767
    %4769 = vdwg.mxu0
    %4770 = vmatpush.msra.mxu0 0.0
    %4771 = vmatpush.msra.mxu0 0.0
    %4772 = vmatpush.msra.mxu0 0.0
    %4773 = vmatpush.msra.mxu0 0.0
    %4774 = vmatpush.msra.mxu0 0.0
    %4775 = vmatpush.msra.mxu0 0.0
    %4776 = vmatpush.msra.mxu0 0.0
    %4777 = vmatpush.msra.mxu0 0.0
    %4778 = vmatpush.msra.mxu0 0.0
    %4779 = vmatpush.msra.mxu0 0.0
    %v4780 = vand.u32 %v3886, 4294901760
    %4781 = vmatpush.msra.mxu0 %v4780
    %v4782 = vand.u32 %v3885, 4294901760
    %4783 = vmatpush.msra.mxu0 %v4782
    %v4784 = vand.u32 %v3884, 4294901760
    %4785 = vmatpush.msra.mxu0 %v4784
    %v4786 = vand.u32 %v3883, 4294901760
    %4787 = vmatpush.msra.mxu0 %v4786
    %v4788 = vand.u32 %v3882, 4294901760
    %4789 = vmatpush.msra.mxu0 %v4788
    %v4790 = vand.u32 %v3881, 4294901760
    %4791 = vmatpush.msra.mxu0 %v4790
    %v4792 = vand.u32 %v3902, 4294901760
    %4793 = vmatmul.f32.gmra.mxu0 %v4792
    %v4794 = vpop.f32.mrf.mxu0
    %v4795 = vadd.f32 %v4768, %v4794
    %4796 = vdwg.mxu0
    %4797 = vst [vmem:[#allocation8] sm:$0xf] %v4795
    // Predicated region
    $region34: #{pglcn_forward.1} parent=1 // pred_check
      _
    $region35: #{pglcn_forward.1} parent=1 // pred_check_branch
      %4799 = sbr.rel (0) target = $region37
    $region36: #{pglcn_forward.1} parent=1 // pred_region
      %4801 = vsyncadd [#allocation6], 0
      %s4803 = sshll.u32 [#allocation8], 4
      %s4804 = int_to_ptr.vmem [resolvable:$true] %s4803
      %s4805 = sshll.u32 %s7, 4
      %s4806 = int_to_ptr.hbm [resolvable:$true] %s4805
      %4808 = dma.vmem_to_hbm [thread:$0]  %s4804, 64, %s4806, [#allocation6]
    $region37: #{pglcn_forward.1} parent=1 // pred_fallthru
      _
    // Predicated region
    $region38: #{pglcn_forward.1} parent=1 // pred_check
      _
    $region39: #{pglcn_forward.1} parent=1 // pred_check_branch
      %4810 = sbr.rel (0) target = $region41
    $region40: #{pglcn_forward.1} parent=1 // pred_region
      %4812 = dma.done [#allocation6], 64
    $region41: #{pglcn_forward.1} parent=1 // pred_fallthru
      _
    %4813 = vsyncpa [#allocation6], 1
    %4814 = vsyncpa [#allocation7], 1

</llo_original>
